<compile_context>
chip_gen: v7x
topology: tpu7x:2x2x1
jax: 0.10.0
libtpu: 0.0.40
codegen_flags: <defaults>
</compile_context>

<pallas_src>
import functools

import numpy as np
import jax
import jax.numpy as jnp
from jax import lax
from jax.experimental import pallas as pl
from jax.experimental.pallas import tpu as pltpu

F32 = jnp.float32
BF16 = jnp.bfloat16


# ----------------------------- in-kernel math helpers -----------------------------
def _relu(x):
    return jnp.maximum(x, 0.0)


def _sigmoid(x):
    return 1.0 / (1.0 + jnp.exp(-x))


def _softplus(x):
    # matches torch.nn.Softplus (threshold=20)
    xs = jnp.minimum(x, 20.0)
    return jnp.where(x > 20.0, x, jnp.log(1.0 + jnp.exp(xs)))


def _vmem(n):
    return [pl.BlockSpec(memory_space=pltpu.MemorySpace.VMEM) for _ in range(n)]


_VOUT = pl.BlockSpec(memory_space=pltpu.MemorySpace.VMEM)
# explicit scoped-VMEM limit (scoped default is smaller than physical on all gens)
_CPARAMS = pltpu.CompilerParams(vmem_limit_bytes=64 * 1024 * 1024)


# ----------------------------------- kernel 1 --------------------------------------
def _graph_kernel(x_ref, w_ref, self_idx_ref, nbr_idx_ref,
                  embW_ref, embb_ref,
                  gW1s_ref, gW1n_ref, gB1_ref, gW2_ref, gB2_ref,
                  mW1s_ref, mW1n_ref, mB1_ref, mW2_ref, mB2_ref,
                  out_ref, *, n_layers, n_heads, weight_pow):
    """Fused: embedding + n_layers MessageLayers (all heads batched per layer)."""
    w = w_ref[...]                                                    # (N, 1)
    emb = jnp.dot(x_ref[...], embW_ref[...],
                  preferred_element_type=F32) + embb_ref[...]         # (N, F-1)
    fea = jnp.concatenate([emb, w], axis=1)                           # (N, F) lane-dense
    N, F = fea.shape

    self_idx = self_idx_ref[...]                                      # (M, 1) int32
    nbr_idx = nbr_idx_ref[...]                                        # (M, 1) int32
    M = self_idx.shape[0]

    # one-hot gather/scatter matrices built ONCE (bool mask kept for the softmax masking)
    col = lax.broadcasted_iota(jnp.int32, (M, N), 1)
    self_mask = col == self_idx                                       # (M, N) bool
    self_oh = self_mask.astype(BF16)                                  # (M, N) bf16
    nbr_oh = (col == nbr_idx).astype(BF16)                            # (M, N) bf16

    # neighbour weights gathered once (shared by all layers)
    nbr_w = jnp.dot(nbr_oh, w.astype(BF16), preferred_element_type=F32)   # (M, 1)
    wp = nbr_w if weight_pow == 1 else nbr_w ** weight_pow

    inv_heads = jnp.float32(1.0 / n_heads)
    neg_big = jnp.float32(-1e30)

    for l in range(n_layers):
        fea_b = fea.astype(BF16)
        self_fea = jnp.dot(self_oh, fea_b, preferred_element_type=F32)    # (M, F)
        nbr_fea = jnp.dot(nbr_oh, fea_b, preferred_element_type=F32)      # (M, F)

        # --- gate networks, all heads in one wide matmul ---
        gh = _relu(jnp.dot(self_fea, gW1s_ref[l], preferred_element_type=F32)
                   + jnp.dot(nbr_fea, gW1n_ref[l], preferred_element_type=F32)
                   + gB1_ref[l])                                          # (M, nH*H)
        gates = jnp.dot(gh, gW2_ref[l], preferred_element_type=F32) + gB2_ref[l]  # (M, nH)

        # --- segment softmax over self_idx (per head), bookkeeping on the MXU ---
        seg_max = jnp.concatenate(
            [jnp.max(jnp.where(self_mask, gates[:, h:h + 1], neg_big),
                     axis=0, keepdims=True) for h in range(n_heads)], axis=0)  # (nH, N)
        edge_max = lax.dot_general(self_oh, seg_max.astype(BF16),
                                   (((1,), (1,)), ((), ())),
                                   preferred_element_type=F32)            # (M, nH)
        num = wp * jnp.exp(gates - edge_max)                              # (M, nH)
        seg_sum = lax.dot_general(self_oh, num.astype(BF16),
                                  (((0,), (0,)), ((), ())),
                                  preferred_element_type=F32)             # (N, nH)
        denom = jnp.dot(self_oh, seg_sum.astype(BF16),
                        preferred_element_type=F32)                       # (M, nH)
        attn = num * pl.reciprocal(denom + 1e-10, approx=True)            # (M, nH)

        # --- message networks, all heads batched (block-diagonal second layer) ---
        mh = _relu(jnp.dot(self_fea, mW1s_ref[l], preferred_element_type=F32)
                   + jnp.dot(nbr_fea, mW1n_ref[l], preferred_element_type=F32)
                   + mB1_ref[l])                                          # (M, nH*H)
        msgs = jnp.dot(mh, mW2_ref[l], preferred_element_type=F32) + mB2_ref[l]  # (M, nH*F)

        combined = attn[:, 0:1] * msgs[:, 0:F]
        for h in range(1, n_heads):
            combined = combined + attn[:, h:h + 1] * msgs[:, h * F:(h + 1) * F]  # (M, F)

        # scatter-add over self_idx (single matmul for all heads) + mean + residual
        acc = lax.dot_general(self_oh, combined.astype(BF16),
                              (((0,), (0,)), ((), ())),
                              preferred_element_type=F32)                 # (N, F)
        fea = acc * inv_heads + fea

    out_ref[...] = fea


# ----------------------------------- kernel 2 --------------------------------------
def _tail_kernel(fea_ref, w_ref, idx_ref,
                 cgW1_ref, cgB1_ref, cgW2_ref, cgB2_ref,
                 cmW1_ref, cmB1_ref, cmW2_ref, cmB2_ref,
                 rate_ref, cycle_ref,
                 rW1_ref, rb1_ref, rW2_ref, rb2_ref,
                 cW1_ref, cb1_ref, cW2_ref, cb2_ref,
                 ergW_ref, ergb_ref, ercW1_ref, ercb1_ref, ercW2_ref, ercb2_ref,
                 ecgW_ref, ecgb_ref, eccW1_ref, eccb1_ref, eccW2_ref, eccb2_ref,
                 dNW_ref,
                 Vw_ref, Vii_ref,
                 evW1_ref, evb1_ref, evW2_ref, evb2_ref,
                 avW1_ref, avb1_ref, avW2_ref, avb2_ref,
                 fcW1_ref, fcb1_ref, fcW2_ref, fcb2_ref,
                 qout_ref, qgrad_ref, *, n_heads, n_cry, weight_pow):
    """Fused: crystal pooling + rate/cycle conditioning + voltage head (+dq/dVii)."""
    # -------- crystal pooling (weighted attention pooling, heads batched) --------
    fea = fea_ref[...]                                                # (N, F)
    w = w_ref[...]                                                    # (N, 1)
    idx = idx_ref[...]                                                # (N, 1) int32
    N, F = fea.shape

    col = lax.broadcasted_iota(jnp.int32, (N, n_cry), 1)
    mask = col == idx                                                 # (N, C) bool
    oh = mask.astype(BF16)                                            # (N, C) bf16
    wp = w if weight_pow == 1 else w ** weight_pow
    neg_big = jnp.float32(-1e30)

    gh = _relu(jnp.dot(fea, cgW1_ref[...], preferred_element_type=F32) + cgB1_ref[...])
    gates = jnp.dot(gh, cgW2_ref[...], preferred_element_type=F32) + cgB2_ref[...]  # (N, nH)

    seg_max = jnp.concatenate(
        [jnp.max(jnp.where(mask, gates[:, h:h + 1], neg_big),
                 axis=0, keepdims=True) for h in range(n_heads)], axis=0)     # (nH, C)
    node_max = lax.dot_general(oh, seg_max.astype(BF16), (((1,), (1,)), ((), ())),
                               preferred_element_type=F32)                    # (N, nH)
    num = wp * jnp.exp(gates - node_max)                                      # (N, nH)
    seg_sum = lax.dot_general(oh, num.astype(BF16), (((0,), (0,)), ((), ())),
                              preferred_element_type=F32)                     # (C, nH)
    denom = jnp.dot(oh, seg_sum.astype(BF16), preferred_element_type=F32)     # (N, nH)
    attn = num * pl.reciprocal(denom + 1e-10, approx=True)

    mh = _relu(jnp.dot(fea, cmW1_ref[...], preferred_element_type=F32) + cmB1_ref[...])
    msgs = jnp.dot(mh, cmW2_ref[...], preferred_element_type=F32) + cmB2_ref[...]  # (N, nH*F)
    combined = attn[:, 0:1] * msgs[:, 0:F]
    for h in range(1, n_heads):
        combined = combined + attn[:, h:h + 1] * msgs[:, h * F:(h + 1) * F]
    crys = lax.dot_general(oh, combined.astype(BF16), (((0,), (0,)), ((), ())),
                           preferred_element_type=F32) * jnp.float32(1.0 / n_heads)  # (C, F)

    # -------- rate / cycle embeddings + gated conditioning --------
    rate = rate_ref[...]                                              # (C, 1)
    cyc = cycle_ref[...]                                              # (C, 1)

    rh = _relu(rate * rW1_ref[...] + rb1_ref[...])
    rate_fea = jnp.dot(rh, rW2_ref[...], preferred_element_type=F32) + rb2_ref[...]
    ch = _relu(cyc * cW1_ref[...] + cb1_ref[...])
    cycle_fea = jnp.dot(ch, cW2_ref[...], preferred_element_type=F32) + cb2_ref[...]

    ergW = ergW_ref[...]
    attn_r = _sigmoid(jnp.dot(crys, ergW[:F], preferred_element_type=F32)
                      + jnp.dot(rate_fea, ergW[F:], preferred_element_type=F32)
                      + ergb_ref[...])
    ercW1 = ercW1_ref[...]
    core_r = _relu(jnp.dot(crys, ercW1[:F], preferred_element_type=F32)
                   + jnp.dot(rate_fea, ercW1[F:], preferred_element_type=F32)
                   + ercb1_ref[...])
    core_r = jnp.dot(core_r, ercW2_ref[...], preferred_element_type=F32) + ercb2_ref[...]
    cond_rate = crys + attn_r * core_r

    ecgW = ecgW_ref[...]
    attn_c = _sigmoid(jnp.dot(cond_rate, ecgW[:F], preferred_element_type=F32)
                      + jnp.dot(cycle_fea, ecgW[F:], preferred_element_type=F32)
                      + ecgb_ref[...])
    eccW1 = eccW1_ref[...]
    core_c = _relu(jnp.dot(cond_rate, eccW1[:F], preferred_element_type=F32)
                   + jnp.dot(cycle_fea, eccW1[F:], preferred_element_type=F32)
                   + eccb1_ref[...])
    core_c = jnp.dot(core_c, eccW2_ref[...], preferred_element_type=F32) + eccb2_ref[...]
    dN = (cyc - 1.0) * dNW_ref[...]                                   # Linear(1, F, bias=False)
    cond_cycle = cond_rate + (attn_c * core_c) * dN

    # -------- voltage head (q_out branch only) + forward-mode tangent wrt Vii --------
    Vw = Vw_ref[...]                                                  # (C, 2)
    Vii = Vii_ref[...]                                                # (C, 1)
    evW1 = evW1_ref[...]                                              # (3, vol)

    h1 = (Vw[:, 0:1] * evW1[0:1, :] + Vw[:, 1:2] * evW1[1:2, :]
          + Vii * evW1[2:3, :] + evb1_ref[...])                       # (C, vol)
    t1 = jnp.zeros_like(Vii) + evW1[2:3, :]                           # d h1 / d Vii
    a1 = _relu(h1)
    ta1 = jnp.where(h1 > 0.0, t1, 0.0)
    xvol = jnp.dot(a1, evW2_ref[...], preferred_element_type=F32) + evb2_ref[...]
    txvol = jnp.dot(ta1, evW2_ref[...], preferred_element_type=F32)

    z = xvol + cond_cycle                                             # cond has no Vii dep
    h2 = jnp.dot(z, avW1_ref[...], preferred_element_type=F32) + avb1_ref[...]
    th2 = jnp.dot(txvol, avW1_ref[...], preferred_element_type=F32)
    a2 = _softplus(h2)
    ta2 = _sigmoid(h2) * th2
    x = jnp.dot(a2, avW2_ref[...], preferred_element_type=F32) + avb2_ref[...]
    tx = jnp.dot(ta2, avW2_ref[...], preferred_element_type=F32)
    h3 = jnp.dot(x, fcW1_ref[...], preferred_element_type=F32) + fcb1_ref[...]
    th3 = jnp.dot(tx, fcW1_ref[...], preferred_element_type=F32)
    a3 = _softplus(h3)
    ta3 = _sigmoid(h3) * th3
    f = jnp.dot(a3, fcW2_ref[...], preferred_element_type=F32) + fcb2_ref[...]
    tf = jnp.dot(ta3, fcW2_ref[...], preferred_element_type=F32)

    qout_ref[...] = _softplus(f)
    qgrad_ref[...] = _sigmoid(f) * tf


# ------------------------------- parameters & packing ------------------------------
def _block_diag(mats):
    """Pack per-head (H, O) matrices into a block-diagonal (nH*H, nH*O) matrix."""
    mats = [np.asarray(m, np.float32) for m in mats]
    nH = len(mats)
    H, O = mats[0].shape
    out = np.zeros((nH * H, nH * O), np.float32)
    for h, m in enumerate(mats):
        out[h * H:(h + 1) * H, h * O:(h + 1) * O] = m
    return jnp.asarray(out)


def init_params(key, elem_emb_len, F=32, vol=64, R=16, Cy=16, n_graph=3,
                elem_heads=3, elem_hidden=64, cry_heads=3, cry_hidden=64):
    keys = jax.random.split(key, 256)
    kit = iter(keys)

    def lin(fi, fo):
        k1, k2 = jax.random.split(next(kit))
        bound = 1.0 / float(np.sqrt(fi))
        W = jax.random.uniform(k1, (fi, fo), F32, -bound, bound)
        b = jax.random.uniform(k2, (1, fo), F32, -bound, bound)
        return W, b

    params = {}
    params['emb_W'], params['emb_b'] = lin(elem_emb_len, F - 1)

    # message layers: per-head init, then head-batched packing, stacked over layers
    gW1s, gW1n, gB1, gW2, gB2 = [], [], [], [], []
    mW1s, mW1n, mB1, mW2, mB2 = [], [], [], [], []
    for _ in range(n_graph):
        gw1, gb1, gw2, gb2 = [], [], [], []
        mw1, mb1, mw2, mb2 = [], [], [], []
        for _ in range(elem_heads):
            W, b = lin(2 * F, elem_hidden); gw1.append(W); gb1.append(b)
            W, b = lin(elem_hidden, 1);     gw2.append(W); gb2.append(b)
            W, b = lin(2 * F, elem_hidden); mw1.append(W); mb1.append(b)
            W, b = lin(elem_hidden, F);     mw2.append(W); mb2.append(b)
        GW1 = jnp.concatenate(gw1, axis=1)                 # (2F, nH*H)
        gW1s.append(GW1[:F]); gW1n.append(GW1[F:])
        gB1.append(jnp.concatenate(gb1, axis=1))           # (1, nH*H)
        gW2.append(_block_diag(gw2))                       # (nH*H, nH)
        gB2.append(jnp.concatenate(gb2, axis=1))           # (1, nH)
        MW1 = jnp.concatenate(mw1, axis=1)                 # (2F, nH*H)
        mW1s.append(MW1[:F]); mW1n.append(MW1[F:])
        mB1.append(jnp.concatenate(mb1, axis=1))           # (1, nH*H)
        mW2.append(_block_diag(mw2))                       # (nH*H, nH*F)
        mB2.append(jnp.concatenate(mb2, axis=1))           # (1, nH*F)
    params['graph'] = dict(
        gW1s=jnp.stack(gW1s), gW1n=jnp.stack(gW1n), gB1=jnp.stack(gB1),
        gW2=jnp.stack(gW2), gB2=jnp.stack(gB2),
        mW1s=jnp.stack(mW1s), mW1n=jnp.stack(mW1n), mB1=jnp.stack(mB1),
        mW2=jnp.stack(mW2), mB2=jnp.stack(mB2))

    # crystal pooling heads (batched)
    gw1, gb1, gw2, gb2 = [], [], [], []
    mw1, mb1, mw2, mb2 = [], [], [], []
    for _ in range(cry_heads):
        W, b = lin(F, cry_hidden); gw1.append(W); gb1.append(b)
        W, b = lin(cry_hidden, 1); gw2.append(W); gb2.append(b)
        W, b = lin(F, cry_hidden); mw1.append(W); mb1.append(b)
        W, b = lin(cry_hidden, F); mw2.append(W); mb2.append(b)
    params['cry'] = dict(
        gW1=jnp.concatenate(gw1, axis=1), gB1=jnp.concatenate(gb1, axis=1),
        gW2=_block_diag(gw2), gB2=jnp.concatenate(gb2, axis=1),
        mW1=jnp.concatenate(mw1, axis=1), mB1=jnp.concatenate(mb1, axis=1),
        mW2=_block_diag(mw2), mB2=jnp.concatenate(mb2, axis=1))

    # conditioning
    rW1, rb1 = lin(1, 2 * R);  rW2, rb2 = lin(2 * R, R)
    cW1, cb1 = lin(1, 2 * Cy); cW2, cb2 = lin(2 * Cy, Cy)
    ergW, ergb = lin(F + R, F)
    ercW1, ercb1 = lin(F + R, 2 * F); ercW2, ercb2 = lin(2 * F, F)
    ecgW, ecgb = lin(F + Cy, F)
    eccW1, eccb1 = lin(F + Cy, 2 * F); eccW2, eccb2 = lin(2 * F, F)
    dNW, _ = lin(1, F)   # delta_N: Linear(1, F, bias=False)
    params['cond'] = (rW1, rb1, rW2, rb2, cW1, cb1, cW2, cb2,
                      ergW, ergb, ercW1, ercb1, ercW2, ercb2,
                      ecgW, ecgb, eccW1, eccb1, eccW2, eccb2, dNW)

    # voltage head
    evW1, evb1 = lin(3, vol); evW2, evb2 = lin(vol, F)
    avW1, avb1 = lin(F, F);   avW2, avb2 = lin(F, F)
    fcW1, fcb1 = lin(F, F);   fcW2, fcb2 = lin(F, 1)
    params['volt'] = (evW1, evb1, evW2, evb2, avW1, avb1, avW2, avb2,
                      fcW1, fcb1, fcW2, fcb2)
    return params


# ------------------------------------- wrapper --------------------------------------
def drxnet_forward(params, elem_weights, elem_fea, self_idx, nbr_idx, cry_idx,
                   V_window, rate, cycle, Vii, *, n_graph=3, elem_heads=3,
                   cry_heads=3, weight_pow=1):
    """return_direct=True path: returns (q_out, dq_out/dVii)."""
    N = elem_fea.shape[0]
    F = params['emb_W'].shape[1] + 1
    C = V_window.shape[0]
    g = params['graph']
    cp = params['cry']

    # fused embedding + message passing
    fea = pl.pallas_call(
        functools.partial(_graph_kernel, n_layers=n_graph, n_heads=elem_heads,
                          weight_pow=weight_pow),
        out_shape=jax.ShapeDtypeStruct((N, F), F32),
        in_specs=_vmem(16), out_specs=_VOUT,
        compiler_params=_CPARAMS,
    )(elem_fea, elem_weights, self_idx, nbr_idx,
      params['emb_W'], params['emb_b'],
      g['gW1s'], g['gW1n'], g['gB1'], g['gW2'], g['gB2'],
      g['mW1s'], g['mW1n'], g['mB1'], g['mW2'], g['mB2'])

    # fused crystal pooling + conditioning + voltage head
    q_out, q_grad = pl.pallas_call(
        functools.partial(_tail_kernel, n_heads=cry_heads, n_cry=C,
                          weight_pow=weight_pow),
        out_shape=(jax.ShapeDtypeStruct((C, 1), F32),
                   jax.ShapeDtypeStruct((C, 1), F32)),
        in_specs=_vmem(48), out_specs=(_VOUT, _VOUT),
        compiler_params=_CPARAMS,
    )(fea, elem_weights, cry_idx,
      cp['gW1'], cp['gB1'], cp['gW2'], cp['gB2'],
      cp['mW1'], cp['mB1'], cp['mW2'], cp['mB2'],
      rate, cycle, *params['cond'],
      V_window, Vii, *params['volt'])

    return q_out, q_grad


# ------------------------------------- main ---------------------------------------
if __name__ == "__main__":
    key = jax.random.PRNGKey(0)
    k_in, k_par = jax.random.split(key)

    elem_emb_len, F, vol, R, Cy = 16, 32, 64, 16, 16
    n_graph, elem_heads, cry_heads, hidden, weight_pow = 3, 3, 3, 64, 1

    # 3 crystals with 3, 3, 4 elements  ->  N=10 nodes, M = 9 + 9 + 16 = 34 edges
    sizes = [3, 3, 4]
    N, C = sum(sizes), len(sizes)
    self_list, nbr_list, cry_list = [], [], []
    off = 0
    for c, s in enumerate(sizes):
        for i in range(s):
            cry_list.append(c)
            for j in range(s):
                self_list.append(off + i)
                nbr_list.append(off + j)
        off += s
    M = len(self_list)
    self_idx = jnp.asarray(self_list, jnp.int32).reshape(M, 1)
    nbr_idx = jnp.asarray(nbr_list, jnp.int32).reshape(M, 1)
    cry_idx = jnp.asarray(cry_list, jnp.int32).reshape(N, 1)

    ks = jax.random.split(k_in, 8)
    raw_w = jax.random.uniform(ks[0], (N, 1), F32, 0.1, 1.0)
    seg = jax.nn.one_hot(jnp.asarray(cry_list), C, dtype=F32)          # (N, C)
    elem_weights = raw_w / (seg @ (seg.T @ raw_w))                      # normalize per crystal
    elem_fea = jax.random.normal(ks[1], (N, elem_emb_len), F32)
    V_window = jnp.sort(jax.random.uniform(ks[2], (C, 2), F32, 1.5, 4.8), axis=1)
    rate = jax.random.uniform(ks[3], (C, 1), F32, 0.1, 2.0)
    cycle = jax.random.uniform(ks[4], (C, 1), F32, 1.0, 50.0)
    Vii = jax.random.uniform(ks[5], (C, 1), F32, 2.0, 4.5)

    params = init_params(k_par, elem_emb_len, F=F, vol=vol, R=R, Cy=Cy,
                         n_graph=n_graph, elem_heads=elem_heads, elem_hidden=hidden,
                         cry_heads=cry_heads, cry_hidden=hidden)

    q_out, q_grad = drxnet_forward(params, elem_weights, elem_fea, self_idx, nbr_idx,
                                   cry_idx, V_window, rate, cycle, Vii,
                                   n_graph=n_graph, elem_heads=elem_heads,
                                   cry_heads=cry_heads, weight_pow=weight_pow)
    jax.block_until_ready((q_out, q_grad))

    assert q_out.shape == (C, 1) and q_grad.shape == (C, 1)
    assert bool(jnp.all(jnp.isfinite(q_out))) and bool(jnp.all(jnp.isfinite(q_grad)))
    print("KERNEL_OK")
</pallas_src>

<mosaic_0001>
module attributes {stable_mosaic.version = 11 : i64} {
  func.func @_graph_kernel(%arg0: memref<10x16xf32, #tpu.memory_space<vmem>>, %arg1: memref<10x1xf32, #tpu.memory_space<vmem>>, %arg2: memref<34x1xi32, #tpu.memory_space<vmem>>, %arg3: memref<34x1xi32, #tpu.memory_space<vmem>>, %arg4: memref<16x31xf32, #tpu.memory_space<vmem>>, %arg5: memref<1x31xf32, #tpu.memory_space<vmem>>, %arg6: memref<3x32x192xf32, #tpu.memory_space<vmem>>, %arg7: memref<3x32x192xf32, #tpu.memory_space<vmem>>, %arg8: memref<3x1x192xf32, #tpu.memory_space<vmem>>, %arg9: memref<3x192x3xf32, #tpu.memory_space<vmem>>, %arg10: memref<3x1x3xf32, #tpu.memory_space<vmem>>, %arg11: memref<3x32x192xf32, #tpu.memory_space<vmem>>, %arg12: memref<3x32x192xf32, #tpu.memory_space<vmem>>, %arg13: memref<3x1x192xf32, #tpu.memory_space<vmem>>, %arg14: memref<3x192x96xf32, #tpu.memory_space<vmem>>, %arg15: memref<3x1x96xf32, #tpu.memory_space<vmem>>, %arg16: memref<10x32xf32, #tpu.memory_space<vmem>>) attributes {dimension_semantics = [], scalar_prefetch = 0 : i64, scratch_operands = 0 : i64, tpu.core_type = #tpu.core_type<tc>} {
    %c0 = arith.constant 0 : index
    %c0_0 = arith.constant 0 : index
    %0 = vector.load %arg1[%c0, %c0_0] : memref<10x1xf32, #tpu.memory_space<vmem>>, vector<10x1xf32>
    %c0_1 = arith.constant 0 : index
    %c0_2 = arith.constant 0 : index
    %1 = vector.load %arg0[%c0_1, %c0_2] : memref<10x16xf32, #tpu.memory_space<vmem>>, vector<10x16xf32>
    %c0_3 = arith.constant 0 : index
    %c0_4 = arith.constant 0 : index
    %2 = vector.load %arg4[%c0_3, %c0_4] : memref<16x31xf32, #tpu.memory_space<vmem>>, vector<16x31xf32>
    %cst = arith.constant dense<0.000000e+00> : vector<10x31xf32>
    %3 = tpu.matmul %1, %2, %cst {dimension_numbers = #tpu.dot_dimension_numbers<[1], [0], [0], [1], [0, 0, 1, 1], [], []>} : vector<10x16xf32>, vector<16x31xf32>, vector<10x31xf32> -> vector<10x31xf32>
    %c0_5 = arith.constant 0 : index
    %c0_6 = arith.constant 0 : index
    %4 = vector.load %arg5[%c0_5, %c0_6] : memref<1x31xf32, #tpu.memory_space<vmem>>, vector<1x31xf32>
    %5 = vector.broadcast %4 : vector<1x31xf32> to vector<10x31xf32>
    %6 = arith.addf %3, %5 : vector<10x31xf32>
    %7 = tpu.concatenate %6, %0 in 1 : vector<10x31xf32>, vector<10x1xf32> -> vector<10x32xf32>
    %c0_7 = arith.constant 0 : index
    %c0_8 = arith.constant 0 : index
    %8 = vector.load %arg2[%c0_7, %c0_8] : memref<34x1xi32, #tpu.memory_space<vmem>>, vector<34x1xi32>
    %c0_9 = arith.constant 0 : index
    %c0_10 = arith.constant 0 : index
    %9 = vector.load %arg3[%c0_9, %c0_10] : memref<34x1xi32, #tpu.memory_space<vmem>>, vector<34x1xi32>
    %10 = tpu.iota {dimensions = array<i32: 1>} : vector<34x10xi32>
    %11 = vector.broadcast %8 : vector<34x1xi32> to vector<34x10xi32>
    %12 = arith.cmpi eq, %10, %11 : vector<34x10xi32>
    %13 = arith.extui %12 : vector<34x10xi1> to vector<34x10xi32>
    %14 = arith.sitofp %13 : vector<34x10xi32> to vector<34x10xf32>
    %15 = arith.truncf %14 : vector<34x10xf32> to vector<34x10xbf16>
    %16 = vector.broadcast %9 : vector<34x1xi32> to vector<34x10xi32>
    %17 = arith.cmpi eq, %10, %16 : vector<34x10xi32>
    %18 = arith.extui %17 : vector<34x10xi1> to vector<34x10xi32>
    %19 = arith.sitofp %18 : vector<34x10xi32> to vector<34x10xf32>
    %20 = arith.truncf %19 : vector<34x10xf32> to vector<34x10xbf16>
    %21 = arith.truncf %0 : vector<10x1xf32> to vector<10x1xbf16>
    %cst_11 = arith.constant dense<0.000000e+00> : vector<34x1xf32>
    %22 = tpu.matmul %20, %21, %cst_11 {dimension_numbers = #tpu.dot_dimension_numbers<[1], [0], [0], [1], [0, 0, 1, 1], [], []>} : vector<34x10xbf16>, vector<10x1xbf16>, vector<34x1xf32> -> vector<34x1xf32>
    %23 = arith.truncf %7 : vector<10x32xf32> to vector<10x32xbf16>
    %cst_12 = arith.constant dense<0.000000e+00> : vector<34x32xf32>
    %24 = tpu.matmul %15, %23, %cst_12 {dimension_numbers = #tpu.dot_dimension_numbers<[1], [0], [0], [1], [0, 0, 1, 1], [], []>} : vector<34x10xbf16>, vector<10x32xbf16>, vector<34x32xf32> -> vector<34x32xf32>
    %cst_13 = arith.constant dense<0.000000e+00> : vector<34x32xf32>
    %25 = tpu.matmul %20, %23, %cst_13 {dimension_numbers = #tpu.dot_dimension_numbers<[1], [0], [0], [1], [0, 0, 1, 1], [], []>} : vector<34x10xbf16>, vector<10x32xbf16>, vector<34x32xf32> -> vector<34x32xf32>
    %c0_14 = arith.constant 0 : index
    %c0_15 = arith.constant 0 : index
    %c0_16 = arith.constant 0 : index
    %26 = vector.load %arg6[%c0_14, %c0_15, %c0_16] : memref<3x32x192xf32, #tpu.memory_space<vmem>>, vector<1x32x192xf32>
    %27 = vector.shape_cast %26 : vector<1x32x192xf32> to vector<32x192xf32>
    %cst_17 = arith.constant dense<0.000000e+00> : vector<34x192xf32>
    %28 = tpu.matmul %24, %27, %cst_17 {dimension_numbers = #tpu.dot_dimension_numbers<[1], [0], [0], [1], [0, 0, 1, 1], [], []>} : vector<34x32xf32>, vector<32x192xf32>, vector<34x192xf32> -> vector<34x192xf32>
    %c0_18 = arith.constant 0 : index
    %c0_19 = arith.constant 0 : index
    %c0_20 = arith.constant 0 : index
    %29 = vector.load %arg7[%c0_18, %c0_19, %c0_20] : memref<3x32x192xf32, #tpu.memory_space<vmem>>, vector<1x32x192xf32>
    %30 = vector.shape_cast %29 : vector<1x32x192xf32> to vector<32x192xf32>
    %cst_21 = arith.constant dense<0.000000e+00> : vector<34x192xf32>
    %31 = tpu.matmul %25, %30, %cst_21 {dimension_numbers = #tpu.dot_dimension_numbers<[1], [0], [0], [1], [0, 0, 1, 1], [], []>} : vector<34x32xf32>, vector<32x192xf32>, vector<34x192xf32> -> vector<34x192xf32>
    %32 = arith.addf %28, %31 : vector<34x192xf32>
    %c0_22 = arith.constant 0 : index
    %c0_23 = arith.constant 0 : index
    %c0_24 = arith.constant 0 : index
    %33 = vector.load %arg8[%c0_22, %c0_23, %c0_24] : memref<3x1x192xf32, #tpu.memory_space<vmem>>, vector<1x1x192xf32>
    %34 = vector.shape_cast %33 : vector<1x1x192xf32> to vector<1x192xf32>
    %35 = vector.broadcast %34 : vector<1x192xf32> to vector<34x192xf32>
    %36 = arith.addf %32, %35 : vector<34x192xf32>
    %cst_25 = arith.constant 0.000000e+00 : f32
    %37 = vector.broadcast %cst_25 : f32 to vector<34x192xf32>
    %38 = arith.maximumf %36, %37 : vector<34x192xf32>
    %c0_26 = arith.constant 0 : index
    %c0_27 = arith.constant 0 : index
    %c0_28 = arith.constant 0 : index
    %39 = vector.load %arg9[%c0_26, %c0_27, %c0_28] : memref<3x192x3xf32, #tpu.memory_space<vmem>>, vector<1x192x3xf32>
    %40 = vector.shape_cast %39 : vector<1x192x3xf32> to vector<192x3xf32>
    %cst_29 = arith.constant dense<0.000000e+00> : vector<34x3xf32>
    %41 = tpu.matmul %38, %40, %cst_29 {dimension_numbers = #tpu.dot_dimension_numbers<[1], [0], [0], [1], [0, 0, 1, 1], [], []>} : vector<34x192xf32>, vector<192x3xf32>, vector<34x3xf32> -> vector<34x3xf32>
    %c0_30 = arith.constant 0 : index
    %c0_31 = arith.constant 0 : index
    %c0_32 = arith.constant 0 : index
    %42 = vector.load %arg10[%c0_30, %c0_31, %c0_32] : memref<3x1x3xf32, #tpu.memory_space<vmem>>, vector<1x1x3xf32>
    %43 = vector.shape_cast %42 : vector<1x1x3xf32> to vector<1x3xf32>
    %44 = vector.broadcast %43 : vector<1x3xf32> to vector<34x3xf32>
    %45 = arith.addf %41, %44 : vector<34x3xf32>
    %46 = vector.extract_strided_slice %45 {offsets = [0, 0], sizes = [34, 1], strides = [1, 1]} : vector<34x3xf32> to vector<34x1xf32>
    %cst_33 = arith.constant -1.000000e+30 : f32
    %47 = vector.shape_cast %46 : vector<34x1xf32> to vector<34x1xf32>
    %48 = vector.broadcast %47 : vector<34x1xf32> to vector<34x10xf32>
    %49 = vector.broadcast %cst_33 : f32 to vector<34x10xf32>
    %50 = arith.select %12, %48, %49 : vector<34x10xi1>, vector<34x10xf32>
    %cst_34 = arith.constant dense<0xFF800000> : vector<10xf32>
    %51 = vector.multi_reduction <maximumf>, %50, %cst_34 [0] : vector<34x10xf32> to vector<10xf32>
    %52 = vector.shape_cast %51 : vector<10xf32> to vector<1x10xf32>
    %53 = vector.extract_strided_slice %45 {offsets = [0, 1], sizes = [34, 1], strides = [1, 1]} : vector<34x3xf32> to vector<34x1xf32>
    %cst_35 = arith.constant -1.000000e+30 : f32
    %54 = vector.shape_cast %53 : vector<34x1xf32> to vector<34x1xf32>
    %55 = vector.broadcast %54 : vector<34x1xf32> to vector<34x10xf32>
    %56 = vector.broadcast %cst_35 : f32 to vector<34x10xf32>
    %57 = arith.select %12, %55, %56 : vector<34x10xi1>, vector<34x10xf32>
    %cst_36 = arith.constant dense<0xFF800000> : vector<10xf32>
    %58 = vector.multi_reduction <maximumf>, %57, %cst_36 [0] : vector<34x10xf32> to vector<10xf32>
    %59 = vector.shape_cast %58 : vector<10xf32> to vector<1x10xf32>
    %60 = vector.extract_strided_slice %45 {offsets = [0, 2], sizes = [34, 1], strides = [1, 1]} : vector<34x3xf32> to vector<34x1xf32>
    %cst_37 = arith.constant -1.000000e+30 : f32
    %61 = vector.shape_cast %60 : vector<34x1xf32> to vector<34x1xf32>
    %62 = vector.broadcast %61 : vector<34x1xf32> to vector<34x10xf32>
    %63 = vector.broadcast %cst_37 : f32 to vector<34x10xf32>
    %64 = arith.select %12, %62, %63 : vector<34x10xi1>, vector<34x10xf32>
    %cst_38 = arith.constant dense<0xFF800000> : vector<10xf32>
    %65 = vector.multi_reduction <maximumf>, %64, %cst_38 [0] : vector<34x10xf32> to vector<10xf32>
    %66 = vector.shape_cast %65 : vector<10xf32> to vector<1x10xf32>
    %67 = tpu.concatenate %52, %59, %66 in 0 : vector<1x10xf32>, vector<1x10xf32>, vector<1x10xf32> -> vector<3x10xf32>
    %68 = arith.truncf %67 : vector<3x10xf32> to vector<3x10xbf16>
    %cst_39 = arith.constant dense<0.000000e+00> : vector<34x3xf32>
    %69 = tpu.matmul %15, %68, %cst_39 {dimension_numbers = #tpu.dot_dimension_numbers<[1], [1], [0], [0], [0, 0, 1, 0], [], []>} : vector<34x10xbf16>, vector<3x10xbf16>, vector<34x3xf32> -> vector<34x3xf32>
    %70 = arith.subf %45, %69 : vector<34x3xf32>
    %71 = math.exp %70 : vector<34x3xf32>
    %72 = vector.broadcast %22 : vector<34x1xf32> to vector<34x3xf32>
    %73 = arith.mulf %72, %71 : vector<34x3xf32>
    %74 = arith.truncf %73 : vector<34x3xf32> to vector<34x3xbf16>
    %cst_40 = arith.constant dense<0.000000e+00> : vector<10x3xf32>
    %75 = tpu.matmul %15, %74, %cst_40 {dimension_numbers = #tpu.dot_dimension_numbers<[0], [0], [1], [1], [0, 1, 1, 1], [], []>} : vector<34x10xbf16>, vector<34x3xbf16>, vector<10x3xf32> -> vector<10x3xf32>
    %76 = arith.truncf %75 : vector<10x3xf32> to vector<10x3xbf16>
    %cst_41 = arith.constant dense<0.000000e+00> : vector<34x3xf32>
    %77 = tpu.matmul %15, %76, %cst_41 {dimension_numbers = #tpu.dot_dimension_numbers<[1], [0], [0], [1], [0, 0, 1, 1], [], []>} : vector<34x10xbf16>, vector<10x3xbf16>, vector<34x3xf32> -> vector<34x3xf32>
    %cst_42 = arith.constant 1.000000e-10 : f32
    %78 = vector.broadcast %cst_42 : f32 to vector<34x3xf32>
    %79 = arith.addf %77, %78 : vector<34x3xf32>
    %80 = tpu.reciprocal %79 {approx = true} : vector<34x3xf32> -> vector<34x3xf32>
    %81 = arith.mulf %73, %80 : vector<34x3xf32>
    %c0_43 = arith.constant 0 : index
    %c0_44 = arith.constant 0 : index
    %c0_45 = arith.constant 0 : index
    %82 = vector.load %arg11[%c0_43, %c0_44, %c0_45] : memref<3x32x192xf32, #tpu.memory_space<vmem>>, vector<1x32x192xf32>
    %83 = vector.shape_cast %82 : vector<1x32x192xf32> to vector<32x192xf32>
    %cst_46 = arith.constant dense<0.000000e+00> : vector<34x192xf32>
    %84 = tpu.matmul %24, %83, %cst_46 {dimension_numbers = #tpu.dot_dimension_numbers<[1], [0], [0], [1], [0, 0, 1, 1], [], []>} : vector<34x32xf32>, vector<32x192xf32>, vector<34x192xf32> -> vector<34x192xf32>
    %c0_47 = arith.constant 0 : index
    %c0_48 = arith.constant 0 : index
    %c0_49 = arith.constant 0 : index
    %85 = vector.load %arg12[%c0_47, %c0_48, %c0_49] : memref<3x32x192xf32, #tpu.memory_space<vmem>>, vector<1x32x192xf32>
    %86 = vector.shape_cast %85 : vector<1x32x192xf32> to vector<32x192xf32>
    %cst_50 = arith.constant dense<0.000000e+00> : vector<34x192xf32>
    %87 = tpu.matmul %25, %86, %cst_50 {dimension_numbers = #tpu.dot_dimension_numbers<[1], [0], [0], [1], [0, 0, 1, 1], [], []>} : vector<34x32xf32>, vector<32x192xf32>, vector<34x192xf32> -> vector<34x192xf32>
    %88 = arith.addf %84, %87 : vector<34x192xf32>
    %c0_51 = arith.constant 0 : index
    %c0_52 = arith.constant 0 : index
    %c0_53 = arith.constant 0 : index
    %89 = vector.load %arg13[%c0_51, %c0_52, %c0_53] : memref<3x1x192xf32, #tpu.memory_space<vmem>>, vector<1x1x192xf32>
    %90 = vector.shape_cast %89 : vector<1x1x192xf32> to vector<1x192xf32>
    %91 = vector.broadcast %90 : vector<1x192xf32> to vector<34x192xf32>
    %92 = arith.addf %88, %91 : vector<34x192xf32>
    %cst_54 = arith.constant 0.000000e+00 : f32
    %93 = vector.broadcast %cst_54 : f32 to vector<34x192xf32>
    %94 = arith.maximumf %92, %93 : vector<34x192xf32>
    %c0_55 = arith.constant 0 : index
    %c0_56 = arith.constant 0 : index
    %c0_57 = arith.constant 0 : index
    %95 = vector.load %arg14[%c0_55, %c0_56, %c0_57] : memref<3x192x96xf32, #tpu.memory_space<vmem>>, vector<1x192x96xf32>
    %96 = vector.shape_cast %95 : vector<1x192x96xf32> to vector<192x96xf32>
    %cst_58 = arith.constant dense<0.000000e+00> : vector<34x96xf32>
    %97 = tpu.matmul %94, %96, %cst_58 {dimension_numbers = #tpu.dot_dimension_numbers<[1], [0], [0], [1], [0, 0, 1, 1], [], []>} : vector<34x192xf32>, vector<192x96xf32>, vector<34x96xf32> -> vector<34x96xf32>
    %c0_59 = arith.constant 0 : index
    %c0_60 = arith.constant 0 : index
    %c0_61 = arith.constant 0 : index
    %98 = vector.load %arg15[%c0_59, %c0_60, %c0_61] : memref<3x1x96xf32, #tpu.memory_space<vmem>>, vector<1x1x96xf32>
    %99 = vector.shape_cast %98 : vector<1x1x96xf32> to vector<1x96xf32>
    %100 = vector.broadcast %99 : vector<1x96xf32> to vector<34x96xf32>
    %101 = arith.addf %97, %100 : vector<34x96xf32>
    %102 = vector.extract_strided_slice %81 {offsets = [0, 0], sizes = [34, 1], strides = [1, 1]} : vector<34x3xf32> to vector<34x1xf32>
    %103 = vector.extract_strided_slice %101 {offsets = [0, 0], sizes = [34, 32], strides = [1, 1]} : vector<34x96xf32> to vector<34x32xf32>
    %104 = vector.broadcast %102 : vector<34x1xf32> to vector<34x32xf32>
    %105 = arith.mulf %104, %103 : vector<34x32xf32>
    %106 = vector.extract_strided_slice %81 {offsets = [0, 1], sizes = [34, 1], strides = [1, 1]} : vector<34x3xf32> to vector<34x1xf32>
    %107 = vector.extract_strided_slice %101 {offsets = [0, 32], sizes = [34, 32], strides = [1, 1]} : vector<34x96xf32> to vector<34x32xf32>
    %108 = vector.broadcast %106 : vector<34x1xf32> to vector<34x32xf32>
    %109 = arith.mulf %108, %107 : vector<34x32xf32>
    %110 = arith.addf %105, %109 : vector<34x32xf32>
    %111 = vector.extract_strided_slice %81 {offsets = [0, 2], sizes = [34, 1], strides = [1, 1]} : vector<34x3xf32> to vector<34x1xf32>
    %112 = vector.extract_strided_slice %101 {offsets = [0, 64], sizes = [34, 32], strides = [1, 1]} : vector<34x96xf32> to vector<34x32xf32>
    %113 = vector.broadcast %111 : vector<34x1xf32> to vector<34x32xf32>
    %114 = arith.mulf %113, %112 : vector<34x32xf32>
    %115 = arith.addf %110, %114 : vector<34x32xf32>
    %116 = arith.truncf %115 : vector<34x32xf32> to vector<34x32xbf16>
    %cst_62 = arith.constant dense<0.000000e+00> : vector<10x32xf32>
    %117 = tpu.matmul %15, %116, %cst_62 {dimension_numbers = #tpu.dot_dimension_numbers<[0], [0], [1], [1], [0, 1, 1, 1], [], []>} : vector<34x10xbf16>, vector<34x32xbf16>, vector<10x32xf32> -> vector<10x32xf32>
    %cst_63 = arith.constant 0.333333343 : f32
    %118 = vector.broadcast %cst_63 : f32 to vector<10x32xf32>
    %119 = arith.mulf %117, %118 : vector<10x32xf32>
    %120 = arith.addf %119, %7 : vector<10x32xf32>
    %121 = arith.truncf %120 : vector<10x32xf32> to vector<10x32xbf16>
    %cst_64 = arith.constant dense<0.000000e+00> : vector<34x32xf32>
    %122 = tpu.matmul %15, %121, %cst_64 {dimension_numbers = #tpu.dot_dimension_numbers<[1], [0], [0], [1], [0, 0, 1, 1], [], []>} : vector<34x10xbf16>, vector<10x32xbf16>, vector<34x32xf32> -> vector<34x32xf32>
    %cst_65 = arith.constant dense<0.000000e+00> : vector<34x32xf32>
    %123 = tpu.matmul %20, %121, %cst_65 {dimension_numbers = #tpu.dot_dimension_numbers<[1], [0], [0], [1], [0, 0, 1, 1], [], []>} : vector<34x10xbf16>, vector<10x32xbf16>, vector<34x32xf32> -> vector<34x32xf32>
    %c1 = arith.constant 1 : index
    %c0_66 = arith.constant 0 : index
    %c0_67 = arith.constant 0 : index
    %124 = vector.load %arg6[%c1, %c0_66, %c0_67] : memref<3x32x192xf32, #tpu.memory_space<vmem>>, vector<1x32x192xf32>
    %125 = vector.shape_cast %124 : vector<1x32x192xf32> to vector<32x192xf32>
    %cst_68 = arith.constant dense<0.000000e+00> : vector<34x192xf32>
    %126 = tpu.matmul %122, %125, %cst_68 {dimension_numbers = #tpu.dot_dimension_numbers<[1], [0], [0], [1], [0, 0, 1, 1], [], []>} : vector<34x32xf32>, vector<32x192xf32>, vector<34x192xf32> -> vector<34x192xf32>
    %c1_69 = arith.constant 1 : index
    %c0_70 = arith.constant 0 : index
    %c0_71 = arith.constant 0 : index
    %127 = vector.load %arg7[%c1_69, %c0_70, %c0_71] : memref<3x32x192xf32, #tpu.memory_space<vmem>>, vector<1x32x192xf32>
    %128 = vector.shape_cast %127 : vector<1x32x192xf32> to vector<32x192xf32>
    %cst_72 = arith.constant dense<0.000000e+00> : vector<34x192xf32>
    %129 = tpu.matmul %123, %128, %cst_72 {dimension_numbers = #tpu.dot_dimension_numbers<[1], [0], [0], [1], [0, 0, 1, 1], [], []>} : vector<34x32xf32>, vector<32x192xf32>, vector<34x192xf32> -> vector<34x192xf32>
    %130 = arith.addf %126, %129 : vector<34x192xf32>
    %c1_73 = arith.constant 1 : index
    %c0_74 = arith.constant 0 : index
    %c0_75 = arith.constant 0 : index
    %131 = vector.load %arg8[%c1_73, %c0_74, %c0_75] : memref<3x1x192xf32, #tpu.memory_space<vmem>>, vector<1x1x192xf32>
    %132 = vector.shape_cast %131 : vector<1x1x192xf32> to vector<1x192xf32>
    %133 = vector.broadcast %132 : vector<1x192xf32> to vector<34x192xf32>
    %134 = arith.addf %130, %133 : vector<34x192xf32>
    %cst_76 = arith.constant 0.000000e+00 : f32
    %135 = vector.broadcast %cst_76 : f32 to vector<34x192xf32>
    %136 = arith.maximumf %134, %135 : vector<34x192xf32>
    %c1_77 = arith.constant 1 : index
    %c0_78 = arith.constant 0 : index
    %c0_79 = arith.constant 0 : index
    %137 = vector.load %arg9[%c1_77, %c0_78, %c0_79] : memref<3x192x3xf32, #tpu.memory_space<vmem>>, vector<1x192x3xf32>
    %138 = vector.shape_cast %137 : vector<1x192x3xf32> to vector<192x3xf32>
    %cst_80 = arith.constant dense<0.000000e+00> : vector<34x3xf32>
    %139 = tpu.matmul %136, %138, %cst_80 {dimension_numbers = #tpu.dot_dimension_numbers<[1], [0], [0], [1], [0, 0, 1, 1], [], []>} : vector<34x192xf32>, vector<192x3xf32>, vector<34x3xf32> -> vector<34x3xf32>
    %c1_81 = arith.constant 1 : index
    %c0_82 = arith.constant 0 : index
    %c0_83 = arith.constant 0 : index
    %140 = vector.load %arg10[%c1_81, %c0_82, %c0_83] : memref<3x1x3xf32, #tpu.memory_space<vmem>>, vector<1x1x3xf32>
    %141 = vector.shape_cast %140 : vector<1x1x3xf32> to vector<1x3xf32>
    %142 = vector.broadcast %141 : vector<1x3xf32> to vector<34x3xf32>
    %143 = arith.addf %139, %142 : vector<34x3xf32>
    %144 = vector.extract_strided_slice %143 {offsets = [0, 0], sizes = [34, 1], strides = [1, 1]} : vector<34x3xf32> to vector<34x1xf32>
    %cst_84 = arith.constant -1.000000e+30 : f32
    %145 = vector.shape_cast %144 : vector<34x1xf32> to vector<34x1xf32>
    %146 = vector.broadcast %145 : vector<34x1xf32> to vector<34x10xf32>
    %147 = vector.broadcast %cst_84 : f32 to vector<34x10xf32>
    %148 = arith.select %12, %146, %147 : vector<34x10xi1>, vector<34x10xf32>
    %cst_85 = arith.constant dense<0xFF800000> : vector<10xf32>
    %149 = vector.multi_reduction <maximumf>, %148, %cst_85 [0] : vector<34x10xf32> to vector<10xf32>
    %150 = vector.shape_cast %149 : vector<10xf32> to vector<1x10xf32>
    %151 = vector.extract_strided_slice %143 {offsets = [0, 1], sizes = [34, 1], strides = [1, 1]} : vector<34x3xf32> to vector<34x1xf32>
    %cst_86 = arith.constant -1.000000e+30 : f32
    %152 = vector.shape_cast %151 : vector<34x1xf32> to vector<34x1xf32>
    %153 = vector.broadcast %152 : vector<34x1xf32> to vector<34x10xf32>
    %154 = vector.broadcast %cst_86 : f32 to vector<34x10xf32>
    %155 = arith.select %12, %153, %154 : vector<34x10xi1>, vector<34x10xf32>
    %cst_87 = arith.constant dense<0xFF800000> : vector<10xf32>
    %156 = vector.multi_reduction <maximumf>, %155, %cst_87 [0] : vector<34x10xf32> to vector<10xf32>
    %157 = vector.shape_cast %156 : vector<10xf32> to vector<1x10xf32>
    %158 = vector.extract_strided_slice %143 {offsets = [0, 2], sizes = [34, 1], strides = [1, 1]} : vector<34x3xf32> to vector<34x1xf32>
    %cst_88 = arith.constant -1.000000e+30 : f32
    %159 = vector.shape_cast %158 : vector<34x1xf32> to vector<34x1xf32>
    %160 = vector.broadcast %159 : vector<34x1xf32> to vector<34x10xf32>
    %161 = vector.broadcast %cst_88 : f32 to vector<34x10xf32>
    %162 = arith.select %12, %160, %161 : vector<34x10xi1>, vector<34x10xf32>
    %cst_89 = arith.constant dense<0xFF800000> : vector<10xf32>
    %163 = vector.multi_reduction <maximumf>, %162, %cst_89 [0] : vector<34x10xf32> to vector<10xf32>
    %164 = vector.shape_cast %163 : vector<10xf32> to vector<1x10xf32>
    %165 = tpu.concatenate %150, %157, %164 in 0 : vector<1x10xf32>, vector<1x10xf32>, vector<1x10xf32> -> vector<3x10xf32>
    %166 = arith.truncf %165 : vector<3x10xf32> to vector<3x10xbf16>
    %cst_90 = arith.constant dense<0.000000e+00> : vector<34x3xf32>
    %167 = tpu.matmul %15, %166, %cst_90 {dimension_numbers = #tpu.dot_dimension_numbers<[1], [1], [0], [0], [0, 0, 1, 0], [], []>} : vector<34x10xbf16>, vector<3x10xbf16>, vector<34x3xf32> -> vector<34x3xf32>
    %168 = arith.subf %143, %167 : vector<34x3xf32>
    %169 = math.exp %168 : vector<34x3xf32>
    %170 = vector.broadcast %22 : vector<34x1xf32> to vector<34x3xf32>
    %171 = arith.mulf %170, %169 : vector<34x3xf32>
    %172 = arith.truncf %171 : vector<34x3xf32> to vector<34x3xbf16>
    %cst_91 = arith.constant dense<0.000000e+00> : vector<10x3xf32>
    %173 = tpu.matmul %15, %172, %cst_91 {dimension_numbers = #tpu.dot_dimension_numbers<[0], [0], [1], [1], [0, 1, 1, 1], [], []>} : vector<34x10xbf16>, vector<34x3xbf16>, vector<10x3xf32> -> vector<10x3xf32>
    %174 = arith.truncf %173 : vector<10x3xf32> to vector<10x3xbf16>
    %cst_92 = arith.constant dense<0.000000e+00> : vector<34x3xf32>
    %175 = tpu.matmul %15, %174, %cst_92 {dimension_numbers = #tpu.dot_dimension_numbers<[1], [0], [0], [1], [0, 0, 1, 1], [], []>} : vector<34x10xbf16>, vector<10x3xbf16>, vector<34x3xf32> -> vector<34x3xf32>
    %cst_93 = arith.constant 1.000000e-10 : f32
    %176 = vector.broadcast %cst_93 : f32 to vector<34x3xf32>
    %177 = arith.addf %175, %176 : vector<34x3xf32>
    %178 = tpu.reciprocal %177 {approx = true} : vector<34x3xf32> -> vector<34x3xf32>
    %179 = arith.mulf %171, %178 : vector<34x3xf32>
    %c1_94 = arith.constant 1 : index
    %c0_95 = arith.constant 0 : index
    %c0_96 = arith.constant 0 : index
    %180 = vector.load %arg11[%c1_94, %c0_95, %c0_96] : memref<3x32x192xf32, #tpu.memory_space<vmem>>, vector<1x32x192xf32>
    %181 = vector.shape_cast %180 : vector<1x32x192xf32> to vector<32x192xf32>
    %cst_97 = arith.constant dense<0.000000e+00> : vector<34x192xf32>
    %182 = tpu.matmul %122, %181, %cst_97 {dimension_numbers = #tpu.dot_dimension_numbers<[1], [0], [0], [1], [0, 0, 1, 1], [], []>} : vector<34x32xf32>, vector<32x192xf32>, vector<34x192xf32> -> vector<34x192xf32>
    %c1_98 = arith.constant 1 : index
    %c0_99 = arith.constant 0 : index
    %c0_100 = arith.constant 0 : index
    %183 = vector.load %arg12[%c1_98, %c0_99, %c0_100] : memref<3x32x192xf32, #tpu.memory_space<vmem>>, vector<1x32x192xf32>
    %184 = vector.shape_cast %183 : vector<1x32x192xf32> to vector<32x192xf32>
    %cst_101 = arith.constant dense<0.000000e+00> : vector<34x192xf32>
    %185 = tpu.matmul %123, %184, %cst_101 {dimension_numbers = #tpu.dot_dimension_numbers<[1], [0], [0], [1], [0, 0, 1, 1], [], []>} : vector<34x32xf32>, vector<32x192xf32>, vector<34x192xf32> -> vector<34x192xf32>
    %186 = arith.addf %182, %185 : vector<34x192xf32>
    %c1_102 = arith.constant 1 : index
    %c0_103 = arith.constant 0 : index
    %c0_104 = arith.constant 0 : index
    %187 = vector.load %arg13[%c1_102, %c0_103, %c0_104] : memref<3x1x192xf32, #tpu.memory_space<vmem>>, vector<1x1x192xf32>
    %188 = vector.shape_cast %187 : vector<1x1x192xf32> to vector<1x192xf32>
    %189 = vector.broadcast %188 : vector<1x192xf32> to vector<34x192xf32>
    %190 = arith.addf %186, %189 : vector<34x192xf32>
    %cst_105 = arith.constant 0.000000e+00 : f32
    %191 = vector.broadcast %cst_105 : f32 to vector<34x192xf32>
    %192 = arith.maximumf %190, %191 : vector<34x192xf32>
    %c1_106 = arith.constant 1 : index
    %c0_107 = arith.constant 0 : index
    %c0_108 = arith.constant 0 : index
    %193 = vector.load %arg14[%c1_106, %c0_107, %c0_108] : memref<3x192x96xf32, #tpu.memory_space<vmem>>, vector<1x192x96xf32>
    %194 = vector.shape_cast %193 : vector<1x192x96xf32> to vector<192x96xf32>
    %cst_109 = arith.constant dense<0.000000e+00> : vector<34x96xf32>
    %195 = tpu.matmul %192, %194, %cst_109 {dimension_numbers = #tpu.dot_dimension_numbers<[1], [0], [0], [1], [0, 0, 1, 1], [], []>} : vector<34x192xf32>, vector<192x96xf32>, vector<34x96xf32> -> vector<34x96xf32>
    %c1_110 = arith.constant 1 : index
    %c0_111 = arith.constant 0 : index
    %c0_112 = arith.constant 0 : index
    %196 = vector.load %arg15[%c1_110, %c0_111, %c0_112] : memref<3x1x96xf32, #tpu.memory_space<vmem>>, vector<1x1x96xf32>
    %197 = vector.shape_cast %196 : vector<1x1x96xf32> to vector<1x96xf32>
    %198 = vector.broadcast %197 : vector<1x96xf32> to vector<34x96xf32>
    %199 = arith.addf %195, %198 : vector<34x96xf32>
    %200 = vector.extract_strided_slice %179 {offsets = [0, 0], sizes = [34, 1], strides = [1, 1]} : vector<34x3xf32> to vector<34x1xf32>
    %201 = vector.extract_strided_slice %199 {offsets = [0, 0], sizes = [34, 32], strides = [1, 1]} : vector<34x96xf32> to vector<34x32xf32>
    %202 = vector.broadcast %200 : vector<34x1xf32> to vector<34x32xf32>
    %203 = arith.mulf %202, %201 : vector<34x32xf32>
    %204 = vector.extract_strided_slice %179 {offsets = [0, 1], sizes = [34, 1], strides = [1, 1]} : vector<34x3xf32> to vector<34x1xf32>
    %205 = vector.extract_strided_slice %199 {offsets = [0, 32], sizes = [34, 32], strides = [1, 1]} : vector<34x96xf32> to vector<34x32xf32>
    %206 = vector.broadcast %204 : vector<34x1xf32> to vector<34x32xf32>
    %207 = arith.mulf %206, %205 : vector<34x32xf32>
    %208 = arith.addf %203, %207 : vector<34x32xf32>
    %209 = vector.extract_strided_slice %179 {offsets = [0, 2], sizes = [34, 1], strides = [1, 1]} : vector<34x3xf32> to vector<34x1xf32>
    %210 = vector.extract_strided_slice %199 {offsets = [0, 64], sizes = [34, 32], strides = [1, 1]} : vector<34x96xf32> to vector<34x32xf32>
    %211 = vector.broadcast %209 : vector<34x1xf32> to vector<34x32xf32>
    %212 = arith.mulf %211, %210 : vector<34x32xf32>
    %213 = arith.addf %208, %212 : vector<34x32xf32>
    %214 = arith.truncf %213 : vector<34x32xf32> to vector<34x32xbf16>
    %cst_113 = arith.constant dense<0.000000e+00> : vector<10x32xf32>
    %215 = tpu.matmul %15, %214, %cst_113 {dimension_numbers = #tpu.dot_dimension_numbers<[0], [0], [1], [1], [0, 1, 1, 1], [], []>} : vector<34x10xbf16>, vector<34x32xbf16>, vector<10x32xf32> -> vector<10x32xf32>
    %cst_114 = arith.constant 0.333333343 : f32
    %216 = vector.broadcast %cst_114 : f32 to vector<10x32xf32>
    %217 = arith.mulf %215, %216 : vector<10x32xf32>
    %218 = arith.addf %217, %120 : vector<10x32xf32>
    %219 = arith.truncf %218 : vector<10x32xf32> to vector<10x32xbf16>
    %cst_115 = arith.constant dense<0.000000e+00> : vector<34x32xf32>
    %220 = tpu.matmul %15, %219, %cst_115 {dimension_numbers = #tpu.dot_dimension_numbers<[1], [0], [0], [1], [0, 0, 1, 1], [], []>} : vector<34x10xbf16>, vector<10x32xbf16>, vector<34x32xf32> -> vector<34x32xf32>
    %cst_116 = arith.constant dense<0.000000e+00> : vector<34x32xf32>
    %221 = tpu.matmul %20, %219, %cst_116 {dimension_numbers = #tpu.dot_dimension_numbers<[1], [0], [0], [1], [0, 0, 1, 1], [], []>} : vector<34x10xbf16>, vector<10x32xbf16>, vector<34x32xf32> -> vector<34x32xf32>
    %c2 = arith.constant 2 : index
    %c0_117 = arith.constant 0 : index
    %c0_118 = arith.constant 0 : index
    %222 = vector.load %arg6[%c2, %c0_117, %c0_118] : memref<3x32x192xf32, #tpu.memory_space<vmem>>, vector<1x32x192xf32>
    %223 = vector.shape_cast %222 : vector<1x32x192xf32> to vector<32x192xf32>
    %cst_119 = arith.constant dense<0.000000e+00> : vector<34x192xf32>
    %224 = tpu.matmul %220, %223, %cst_119 {dimension_numbers = #tpu.dot_dimension_numbers<[1], [0], [0], [1], [0, 0, 1, 1], [], []>} : vector<34x32xf32>, vector<32x192xf32>, vector<34x192xf32> -> vector<34x192xf32>
    %c2_120 = arith.constant 2 : index
    %c0_121 = arith.constant 0 : index
    %c0_122 = arith.constant 0 : index
    %225 = vector.load %arg7[%c2_120, %c0_121, %c0_122] : memref<3x32x192xf32, #tpu.memory_space<vmem>>, vector<1x32x192xf32>
    %226 = vector.shape_cast %225 : vector<1x32x192xf32> to vector<32x192xf32>
    %cst_123 = arith.constant dense<0.000000e+00> : vector<34x192xf32>
    %227 = tpu.matmul %221, %226, %cst_123 {dimension_numbers = #tpu.dot_dimension_numbers<[1], [0], [0], [1], [0, 0, 1, 1], [], []>} : vector<34x32xf32>, vector<32x192xf32>, vector<34x192xf32> -> vector<34x192xf32>
    %228 = arith.addf %224, %227 : vector<34x192xf32>
    %c2_124 = arith.constant 2 : index
    %c0_125 = arith.constant 0 : index
    %c0_126 = arith.constant 0 : index
    %229 = vector.load %arg8[%c2_124, %c0_125, %c0_126] : memref<3x1x192xf32, #tpu.memory_space<vmem>>, vector<1x1x192xf32>
    %230 = vector.shape_cast %229 : vector<1x1x192xf32> to vector<1x192xf32>
    %231 = vector.broadcast %230 : vector<1x192xf32> to vector<34x192xf32>
    %232 = arith.addf %228, %231 : vector<34x192xf32>
    %cst_127 = arith.constant 0.000000e+00 : f32
    %233 = vector.broadcast %cst_127 : f32 to vector<34x192xf32>
    %234 = arith.maximumf %232, %233 : vector<34x192xf32>
    %c2_128 = arith.constant 2 : index
    %c0_129 = arith.constant 0 : index
    %c0_130 = arith.constant 0 : index
    %235 = vector.load %arg9[%c2_128, %c0_129, %c0_130] : memref<3x192x3xf32, #tpu.memory_space<vmem>>, vector<1x192x3xf32>
    %236 = vector.shape_cast %235 : vector<1x192x3xf32> to vector<192x3xf32>
    %cst_131 = arith.constant dense<0.000000e+00> : vector<34x3xf32>
    %237 = tpu.matmul %234, %236, %cst_131 {dimension_numbers = #tpu.dot_dimension_numbers<[1], [0], [0], [1], [0, 0, 1, 1], [], []>} : vector<34x192xf32>, vector<192x3xf32>, vector<34x3xf32> -> vector<34x3xf32>
    %c2_132 = arith.constant 2 : index
    %c0_133 = arith.constant 0 : index
    %c0_134 = arith.constant 0 : index
    %238 = vector.load %arg10[%c2_132, %c0_133, %c0_134] : memref<3x1x3xf32, #tpu.memory_space<vmem>>, vector<1x1x3xf32>
    %239 = vector.shape_cast %238 : vector<1x1x3xf32> to vector<1x3xf32>
    %240 = vector.broadcast %239 : vector<1x3xf32> to vector<34x3xf32>
    %241 = arith.addf %237, %240 : vector<34x3xf32>
    %242 = vector.extract_strided_slice %241 {offsets = [0, 0], sizes = [34, 1], strides = [1, 1]} : vector<34x3xf32> to vector<34x1xf32>
    %cst_135 = arith.constant -1.000000e+30 : f32
    %243 = vector.shape_cast %242 : vector<34x1xf32> to vector<34x1xf32>
    %244 = vector.broadcast %243 : vector<34x1xf32> to vector<34x10xf32>
    %245 = vector.broadcast %cst_135 : f32 to vector<34x10xf32>
    %246 = arith.select %12, %244, %245 : vector<34x10xi1>, vector<34x10xf32>
    %cst_136 = arith.constant dense<0xFF800000> : vector<10xf32>
    %247 = vector.multi_reduction <maximumf>, %246, %cst_136 [0] : vector<34x10xf32> to vector<10xf32>
    %248 = vector.shape_cast %247 : vector<10xf32> to vector<1x10xf32>
    %249 = vector.extract_strided_slice %241 {offsets = [0, 1], sizes = [34, 1], strides = [1, 1]} : vector<34x3xf32> to vector<34x1xf32>
    %cst_137 = arith.constant -1.000000e+30 : f32
    %250 = vector.shape_cast %249 : vector<34x1xf32> to vector<34x1xf32>
    %251 = vector.broadcast %250 : vector<34x1xf32> to vector<34x10xf32>
    %252 = vector.broadcast %cst_137 : f32 to vector<34x10xf32>
    %253 = arith.select %12, %251, %252 : vector<34x10xi1>, vector<34x10xf32>
    %cst_138 = arith.constant dense<0xFF800000> : vector<10xf32>
    %254 = vector.multi_reduction <maximumf>, %253, %cst_138 [0] : vector<34x10xf32> to vector<10xf32>
    %255 = vector.shape_cast %254 : vector<10xf32> to vector<1x10xf32>
    %256 = vector.extract_strided_slice %241 {offsets = [0, 2], sizes = [34, 1], strides = [1, 1]} : vector<34x3xf32> to vector<34x1xf32>
    %cst_139 = arith.constant -1.000000e+30 : f32
    %257 = vector.shape_cast %256 : vector<34x1xf32> to vector<34x1xf32>
    %258 = vector.broadcast %257 : vector<34x1xf32> to vector<34x10xf32>
    %259 = vector.broadcast %cst_139 : f32 to vector<34x10xf32>
    %260 = arith.select %12, %258, %259 : vector<34x10xi1>, vector<34x10xf32>
    %cst_140 = arith.constant dense<0xFF800000> : vector<10xf32>
    %261 = vector.multi_reduction <maximumf>, %260, %cst_140 [0] : vector<34x10xf32> to vector<10xf32>
    %262 = vector.shape_cast %261 : vector<10xf32> to vector<1x10xf32>
    %263 = tpu.concatenate %248, %255, %262 in 0 : vector<1x10xf32>, vector<1x10xf32>, vector<1x10xf32> -> vector<3x10xf32>
    %264 = arith.truncf %263 : vector<3x10xf32> to vector<3x10xbf16>
    %cst_141 = arith.constant dense<0.000000e+00> : vector<34x3xf32>
    %265 = tpu.matmul %15, %264, %cst_141 {dimension_numbers = #tpu.dot_dimension_numbers<[1], [1], [0], [0], [0, 0, 1, 0], [], []>} : vector<34x10xbf16>, vector<3x10xbf16>, vector<34x3xf32> -> vector<34x3xf32>
    %266 = arith.subf %241, %265 : vector<34x3xf32>
    %267 = math.exp %266 : vector<34x3xf32>
    %268 = vector.broadcast %22 : vector<34x1xf32> to vector<34x3xf32>
    %269 = arith.mulf %268, %267 : vector<34x3xf32>
    %270 = arith.truncf %269 : vector<34x3xf32> to vector<34x3xbf16>
    %cst_142 = arith.constant dense<0.000000e+00> : vector<10x3xf32>
    %271 = tpu.matmul %15, %270, %cst_142 {dimension_numbers = #tpu.dot_dimension_numbers<[0], [0], [1], [1], [0, 1, 1, 1], [], []>} : vector<34x10xbf16>, vector<34x3xbf16>, vector<10x3xf32> -> vector<10x3xf32>
    %272 = arith.truncf %271 : vector<10x3xf32> to vector<10x3xbf16>
    %cst_143 = arith.constant dense<0.000000e+00> : vector<34x3xf32>
    %273 = tpu.matmul %15, %272, %cst_143 {dimension_numbers = #tpu.dot_dimension_numbers<[1], [0], [0], [1], [0, 0, 1, 1], [], []>} : vector<34x10xbf16>, vector<10x3xbf16>, vector<34x3xf32> -> vector<34x3xf32>
    %cst_144 = arith.constant 1.000000e-10 : f32
    %274 = vector.broadcast %cst_144 : f32 to vector<34x3xf32>
    %275 = arith.addf %273, %274 : vector<34x3xf32>
    %276 = tpu.reciprocal %275 {approx = true} : vector<34x3xf32> -> vector<34x3xf32>
    %277 = arith.mulf %269, %276 : vector<34x3xf32>
    %c2_145 = arith.constant 2 : index
    %c0_146 = arith.constant 0 : index
    %c0_147 = arith.constant 0 : index
    %278 = vector.load %arg11[%c2_145, %c0_146, %c0_147] : memref<3x32x192xf32, #tpu.memory_space<vmem>>, vector<1x32x192xf32>
    %279 = vector.shape_cast %278 : vector<1x32x192xf32> to vector<32x192xf32>
    %cst_148 = arith.constant dense<0.000000e+00> : vector<34x192xf32>
    %280 = tpu.matmul %220, %279, %cst_148 {dimension_numbers = #tpu.dot_dimension_numbers<[1], [0], [0], [1], [0, 0, 1, 1], [], []>} : vector<34x32xf32>, vector<32x192xf32>, vector<34x192xf32> -> vector<34x192xf32>
    %c2_149 = arith.constant 2 : index
    %c0_150 = arith.constant 0 : index
    %c0_151 = arith.constant 0 : index
    %281 = vector.load %arg12[%c2_149, %c0_150, %c0_151] : memref<3x32x192xf32, #tpu.memory_space<vmem>>, vector<1x32x192xf32>
    %282 = vector.shape_cast %281 : vector<1x32x192xf32> to vector<32x192xf32>
    %cst_152 = arith.constant dense<0.000000e+00> : vector<34x192xf32>
    %283 = tpu.matmul %221, %282, %cst_152 {dimension_numbers = #tpu.dot_dimension_numbers<[1], [0], [0], [1], [0, 0, 1, 1], [], []>} : vector<34x32xf32>, vector<32x192xf32>, vector<34x192xf32> -> vector<34x192xf32>
    %284 = arith.addf %280, %283 : vector<34x192xf32>
    %c2_153 = arith.constant 2 : index
    %c0_154 = arith.constant 0 : index
    %c0_155 = arith.constant 0 : index
    %285 = vector.load %arg13[%c2_153, %c0_154, %c0_155] : memref<3x1x192xf32, #tpu.memory_space<vmem>>, vector<1x1x192xf32>
    %286 = vector.shape_cast %285 : vector<1x1x192xf32> to vector<1x192xf32>
    %287 = vector.broadcast %286 : vector<1x192xf32> to vector<34x192xf32>
    %288 = arith.addf %284, %287 : vector<34x192xf32>
    %cst_156 = arith.constant 0.000000e+00 : f32
    %289 = vector.broadcast %cst_156 : f32 to vector<34x192xf32>
    %290 = arith.maximumf %288, %289 : vector<34x192xf32>
    %c2_157 = arith.constant 2 : index
    %c0_158 = arith.constant 0 : index
    %c0_159 = arith.constant 0 : index
    %291 = vector.load %arg14[%c2_157, %c0_158, %c0_159] : memref<3x192x96xf32, #tpu.memory_space<vmem>>, vector<1x192x96xf32>
    %292 = vector.shape_cast %291 : vector<1x192x96xf32> to vector<192x96xf32>
    %cst_160 = arith.constant dense<0.000000e+00> : vector<34x96xf32>
    %293 = tpu.matmul %290, %292, %cst_160 {dimension_numbers = #tpu.dot_dimension_numbers<[1], [0], [0], [1], [0, 0, 1, 1], [], []>} : vector<34x192xf32>, vector<192x96xf32>, vector<34x96xf32> -> vector<34x96xf32>
    %c2_161 = arith.constant 2 : index
    %c0_162 = arith.constant 0 : index
    %c0_163 = arith.constant 0 : index
    %294 = vector.load %arg15[%c2_161, %c0_162, %c0_163] : memref<3x1x96xf32, #tpu.memory_space<vmem>>, vector<1x1x96xf32>
    %295 = vector.shape_cast %294 : vector<1x1x96xf32> to vector<1x96xf32>
    %296 = vector.broadcast %295 : vector<1x96xf32> to vector<34x96xf32>
    %297 = arith.addf %293, %296 : vector<34x96xf32>
    %298 = vector.extract_strided_slice %277 {offsets = [0, 0], sizes = [34, 1], strides = [1, 1]} : vector<34x3xf32> to vector<34x1xf32>
    %299 = vector.extract_strided_slice %297 {offsets = [0, 0], sizes = [34, 32], strides = [1, 1]} : vector<34x96xf32> to vector<34x32xf32>
    %300 = vector.broadcast %298 : vector<34x1xf32> to vector<34x32xf32>
    %301 = arith.mulf %300, %299 : vector<34x32xf32>
    %302 = vector.extract_strided_slice %277 {offsets = [0, 1], sizes = [34, 1], strides = [1, 1]} : vector<34x3xf32> to vector<34x1xf32>
    %303 = vector.extract_strided_slice %297 {offsets = [0, 32], sizes = [34, 32], strides = [1, 1]} : vector<34x96xf32> to vector<34x32xf32>
    %304 = vector.broadcast %302 : vector<34x1xf32> to vector<34x32xf32>
    %305 = arith.mulf %304, %303 : vector<34x32xf32>
    %306 = arith.addf %301, %305 : vector<34x32xf32>
    %307 = vector.extract_strided_slice %277 {offsets = [0, 2], sizes = [34, 1], strides = [1, 1]} : vector<34x3xf32> to vector<34x1xf32>
    %308 = vector.extract_strided_slice %297 {offsets = [0, 64], sizes = [34, 32], strides = [1, 1]} : vector<34x96xf32> to vector<34x32xf32>
    %309 = vector.broadcast %307 : vector<34x1xf32> to vector<34x32xf32>
    %310 = arith.mulf %309, %308 : vector<34x32xf32>
    %311 = arith.addf %306, %310 : vector<34x32xf32>
    %312 = arith.truncf %311 : vector<34x32xf32> to vector<34x32xbf16>
    %cst_164 = arith.constant dense<0.000000e+00> : vector<10x32xf32>
    %313 = tpu.matmul %15, %312, %cst_164 {dimension_numbers = #tpu.dot_dimension_numbers<[0], [0], [1], [1], [0, 1, 1, 1], [], []>} : vector<34x10xbf16>, vector<34x32xbf16>, vector<10x32xf32> -> vector<10x32xf32>
    %cst_165 = arith.constant 0.333333343 : f32
    %314 = vector.broadcast %cst_165 : f32 to vector<10x32xf32>
    %315 = arith.mulf %313, %314 : vector<10x32xf32>
    %316 = arith.addf %315, %218 : vector<10x32xf32>
    %c0_166 = arith.constant 0 : index
    %c0_167 = arith.constant 0 : index
    %317 = vector.load %arg16[%c0_166, %c0_167] : memref<10x32xf32, #tpu.memory_space<vmem>>, vector<10x32xf32>
    tpu.vector_store %arg16[%c0_166, %c0_167], %316 {strides = array<i32>} : memref<10x32xf32, #tpu.memory_space<vmem>>, vector<10x32xf32>,
    return
  }
}

</mosaic_0001>

<llo_original>
// kernel: tpu_custom_call.1
$region0: #{tpu_custom_call.1}
  #allocation0 [shape = 'u32[]', space=smem, size = 0x4, offset = 0x4, fixed_abs, tag = 'smem constant byte address 0x4 - core index']
  #allocation1 [shape = 'u32[144,128]{1,0:T(1,128)}', space=vmem, size = 0x12000, scoped, tag = 'internal scratch']
  %s0 = inlined_call_operand.hbm [shape: f32[10,16], index: 0, kind: input, shape index: {}]
  %s1 = inlined_call_operand.hbm [shape: f32[10,1], index: 1, kind: input, shape index: {}]
  %s2 = inlined_call_operand.hbm [shape: s32[34,1], index: 2, kind: input, shape index: {}]
  %s3 = inlined_call_operand.hbm [shape: s32[34,1], index: 3, kind: input, shape index: {}]
  %s4 = inlined_call_operand.hbm [shape: f32[16,31], index: 4, kind: input, shape index: {}]
  %s5 = inlined_call_operand.hbm [shape: f32[1,31], index: 5, kind: input, shape index: {}]
  %s6 = inlined_call_operand.hbm [shape: f32[3,32,192], index: 6, kind: input, shape index: {}]
  %s7 = inlined_call_operand.hbm [shape: f32[3,32,192], index: 7, kind: input, shape index: {}]
  %s8 = inlined_call_operand.hbm [shape: f32[3,1,192], index: 8, kind: input, shape index: {}]
  %s9 = inlined_call_operand.hbm [shape: f32[3,192,3], index: 9, kind: input, shape index: {}]
  %s10 = inlined_call_operand.hbm [shape: f32[3,1,3], index: 10, kind: input, shape index: {}]
  %s11 = inlined_call_operand.hbm [shape: f32[3,32,192], index: 11, kind: input, shape index: {}]
  %s12 = inlined_call_operand.hbm [shape: f32[3,32,192], index: 12, kind: input, shape index: {}]
  %s13 = inlined_call_operand.hbm [shape: f32[3,1,192], index: 13, kind: input, shape index: {}]
  %s14 = inlined_call_operand.hbm [shape: f32[3,192,96], index: 14, kind: input, shape index: {}]
  %s15 = inlined_call_operand.hbm [shape: f32[3,1,96], index: 15, kind: input, shape index: {}]
  %s16 = inlined_call_operand.hbm [shape: f32[10,32], index: 16, kind: output, shape index: {}]
  %s17 = sld [smem:[#allocation0]]
  $region138: #{tpu_custom_call.1} parent=0
    _
  %s19 = ssub.s32 1, %s17
  %s20 = scalar_select 0, %s19, %s17
  $region1: #{tpu_custom_call.1} parent=0
    #allocation2 [shape = 'u8[8192]{0}', space=vmem, size = 0x2000, scoped, tag = 'input window, operand 0, single buffered']
    #allocation3 [shape = 's32[1]{0}', space=sflag, size = 0x4, scoped, tag = 'scoped memory for tpu_custom_call.1']
    #allocation4 [shape = 's32[1]{0}', space=sflag, size = 0x4, scoped, tag = 'scoped memory for tpu_custom_call.1']
    #allocation5 [shape = 'u8[8192]{0}', space=vmem, size = 0x2000, scoped, tag = 'input window, operand 1, single buffered']
    #allocation6 [shape = 's32[1]{0}', space=sflag, size = 0x4, scoped, tag = 'scoped memory for tpu_custom_call.1']
    #allocation7 [shape = 'u8[20480]{0}', space=vmem, size = 0x5000, scoped, tag = 'input window, operand 2, single buffered']
    #allocation8 [shape = 'u8[20480]{0}', space=vmem, size = 0x5000, scoped, tag = 'input window, operand 3, single buffered']
    #allocation9 [shape = 's32[1]{0}', space=sflag, size = 0x4, scoped, tag = 'scoped memory for tpu_custom_call.1']
    #allocation10 [shape = 'u8[8192]{0}', space=vmem, size = 0x2000, scoped, tag = 'input window, operand 4, single buffered']
    #allocation11 [shape = 'u8[512]{0}', space=vmem, size = 0x400, scoped, tag = 'input window, operand 5, single buffered']
    #allocation12 [shape = 's32[1]{0}', space=sflag, size = 0x4, scoped, tag = 'scoped memory for tpu_custom_call.1']
    #allocation13 [shape = 'u8[98304]{0}', space=vmem, size = 0x18000, scoped, tag = 'input window, operand 6, single buffered']
    #allocation14 [shape = 'u8[98304]{0}', space=vmem, size = 0x18000, scoped, tag = 'input window, operand 7, single buffered']
    #allocation15 [shape = 's32[1]{0}', space=sflag, size = 0x4, scoped, tag = 'scoped memory for tpu_custom_call.1']
    #allocation16 [shape = 'u8[3072]{0}', space=vmem, size = 0xc00, scoped, tag = 'input window, operand 8, single buffered']
    #allocation17 [shape = 'u8[294912]{0}', space=vmem, size = 0x48000, scoped, tag = 'input window, operand 9, single buffered']
    #allocation18 [shape = 's32[1]{0}', space=sflag, size = 0x4, scoped, tag = 'scoped memory for tpu_custom_call.1']
    #allocation19 [shape = 'u8[1536]{0}', space=vmem, size = 0x800, scoped, tag = 'input window, operand 10, single buffered']
    #allocation20 [shape = 'u8[98304]{0}', space=vmem, size = 0x18000, scoped, tag = 'input window, operand 11, single buffered']
    #allocation21 [shape = 's32[1]{0}', space=sflag, size = 0x4, scoped, tag = 'scoped memory for tpu_custom_call.1']
    #allocation22 [shape = 'u8[98304]{0}', space=vmem, size = 0x18000, scoped, tag = 'input window, operand 12, single buffered']
    #allocation23 [shape = 'u8[3072]{0}', space=vmem, size = 0xc00, scoped, tag = 'input window, operand 13, single buffered']
    #allocation24 [shape = 's32[1]{0}', space=sflag, size = 0x4, scoped, tag = 'scoped memory for tpu_custom_call.1']
    #allocation25 [shape = 'u8[294912]{0}', space=vmem, size = 0x48000, scoped, tag = 'input window, operand 14, single buffered']
    #allocation26 [shape = 'u8[1536]{0}', space=vmem, size = 0x800, scoped, tag = 'input window, operand 15, single buffered']
    #allocation27 [shape = 's32[1]{0}', space=sflag, size = 0x4, scoped, tag = 'scoped memory for tpu_custom_call.1']
    #allocation28 [shape = 'u8[8192]{0}', space=vmem, size = 0x2000, scoped, tag = 'output window, operand 0, single buffered']
    %21 = vsyncpa [#allocation3], 0
    %22 = vsyncpa [#allocation6], 0
    %23 = vsyncpa [#allocation9], 0
    %24 = vsyncpa [#allocation12], 0
    %25 = vsyncpa [#allocation15], 0
    %26 = vsyncpa [#allocation18], 0
    %27 = vsyncpa [#allocation21], 0
    %28 = vsyncpa [#allocation24], 0
    %29 = vsyncpa [#allocation27], 0
    %30 = vsyncpa [#allocation4], 0
    // Predicated region
    $region2: #{tpu_custom_call.1} parent=1 // pred_check
      _
    $region3: #{tpu_custom_call.1} parent=1 // pred_check_branch
      %32 = sbr.rel (0) target = $region5
    $region4: #{tpu_custom_call.1} parent=1 // pred_region
      %s34 = ssub.s32 256, 256
      %35 = vsyncadd [#allocation3], %s34
      %s36 = sshll.u32 [#allocation2], 4
      %s37 = int_to_ptr.vmem [resolvable:$true] %s36
      %42 = dma.hbm_to_vmem [thread:$0]  %s0, 256, %s37, [#allocation3], 128, 128, 8
    $region5: #{tpu_custom_call.1} parent=1 // pred_fallthru
      _
    // Predicated region
    $region6: #{tpu_custom_call.1} parent=1 // pred_check
      _
    $region7: #{tpu_custom_call.1} parent=1 // pred_check_branch
      %44 = sbr.rel (0) target = $region9
    $region8: #{tpu_custom_call.1} parent=1 // pred_region
      %s46 = ssub.s32 256, 256
      %47 = vsyncadd [#allocation6], %s46
      %s48 = sshll.u32 [#allocation5], 4
      %s49 = int_to_ptr.vmem [resolvable:$true] %s48
      %54 = dma.hbm_to_vmem [thread:$0]  %s1, 256, %s49, [#allocation6], 128, 128, 8
    $region9: #{tpu_custom_call.1} parent=1 // pred_fallthru
      _
    // Predicated region
    $region10: #{tpu_custom_call.1} parent=1 // pred_check
      _
    $region11: #{tpu_custom_call.1} parent=1 // pred_check_branch
      %56 = sbr.rel (0) target = $region13
    $region12: #{tpu_custom_call.1} parent=1 // pred_region
      %s58 = ssub.s32 640, 640
      %59 = vsyncadd [#allocation6], %s58
      %s60 = sshll.u32 [#allocation7], 4
      %s61 = int_to_ptr.vmem [resolvable:$true] %s60
      %66 = dma.hbm_to_vmem [thread:$0]  %s2, 640, %s61, [#allocation6], 128, 128, 8
    $region13: #{tpu_custom_call.1} parent=1 // pred_fallthru
      _
    // Predicated region
    $region14: #{tpu_custom_call.1} parent=1 // pred_check
      _
    $region15: #{tpu_custom_call.1} parent=1 // pred_check_branch
      %68 = sbr.rel (0) target = $region17
    $region16: #{tpu_custom_call.1} parent=1 // pred_region
      %s70 = ssub.s32 640, 640
      %71 = vsyncadd [#allocation9], %s70
      %s72 = sshll.u32 [#allocation8], 4
      %s73 = int_to_ptr.vmem [resolvable:$true] %s72
      %78 = dma.hbm_to_vmem [thread:$0]  %s3, 640, %s73, [#allocation9], 128, 128, 8
    $region17: #{tpu_custom_call.1} parent=1 // pred_fallthru
      _
    // Predicated region
    $region18: #{tpu_custom_call.1} parent=1 // pred_check
      _
    $region19: #{tpu_custom_call.1} parent=1 // pred_check_branch
      %80 = sbr.rel (0) target = $region21
    $region20: #{tpu_custom_call.1} parent=1 // pred_region
      %s82 = ssub.s32 256, 256
      %83 = vsyncadd [#allocation9], %s82
      %s84 = sshll.u32 [#allocation10], 4
      %s85 = int_to_ptr.vmem [resolvable:$true] %s84
      %90 = dma.hbm_to_vmem [thread:$0]  %s4, 256, %s85, [#allocation9], 128, 128, 8
    $region21: #{tpu_custom_call.1} parent=1 // pred_fallthru
      _
    // Predicated region
    $region22: #{tpu_custom_call.1} parent=1 // pred_check
      _
    $region23: #{tpu_custom_call.1} parent=1 // pred_check_branch
      %92 = sbr.rel (0) target = $region25
    $region24: #{tpu_custom_call.1} parent=1 // pred_region
      %s94 = ssub.s32 16, 16
      %95 = vsyncadd [#allocation12], %s94
      %s97 = sshll.u32 [#allocation11], 4
      %s98 = int_to_ptr.vmem [resolvable:$true] %s97
      %100 = dma.hbm_to_vmem [thread:$0]  %s5, 16, %s98, [#allocation12]
    $region25: #{tpu_custom_call.1} parent=1 // pred_fallthru
      _
    // Predicated region
    $region26: #{tpu_custom_call.1} parent=1 // pred_check
      _
    $region27: #{tpu_custom_call.1} parent=1 // pred_check_branch
      %102 = sbr.rel (0) target = $region29
    $region28: #{tpu_custom_call.1} parent=1 // pred_region
      %s104 = ssub.s32 3072, 3072
      %105 = vsyncadd [#allocation12], %s104
      %s106 = sshll.u32 [#allocation13], 4
      %s107 = int_to_ptr.vmem [resolvable:$true] %s106
      %112 = dma.hbm_to_vmem [thread:$0]  %s6, 3072, %s107, [#allocation12], 256, 256, 16
    $region29: #{tpu_custom_call.1} parent=1 // pred_fallthru
      _
    // Predicated region
    $region30: #{tpu_custom_call.1} parent=1 // pred_check
      _
    $region31: #{tpu_custom_call.1} parent=1 // pred_check_branch
      %114 = sbr.rel (0) target = $region33
    $region32: #{tpu_custom_call.1} parent=1 // pred_region
      %s116 = ssub.s32 3072, 3072
      %117 = vsyncadd [#allocation15], %s116
      %s118 = sshll.u32 [#allocation14], 4
      %s119 = int_to_ptr.vmem [resolvable:$true] %s118
      %124 = dma.hbm_to_vmem [thread:$0]  %s7, 3072, %s119, [#allocation15], 256, 256, 16
    $region33: #{tpu_custom_call.1} parent=1 // pred_fallthru
      _
    // Predicated region
    $region34: #{tpu_custom_call.1} parent=1 // pred_check
      _
    $region35: #{tpu_custom_call.1} parent=1 // pred_check_branch
      %126 = sbr.rel (0) target = $region37
    $region36: #{tpu_custom_call.1} parent=1 // pred_region
      %s128 = ssub.s32 96, 96
      %129 = vsyncadd [#allocation15], %s128
      %s130 = sshll.u32 [#allocation16], 4
      %s131 = int_to_ptr.vmem [resolvable:$true] %s130
      %136 = dma.hbm_to_vmem [thread:$0]  %s8, 96, %s131, [#allocation15], 32, 32, 2
    $region37: #{tpu_custom_call.1} parent=1 // pred_fallthru
      _
    // Predicated region
    $region38: #{tpu_custom_call.1} parent=1 // pred_check
      _
    $region39: #{tpu_custom_call.1} parent=1 // pred_check_branch
      %138 = sbr.rel (0) target = $region41
    $region40: #{tpu_custom_call.1} parent=1 // pred_region
      %s140 = ssub.s32 9216, 9216
      %141 = vsyncadd [#allocation18], %s140
      %s142 = sshll.u32 [#allocation17], 4
      %s143 = int_to_ptr.vmem [resolvable:$true] %s142
      %148 = dma.hbm_to_vmem [thread:$0]  %s9, 9216, %s143, [#allocation18], 128, 128, 8
    $region41: #{tpu_custom_call.1} parent=1 // pred_fallthru
      _
    // Predicated region
    $region42: #{tpu_custom_call.1} parent=1 // pred_check
      _
    $region43: #{tpu_custom_call.1} parent=1 // pred_check_branch
      %150 = sbr.rel (0) target = $region45
    $region44: #{tpu_custom_call.1} parent=1 // pred_region
      %s152 = ssub.s32 48, 48
      %153 = vsyncadd [#allocation18], %s152
      %s154 = sshll.u32 [#allocation19], 4
      %s155 = int_to_ptr.vmem [resolvable:$true] %s154
      %160 = dma.hbm_to_vmem [thread:$0]  %s10, 48, %s155, [#allocation18], 16, 16, 1
    $region45: #{tpu_custom_call.1} parent=1 // pred_fallthru
      _
    // Predicated region
    $region46: #{tpu_custom_call.1} parent=1 // pred_check
      _
    $region47: #{tpu_custom_call.1} parent=1 // pred_check_branch
      %162 = sbr.rel (0) target = $region49
    $region48: #{tpu_custom_call.1} parent=1 // pred_region
      %s164 = ssub.s32 3072, 3072
      %165 = vsyncadd [#allocation21], %s164
      %s166 = sshll.u32 [#allocation20], 4
      %s167 = int_to_ptr.vmem [resolvable:$true] %s166
      %172 = dma.hbm_to_vmem [thread:$0]  %s11, 3072, %s167, [#allocation21], 256, 256, 16
    $region49: #{tpu_custom_call.1} parent=1 // pred_fallthru
      _
    // Predicated region
    $region50: #{tpu_custom_call.1} parent=1 // pred_check
      _
    $region51: #{tpu_custom_call.1} parent=1 // pred_check_branch
      %174 = sbr.rel (0) target = $region53
    $region52: #{tpu_custom_call.1} parent=1 // pred_region
      %s176 = ssub.s32 3072, 3072
      %177 = vsyncadd [#allocation21], %s176
      %s178 = sshll.u32 [#allocation22], 4
      %s179 = int_to_ptr.vmem [resolvable:$true] %s178
      %184 = dma.hbm_to_vmem [thread:$0]  %s12, 3072, %s179, [#allocation21], 256, 256, 16
    $region53: #{tpu_custom_call.1} parent=1 // pred_fallthru
      _
    // Predicated region
    $region54: #{tpu_custom_call.1} parent=1 // pred_check
      _
    $region55: #{tpu_custom_call.1} parent=1 // pred_check_branch
      %186 = sbr.rel (0) target = $region57
    $region56: #{tpu_custom_call.1} parent=1 // pred_region
      %s188 = ssub.s32 96, 96
      %189 = vsyncadd [#allocation24], %s188
      %s190 = sshll.u32 [#allocation23], 4
      %s191 = int_to_ptr.vmem [resolvable:$true] %s190
      %196 = dma.hbm_to_vmem [thread:$0]  %s13, 96, %s191, [#allocation24], 32, 32, 2
    $region57: #{tpu_custom_call.1} parent=1 // pred_fallthru
      _
    // Predicated region
    $region58: #{tpu_custom_call.1} parent=1 // pred_check
      _
    $region59: #{tpu_custom_call.1} parent=1 // pred_check_branch
      %198 = sbr.rel (0) target = $region61
    $region60: #{tpu_custom_call.1} parent=1 // pred_region
      %s200 = ssub.s32 9216, 9216
      %201 = vsyncadd [#allocation24], %s200
      %s202 = sshll.u32 [#allocation25], 4
      %s203 = int_to_ptr.vmem [resolvable:$true] %s202
      %208 = dma.hbm_to_vmem [thread:$0]  %s14, 9216, %s203, [#allocation24], 128, 128, 8
    $region61: #{tpu_custom_call.1} parent=1 // pred_fallthru
      _
    // Predicated region
    $region62: #{tpu_custom_call.1} parent=1 // pred_check
      _
    $region63: #{tpu_custom_call.1} parent=1 // pred_check_branch
      %210 = sbr.rel (0) target = $region65
    $region64: #{tpu_custom_call.1} parent=1 // pred_region
      %s212 = ssub.s32 48, 48
      %213 = vsyncadd [#allocation27], %s212
      %s214 = sshll.u32 [#allocation26], 4
      %s215 = int_to_ptr.vmem [resolvable:$true] %s214
      %220 = dma.hbm_to_vmem [thread:$0]  %s15, 48, %s215, [#allocation27], 16, 16, 1
    $region65: #{tpu_custom_call.1} parent=1 // pred_fallthru
      _
    // Predicated region
    $region66: #{tpu_custom_call.1} parent=1 // pred_check
      _
    $region67: #{tpu_custom_call.1} parent=1 // pred_check_branch
      %222 = sbr.rel (0) target = $region69
    $region68: #{tpu_custom_call.1} parent=1 // pred_region
      %223 = dma.done [#allocation3], 256
    $region69: #{tpu_custom_call.1} parent=1 // pred_fallthru
      _
    // Predicated region
    $region70: #{tpu_custom_call.1} parent=1 // pred_check
      _
    $region71: #{tpu_custom_call.1} parent=1 // pred_check_branch
      %225 = sbr.rel (0) target = $region73
    $region72: #{tpu_custom_call.1} parent=1 // pred_region
      %226 = dma.done [#allocation6], 256
    $region73: #{tpu_custom_call.1} parent=1 // pred_fallthru
      _
    // Predicated region
    $region74: #{tpu_custom_call.1} parent=1 // pred_check
      _
    $region75: #{tpu_custom_call.1} parent=1 // pred_check_branch
      %228 = sbr.rel (0) target = $region77
    $region76: #{tpu_custom_call.1} parent=1 // pred_region
      %229 = dma.done [#allocation6], 640
    $region77: #{tpu_custom_call.1} parent=1 // pred_fallthru
      _
    // Predicated region
    $region78: #{tpu_custom_call.1} parent=1 // pred_check
      _
    $region79: #{tpu_custom_call.1} parent=1 // pred_check_branch
      %231 = sbr.rel (0) target = $region81
    $region80: #{tpu_custom_call.1} parent=1 // pred_region
      %232 = dma.done [#allocation9], 640
    $region81: #{tpu_custom_call.1} parent=1 // pred_fallthru
      _
    // Predicated region
    $region82: #{tpu_custom_call.1} parent=1 // pred_check
      _
    $region83: #{tpu_custom_call.1} parent=1 // pred_check_branch
      %234 = sbr.rel (0) target = $region85
    $region84: #{tpu_custom_call.1} parent=1 // pred_region
      %235 = dma.done [#allocation9], 256
    $region85: #{tpu_custom_call.1} parent=1 // pred_fallthru
      _
    // Predicated region
    $region86: #{tpu_custom_call.1} parent=1 // pred_check
      _
    $region87: #{tpu_custom_call.1} parent=1 // pred_check_branch
      %237 = sbr.rel (0) target = $region89
    $region88: #{tpu_custom_call.1} parent=1 // pred_region
      %238 = dma.done [#allocation12], 16
    $region89: #{tpu_custom_call.1} parent=1 // pred_fallthru
      _
    // Predicated region
    $region90: #{tpu_custom_call.1} parent=1 // pred_check
      _
    $region91: #{tpu_custom_call.1} parent=1 // pred_check_branch
      %240 = sbr.rel (0) target = $region93
    $region92: #{tpu_custom_call.1} parent=1 // pred_region
      %241 = dma.done [#allocation12], 3072
    $region93: #{tpu_custom_call.1} parent=1 // pred_fallthru
      _
    // Predicated region
    $region94: #{tpu_custom_call.1} parent=1 // pred_check
      _
    $region95: #{tpu_custom_call.1} parent=1 // pred_check_branch
      %243 = sbr.rel (0) target = $region97
    $region96: #{tpu_custom_call.1} parent=1 // pred_region
      %244 = dma.done [#allocation15], 3072
    $region97: #{tpu_custom_call.1} parent=1 // pred_fallthru
      _
    // Predicated region
    $region98: #{tpu_custom_call.1} parent=1 // pred_check
      _
    $region99: #{tpu_custom_call.1} parent=1 // pred_check_branch
      %246 = sbr.rel (0) target = $region101
    $region100: #{tpu_custom_call.1} parent=1 // pred_region
      %247 = dma.done [#allocation15], 96
    $region101: #{tpu_custom_call.1} parent=1 // pred_fallthru
      _
    // Predicated region
    $region102: #{tpu_custom_call.1} parent=1 // pred_check
      _
    $region103: #{tpu_custom_call.1} parent=1 // pred_check_branch
      %249 = sbr.rel (0) target = $region105
    $region104: #{tpu_custom_call.1} parent=1 // pred_region
      %250 = dma.done [#allocation18], 9216
    $region105: #{tpu_custom_call.1} parent=1 // pred_fallthru
      _
    // Predicated region
    $region106: #{tpu_custom_call.1} parent=1 // pred_check
      _
    $region107: #{tpu_custom_call.1} parent=1 // pred_check_branch
      %252 = sbr.rel (0) target = $region109
    $region108: #{tpu_custom_call.1} parent=1 // pred_region
      %253 = dma.done [#allocation18], 48
    $region109: #{tpu_custom_call.1} parent=1 // pred_fallthru
      _
    // Predicated region
    $region110: #{tpu_custom_call.1} parent=1 // pred_check
      _
    $region111: #{tpu_custom_call.1} parent=1 // pred_check_branch
      %255 = sbr.rel (0) target = $region113
    $region112: #{tpu_custom_call.1} parent=1 // pred_region
      %256 = dma.done [#allocation21], 3072
    $region113: #{tpu_custom_call.1} parent=1 // pred_fallthru
      _
    // Predicated region
    $region114: #{tpu_custom_call.1} parent=1 // pred_check
      _
    $region115: #{tpu_custom_call.1} parent=1 // pred_check_branch
      %258 = sbr.rel (0) target = $region117
    $region116: #{tpu_custom_call.1} parent=1 // pred_region
      %259 = dma.done [#allocation21], 3072
    $region117: #{tpu_custom_call.1} parent=1 // pred_fallthru
      _
    // Predicated region
    $region118: #{tpu_custom_call.1} parent=1 // pred_check
      _
    $region119: #{tpu_custom_call.1} parent=1 // pred_check_branch
      %261 = sbr.rel (0) target = $region121
    $region120: #{tpu_custom_call.1} parent=1 // pred_region
      %262 = dma.done [#allocation24], 96
    $region121: #{tpu_custom_call.1} parent=1 // pred_fallthru
      _
    // Predicated region
    $region122: #{tpu_custom_call.1} parent=1 // pred_check
      _
    $region123: #{tpu_custom_call.1} parent=1 // pred_check_branch
      %264 = sbr.rel (0) target = $region125
    $region124: #{tpu_custom_call.1} parent=1 // pred_region
      %265 = dma.done [#allocation24], 9216
    $region125: #{tpu_custom_call.1} parent=1 // pred_fallthru
      _
    // Predicated region
    $region126: #{tpu_custom_call.1} parent=1 // pred_check
      _
    $region127: #{tpu_custom_call.1} parent=1 // pred_check_branch
      %267 = sbr.rel (0) target = $region129
    $region128: #{tpu_custom_call.1} parent=1 // pred_region
      %268 = dma.done [#allocation27], 48
    $region129: #{tpu_custom_call.1} parent=1 // pred_fallthru
      _
    %v270 = vld [vmem:[#allocation5] sm:$0xff]
    %v271 = vld [vmem:[#allocation5 + $0x8] sm:$0x3]
    %v272 = vld [vmem:[#allocation2] sm:$0xff]
    %v273 = vld [vmem:[#allocation2 + $0x8] sm:$0x3]
    %v274 = vld [vmem:[#allocation10] sm:$0xff]
    %v275 = vld [vmem:[#allocation10 + $0x8] sm:$0xff]
    %v276 = vld [vmem:[#allocation11] sm:$0x1]
    %v278 = vlaneseq
    %v279 = vshrl.u32 %v278, 7
    %v280 = vsub.s32 0, %v279
    %v281 = vrot.slane %v276, %v280
    %vm283 = vcmask 130048
    %v285 = vsel %vm283, %v272, 0
    %v288 = vsel %vm283, %v273, 0
    %290 = vmatprep.subr.mxu0 0.0
    %291 = vmatpush1.msra.mxu0 %v274
    %292 = vmatprep.subr.mxu0 0.0
    %293 = vmatpush1.msra.mxu0 %v275
    %294 = vmatprep.subr.mxu0 0.0
    %295 = vmatpush1.msra.mxu0 0.0
    %296 = vmatprep.subr.mxu0 0.0
    %297 = vmatpush1.msra.mxu0 0.0
    %298 = vmatprep.subr.mxu0 0.0
    %299 = vmatpush1.msra.mxu0 0.0
    %300 = vmatprep.subr.mxu0 0.0
    %301 = vmatpush1.msra.mxu0 0.0
    %302 = vmatprep.subr.mxu0 0.0
    %303 = vmatpush1.msra.mxu0 0.0
    %304 = vmatprep.subr.mxu0 0.0
    %305 = vmatpush1.msra.mxu0 0.0
    %306 = vmatprep.subr.mxu0 0.0
    %307 = vmatpush1.msra.mxu0 0.0
    %308 = vmatprep.subr.mxu0 0.0
    %309 = vmatpush1.msra.mxu0 0.0
    %310 = vmatprep.subr.mxu0 0.0
    %311 = vmatpush1.msra.mxu0 0.0
    %312 = vmatprep.subr.mxu0 0.0
    %313 = vmatpush1.msra.mxu0 0.0
    %314 = vmatprep.subr.mxu0 0.0
    %315 = vmatpush1.msra.mxu0 0.0
    %316 = vmatprep.subr.mxu0 0.0
    %317 = vmatpush1.msra.mxu0 0.0
    %318 = vmatprep.subr.mxu0 0.0
    %319 = vmatpush1.msra.mxu0 0.0
    %320 = vmatprep.subr.mxu0 0.0
    %321 = vmatpush1.msra.mxu0 0.0
    %322 = vmatprep.subr.mxu0 0.0
    %323 = vmatpush1.msra.mxu0 0.0
    %324 = vmatprep.subr.mxu0 0.0
    %325 = vmatpush1.msra.mxu0 0.0
    %326 = vmatprep.subr.mxu0 0.0
    %327 = vmatpush1.msra.mxu0 0.0
    %328 = vmatprep.subr.mxu0 0.0
    %329 = vmatpush1.msra.mxu0 0.0
    %330 = vmatprep.subr.mxu0 0.0
    %331 = vmatpush1.msra.mxu0 0.0
    %332 = vmatprep.subr.mxu0 0.0
    %333 = vmatpush1.msra.mxu0 0.0
    %334 = vmatprep.subr.mxu0 0.0
    %335 = vmatpush1.msra.mxu0 0.0
    %336 = vmatprep.subr.mxu0 0.0
    %337 = vmatpush1.msra.mxu0 0.0
    %338 = vmatprep.subr.mxu0 0.0
    %339 = vmatpush1.msra.mxu0 0.0
    %340 = vmatprep.subr.mxu0 0.0
    %341 = vmatpush1.msra.mxu0 0.0
    %342 = vmatprep.subr.mxu0 0.0
    %343 = vmatpush1.msra.mxu0 0.0
    %344 = vmatprep.subr.mxu0 0.0
    %345 = vmatpush1.msra.mxu0 0.0
    %346 = vmatprep.subr.mxu0 0.0
    %347 = vmatpush1.msra.mxu0 0.0
    %348 = vmatprep.subr.mxu0 0.0
    %349 = vmatpush1.msra.mxu0 0.0
    %350 = vmatprep.subr.mxu0 0.0
    %351 = vmatpush1.msra.mxu0 0.0
    %352 = vmatprep.subr.mxu0 0.0
    %353 = vmatpush1.msra.mxu0 0.0
    %354 = vmatprep.mubr.f32.mxu0 0.0
    %355 = vmatmul.mubr.f32.gmra.mrb[0].mxu0 %v285
    %v356 = vpop.f32.mrb[0].mxu0
    %v357 = vadd.f32 %v281, %v356
    %v358 = vpop.f32.mrb[0].mxu0
    %359 = vmatprep.mubr.f32.mxu0 0.0
    %360 = vmatmul.mubr.f32.gmra.mrb[0].mxu0 %v288
    %v361 = vpop.f32.mrb[0].mxu0
    %v362 = vadd.f32 %v281, %v361
    %v363 = vpop.f32.mrb[0].mxu0
    %364 = vdwg.mxu0
    %367 = vrot.lane.b32.xlu0 %v270, 31
    %v368 = vpop.permute.xlu0 %367
    %369 = vrot.lane.b32.xlu0 %v271, 31
    %v370 = vpop.permute.xlu0 %369
    %vm373 = vcmask 252928
    %v374 = vsel %vm373, %v357, %v368
    %v375 = vsel %vm373, %v362, %v370
    %v376 = vld [vmem:[#allocation7] sm:$0xff]
    %v377 = vld [vmem:[#allocation7 + $0x8] sm:$0xff]
    %v378 = vld [vmem:[#allocation7 + $0x10] sm:$0xff]
    %v379 = vld [vmem:[#allocation7 + $0x18] sm:$0xff]
    %v380 = vld [vmem:[#allocation7 + $0x20] sm:$0x3]
    %v381 = vld [vmem:[#allocation8] sm:$0xff]
    %v382 = vld [vmem:[#allocation8 + $0x8] sm:$0xff]
    %v383 = vld [vmem:[#allocation8 + $0x10] sm:$0xff]
    %v384 = vld [vmem:[#allocation8 + $0x18] sm:$0xff]
    %v385 = vld [vmem:[#allocation8 + $0x20] sm:$0x3]
    %v386 = vlaneseq
    %v387 = vand.u32 %v386, 127
    %388 = vset.pattern.permute.xlu0 0
    %389 = vperm.xlu0 %388, %v376
    %v390 = vpop.permute.xlu0 %389
    %391 = vset.pattern.permute.xlu0 0
    %392 = vperm.xlu0 %391, %v377
    %v393 = vpop.permute.xlu0 %392
    %394 = vset.pattern.permute.xlu0 0
    %395 = vperm.xlu0 %394, %v378
    %v396 = vpop.permute.xlu0 %395
    %397 = vset.pattern.permute.xlu0 0
    %398 = vperm.xlu0 %397, %v379
    %v399 = vpop.permute.xlu0 %398
    %400 = vset.pattern.permute.xlu0 0
    %401 = vperm.xlu0 %400, %v380
    %v402 = vpop.permute.xlu0 %401
    %vm403 = vcmp.eq.s32.totalorder %v387, %v390
    %vm404 = vcmp.eq.s32.totalorder %v387, %v393
    %vm405 = vcmp.eq.s32.totalorder %v387, %v396
    %vm406 = vcmp.eq.s32.totalorder %v387, %v399
    %vm407 = vcmp.eq.s32.totalorder %v387, %v402
    %v408 = vsel %vm403, 1, 0
    %v409 = vsel %vm404, 1, 0
    %v410 = vsel %vm405, 1, 0
    %v411 = vsel %vm406, 1, 0
    %v412 = vsel %vm407, 1, 0
    %v413 = vcvt.s32.f32 %v408
    %v414 = vcvt.s32.f32 %v409
    %v415 = vcvt.s32.f32 %v410
    %v416 = vcvt.s32.f32 %v411
    %v417 = vcvt.s32.f32 %v412
    %v418 = vpack.c.bf16 %v414, %v413
    %v419 = vpack.c.bf16 %v416, %v415
    %v420 = vpack.c.bf16 %v417, %v417
    %421 = vset.pattern.permute.xlu0 0
    %422 = vperm.xlu0 %421, %v381
    %v423 = vpop.permute.xlu0 %422
    %424 = vset.pattern.permute.xlu0 0
    %425 = vperm.xlu0 %424, %v382
    %v426 = vpop.permute.xlu0 %425
    %427 = vset.pattern.permute.xlu0 0
    %428 = vperm.xlu0 %427, %v383
    %v429 = vpop.permute.xlu0 %428
    %430 = vset.pattern.permute.xlu0 0
    %431 = vperm.xlu0 %430, %v384
    %v432 = vpop.permute.xlu0 %431
    %433 = vset.pattern.permute.xlu0 0
    %434 = vperm.xlu0 %433, %v385
    %v435 = vpop.permute.xlu0 %434
    %vm436 = vcmp.eq.s32.totalorder %v387, %v423
    %vm437 = vcmp.eq.s32.totalorder %v387, %v426
    %vm438 = vcmp.eq.s32.totalorder %v387, %v429
    %vm439 = vcmp.eq.s32.totalorder %v387, %v432
    %vm440 = vcmp.eq.s32.totalorder %v387, %v435
    %v441 = vsel %vm436, 1, 0
    %v442 = vsel %vm437, 1, 0
    %v443 = vsel %vm438, 1, 0
    %v444 = vsel %vm439, 1, 0
    %v445 = vsel %vm440, 1, 0
    %v446 = vcvt.s32.f32 %v441
    %v447 = vcvt.s32.f32 %v442
    %v448 = vcvt.s32.f32 %v443
    %v449 = vcvt.s32.f32 %v444
    %v450 = vcvt.s32.f32 %v445
    %v451 = vpack.c.bf16 %v447, %v446
    %v452 = vpack.c.bf16 %v449, %v448
    %v453 = vpack.c.bf16 %v450, %v450
    %v454 = vpack.c.bf16 %v271, %v270
    %vm455 = vcmask 80896
    %v457 = vsel %vm455, %v451, 0
    %v460 = vsel %vm455, %v452, 0
    %v463 = vsel %vm455, %v453, 0
    %vm465 = vcmask 1044480
    %v467 = vsel %vm465, %v454, 0
    %469 = vmatprep.subr.bf16.mxu0 0
    %470 = vmatpush1.bf16.msra.mxu0 %v467
    %471 = vmatprep.subr.bf16.mxu0 0
    %472 = vmatpush1.bf16.msra.mxu0 0
    %473 = vmatprep.subr.bf16.mxu0 0
    %474 = vmatpush1.bf16.msra.mxu0 0
    %475 = vmatprep.subr.bf16.mxu0 0
    %476 = vmatpush1.bf16.msra.mxu0 0
    %477 = vmatprep.subr.bf16.mxu0 0
    %478 = vmatpush1.bf16.msra.mxu0 0
    %479 = vmatprep.subr.bf16.mxu0 0
    %480 = vmatpush1.bf16.msra.mxu0 0
    %481 = vmatprep.subr.bf16.mxu0 0
    %482 = vmatpush1.bf16.msra.mxu0 0
    %483 = vmatprep.subr.bf16.mxu0 0
    %484 = vmatpush1.bf16.msra.mxu0 0
    %485 = vmatprep.subr.bf16.mxu0 0
    %486 = vmatpush1.bf16.msra.mxu0 0
    %487 = vmatprep.subr.bf16.mxu0 0
    %488 = vmatpush1.bf16.msra.mxu0 0
    %489 = vmatprep.subr.bf16.mxu0 0
    %490 = vmatpush1.bf16.msra.mxu0 0
    %491 = vmatprep.subr.bf16.mxu0 0
    %492 = vmatpush1.bf16.msra.mxu0 0
    %493 = vmatprep.subr.bf16.mxu0 0
    %494 = vmatpush1.bf16.msra.mxu0 0
    %495 = vmatprep.subr.bf16.mxu0 0
    %496 = vmatpush1.bf16.msra.mxu0 0
    %497 = vmatprep.subr.bf16.mxu0 0
    %498 = vmatpush1.bf16.msra.mxu0 0
    %499 = vmatprep.subr.bf16.mxu0 0
    %500 = vmatpush1.bf16.msra.mxu0 0
    %501 = vmatprep.mubr.bf16.mxu0 0
    %502 = vmatmul.mubr.bf16.gmra.mrb[0].mxu0 %v457
    %v503 = vpop.f32.mrb[0].mxu0
    %v504 = vadd.f32 0.0, %v503
    %v505 = vpop.f32.mrb[0].mxu0
    %v506 = vpop.f32.mrb[0].mxu0
    %v507 = vadd.f32 0.0, %v506
    %v508 = vpop.f32.mrb[0].mxu0
    %509 = vmatprep.mubr.bf16.mxu0 0
    %510 = vmatmul.mubr.bf16.gmra.mrb[0].mxu0 %v460
    %v511 = vpop.f32.mrb[0].mxu0
    %v512 = vadd.f32 0.0, %v511
    %v513 = vpop.f32.mrb[0].mxu0
    %v514 = vpop.f32.mrb[0].mxu0
    %v515 = vadd.f32 0.0, %v514
    %v516 = vpop.f32.mrb[0].mxu0
    %517 = vmatprep.mubr.bf16.mxu0 0
    %518 = vmatmul.mubr.bf16.gmra.mrb[0].mxu0 %v463
    %v519 = vpop.f32.mrb[0].mxu0
    %v520 = vadd.f32 0.0, %v519
    %v521 = vpop.f32.mrb[0].mxu0
    %v522 = vpop.f32.mrb[0].mxu0
    %v523 = vpop.f32.mrb[0].mxu0
    %524 = vdwg.mxu0
    %v525 = vpack.c.bf16 %v375, %v374
    %v527 = vsel %vm455, %v418, 0
    %v530 = vsel %vm455, %v419, 0
    %v533 = vsel %vm455, %v420, 0
    %v536 = vsel %vm465, %v525, 0
    %538 = vmatprep.subr.bf16.mxu0 0
    %539 = vmatpush1.bf16.msra.mxu0 %v536
    %540 = vmatprep.subr.bf16.mxu0 0
    %541 = vmatpush1.bf16.msra.mxu0 0
    %542 = vmatprep.subr.bf16.mxu0 0
    %543 = vmatpush1.bf16.msra.mxu0 0
    %544 = vmatprep.subr.bf16.mxu0 0
    %545 = vmatpush1.bf16.msra.mxu0 0
    %546 = vmatprep.subr.bf16.mxu0 0
    %547 = vmatpush1.bf16.msra.mxu0 0
    %548 = vmatprep.subr.bf16.mxu0 0
    %549 = vmatpush1.bf16.msra.mxu0 0
    %550 = vmatprep.subr.bf16.mxu0 0
    %551 = vmatpush1.bf16.msra.mxu0 0
    %552 = vmatprep.subr.bf16.mxu0 0
    %553 = vmatpush1.bf16.msra.mxu0 0
    %554 = vmatprep.subr.bf16.mxu0 0
    %555 = vmatpush1.bf16.msra.mxu0 0
    %556 = vmatprep.subr.bf16.mxu0 0
    %557 = vmatpush1.bf16.msra.mxu0 0
    %558 = vmatprep.subr.bf16.mxu0 0
    %559 = vmatpush1.bf16.msra.mxu0 0
    %560 = vmatprep.subr.bf16.mxu0 0
    %561 = vmatpush1.bf16.msra.mxu0 0
    %562 = vmatprep.subr.bf16.mxu0 0
    %563 = vmatpush1.bf16.msra.mxu0 0
    %564 = vmatprep.subr.bf16.mxu0 0
    %565 = vmatpush1.bf16.msra.mxu0 0
    %566 = vmatprep.subr.bf16.mxu0 0
    %567 = vmatpush1.bf16.msra.mxu0 0
    %568 = vmatprep.subr.bf16.mxu0 0
    %569 = vmatpush1.bf16.msra.mxu0 0
    %570 = vmatprep.mubr.bf16.mxu0 0
    %571 = vmatmul.mubr.bf16.gmra.mrb[0].mxu0 %v527
    %v572 = vpop.f32.mrb[0].mxu0
    %v573 = vadd.f32 0.0, %v572
    %v574 = vpop.f32.mrb[0].mxu0
    %v575 = vpop.f32.mrb[0].mxu0
    %v576 = vadd.f32 0.0, %v575
    %v577 = vpop.f32.mrb[0].mxu0
    %578 = vmatprep.mubr.bf16.mxu0 0
    %579 = vmatmul.mubr.bf16.gmra.mrb[0].mxu0 %v530
    %v580 = vpop.f32.mrb[0].mxu0
    %v581 = vadd.f32 0.0, %v580
    %v582 = vpop.f32.mrb[0].mxu0
    %v583 = vpop.f32.mrb[0].mxu0
    %v584 = vadd.f32 0.0, %v583
    %v585 = vpop.f32.mrb[0].mxu0
    %586 = vmatprep.mubr.bf16.mxu0 0
    %587 = vmatmul.mubr.bf16.gmra.mrb[0].mxu0 %v533
    %v588 = vpop.f32.mrb[0].mxu0
    %v589 = vadd.f32 0.0, %v588
    %v590 = vpop.f32.mrb[0].mxu0
    %v591 = vpop.f32.mrb[0].mxu0
    %v592 = vpop.f32.mrb[0].mxu0
    %593 = vdwg.mxu0
    %594 = vmatprep.subr.bf16.mxu0 0
    %595 = vmatpush1.bf16.msra.mxu0 %v536
    %596 = vmatprep.subr.bf16.mxu0 0
    %597 = vmatpush1.bf16.msra.mxu0 0
    %598 = vmatprep.subr.bf16.mxu0 0
    %599 = vmatpush1.bf16.msra.mxu0 0
    %600 = vmatprep.subr.bf16.mxu0 0
    %601 = vmatpush1.bf16.msra.mxu0 0
    %602 = vmatprep.subr.bf16.mxu0 0
    %603 = vmatpush1.bf16.msra.mxu0 0
    %604 = vmatprep.subr.bf16.mxu0 0
    %605 = vmatpush1.bf16.msra.mxu0 0
    %606 = vmatprep.subr.bf16.mxu0 0
    %607 = vmatpush1.bf16.msra.mxu0 0
    %608 = vmatprep.subr.bf16.mxu0 0
    %609 = vmatpush1.bf16.msra.mxu0 0
    %610 = vmatprep.subr.bf16.mxu0 0
    %611 = vmatpush1.bf16.msra.mxu0 0
    %612 = vmatprep.subr.bf16.mxu0 0
    %613 = vmatpush1.bf16.msra.mxu0 0
    %614 = vmatprep.subr.bf16.mxu0 0
    %615 = vmatpush1.bf16.msra.mxu0 0
    %616 = vmatprep.subr.bf16.mxu0 0
    %617 = vmatpush1.bf16.msra.mxu0 0
    %618 = vmatprep.subr.bf16.mxu0 0
    %619 = vmatpush1.bf16.msra.mxu0 0
    %620 = vmatprep.subr.bf16.mxu0 0
    %621 = vmatpush1.bf16.msra.mxu0 0
    %622 = vmatprep.subr.bf16.mxu0 0
    %623 = vmatpush1.bf16.msra.mxu0 0
    %624 = vmatprep.subr.bf16.mxu0 0
    %625 = vmatpush1.bf16.msra.mxu0 0
    %626 = vmatprep.mubr.bf16.mxu0 0
    %627 = vmatmul.mubr.bf16.gmra.mrb[0].mxu0 %v457
    %v628 = vpop.f32.mrb[0].mxu0
    %v629 = vadd.f32 0.0, %v628
    %v630 = vpop.f32.mrb[0].mxu0
    %v631 = vpop.f32.mrb[0].mxu0
    %v632 = vadd.f32 0.0, %v631
    %v633 = vpop.f32.mrb[0].mxu0
    %634 = vmatprep.mubr.bf16.mxu0 0
    %635 = vmatmul.mubr.bf16.gmra.mrb[0].mxu0 %v460
    %v636 = vpop.f32.mrb[0].mxu0
    %v637 = vadd.f32 0.0, %v636
    %v638 = vpop.f32.mrb[0].mxu0
    %v639 = vpop.f32.mrb[0].mxu0
    %v640 = vadd.f32 0.0, %v639
    %v641 = vpop.f32.mrb[0].mxu0
    %642 = vmatprep.mubr.bf16.mxu0 0
    %643 = vmatmul.mubr.bf16.gmra.mrb[0].mxu0 %v463
    %v644 = vpop.f32.mrb[0].mxu0
    %v645 = vadd.f32 0.0, %v644
    %v646 = vpop.f32.mrb[0].mxu0
    %v647 = vpop.f32.mrb[0].mxu0
    %v648 = vpop.f32.mrb[0].mxu0
    %649 = vdwg.mxu0
    %v650 = vld [vmem:[#allocation13] sm:$0xff]
    %v651 = vld [vmem:[#allocation13 + $0x8] sm:$0xff]
    %v652 = vld [vmem:[#allocation13 + $0x10] sm:$0xff]
    %v653 = vld [vmem:[#allocation13 + $0x18] sm:$0xff]
    %v654 = vld [vmem:[#allocation13 + $0x20] sm:$0xff]
    %v655 = vld [vmem:[#allocation13 + $0x28] sm:$0xff]
    %v656 = vld [vmem:[#allocation13 + $0x30] sm:$0xff]
    %v657 = vld [vmem:[#allocation13 + $0x38] sm:$0xff]
    %v658 = vld [vmem:[#allocation14] sm:$0xff]
    %v659 = vld [vmem:[#allocation14 + $0x8] sm:$0xff]
    %v660 = vld [vmem:[#allocation14 + $0x10] sm:$0xff]
    %v661 = vld [vmem:[#allocation14 + $0x18] sm:$0xff]
    %v662 = vld [vmem:[#allocation14 + $0x20] sm:$0xff]
    %v663 = vld [vmem:[#allocation14 + $0x28] sm:$0xff]
    %v664 = vld [vmem:[#allocation14 + $0x30] sm:$0xff]
    %v665 = vld [vmem:[#allocation14 + $0x38] sm:$0xff]
    %vm666 = vcmask 261120
    %v668 = vsel %vm666, %v629, 0
    %v671 = vsel %vm666, %v632, 0
    %v674 = vsel %vm666, %v637, 0
    %v677 = vsel %vm666, %v640, 0
    %v680 = vsel %vm666, %v645, 0
    %682 = vmatprep.subr.mxu0 %v659
    %683 = vmatpush1.msra.mxu0 %v658
    %684 = vmatprep.subr.mxu0 %v661
    %685 = vmatpush1.msra.mxu0 %v660
    %686 = vmatprep.subr.mxu0 %v663
    %687 = vmatpush1.msra.mxu0 %v662
    %688 = vmatprep.subr.mxu0 %v665
    %689 = vmatpush1.msra.mxu0 %v664
    %690 = vmatprep.subr.mxu0 0.0
    %691 = vmatpush1.msra.mxu0 0.0
    %692 = vmatprep.subr.mxu0 0.0
    %693 = vmatpush1.msra.mxu0 0.0
    %694 = vmatprep.subr.mxu0 0.0
    %695 = vmatpush1.msra.mxu0 0.0
    %696 = vmatprep.subr.mxu0 0.0
    %697 = vmatpush1.msra.mxu0 0.0
    %698 = vmatprep.subr.mxu0 0.0
    %699 = vmatpush1.msra.mxu0 0.0
    %700 = vmatprep.subr.mxu0 0.0
    %701 = vmatpush1.msra.mxu0 0.0
    %702 = vmatprep.subr.mxu0 0.0
    %703 = vmatpush1.msra.mxu0 0.0
    %704 = vmatprep.subr.mxu0 0.0
    %705 = vmatpush1.msra.mxu0 0.0
    %706 = vmatprep.subr.mxu0 0.0
    %707 = vmatpush1.msra.mxu0 0.0
    %708 = vmatprep.subr.mxu0 0.0
    %709 = vmatpush1.msra.mxu0 0.0
    %710 = vmatprep.subr.mxu0 0.0
    %711 = vmatpush1.msra.mxu0 0.0
    %712 = vmatprep.subr.mxu0 0.0
    %713 = vmatpush1.msra.mxu0 0.0
    %714 = vmatprep.subr.mxu0 0.0
    %715 = vmatpush1.msra.mxu0 0.0
    %716 = vmatprep.subr.mxu0 0.0
    %717 = vmatpush1.msra.mxu0 0.0
    %718 = vmatprep.subr.mxu0 0.0
    %719 = vmatpush1.msra.mxu0 0.0
    %720 = vmatprep.subr.mxu0 0.0
    %721 = vmatpush1.msra.mxu0 0.0
    %722 = vmatprep.subr.mxu0 0.0
    %723 = vmatpush1.msra.mxu0 0.0
    %724 = vmatprep.subr.mxu0 0.0
    %725 = vmatpush1.msra.mxu0 0.0
    %726 = vmatprep.subr.mxu0 0.0
    %727 = vmatpush1.msra.mxu0 0.0
    %728 = vmatprep.subr.mxu0 0.0
    %729 = vmatpush1.msra.mxu0 0.0
    %730 = vmatprep.subr.mxu0 0.0
    %731 = vmatpush1.msra.mxu0 0.0
    %732 = vmatprep.subr.mxu0 0.0
    %733 = vmatpush1.msra.mxu0 0.0
    %734 = vmatprep.subr.mxu0 0.0
    %735 = vmatpush1.msra.mxu0 0.0
    %736 = vmatprep.subr.mxu0 0.0
    %737 = vmatpush1.msra.mxu0 0.0
    %738 = vmatprep.subr.mxu0 0.0
    %739 = vmatpush1.msra.mxu0 0.0
    %740 = vmatprep.subr.mxu0 0.0
    %741 = vmatpush1.msra.mxu0 0.0
    %742 = vmatprep.subr.mxu0 0.0
    %743 = vmatpush1.msra.mxu0 0.0
    %744 = vmatprep.subr.mxu0 0.0
    %745 = vmatpush1.msra.mxu0 0.0
    %746 = vmatprep.mubr.f32.mxu0 0.0
    %747 = vmatmul.mubr.f32.gmra.mrb[0].mxu0 %v668
    %v748 = vpop.f32.mrb[0].mxu0
    %v749 = vadd.f32 0.0, %v748
    %v750 = vpop.f32.mrb[0].mxu0
    %v751 = vadd.f32 0.0, %v750
    %752 = vmatprep.mubr.f32.mxu0 0.0
    %753 = vmatmul.mubr.f32.gmra.mrb[0].mxu0 %v671
    %v754 = vpop.f32.mrb[0].mxu0
    %v755 = vadd.f32 0.0, %v754
    %v756 = vpop.f32.mrb[0].mxu0
    %v757 = vadd.f32 0.0, %v756
    %758 = vmatprep.mubr.f32.mxu0 0.0
    %759 = vmatmul.mubr.f32.gmra.mrb[0].mxu0 %v674
    %v760 = vpop.f32.mrb[0].mxu0
    %v761 = vadd.f32 0.0, %v760
    %v762 = vpop.f32.mrb[0].mxu0
    %v763 = vadd.f32 0.0, %v762
    %764 = vmatprep.mubr.f32.mxu0 0.0
    %765 = vmatmul.mubr.f32.gmra.mrb[0].mxu0 %v677
    %v766 = vpop.f32.mrb[0].mxu0
    %v767 = vadd.f32 0.0, %v766
    %v768 = vpop.f32.mrb[0].mxu0
    %v769 = vadd.f32 0.0, %v768
    %770 = vmatprep.mubr.f32.mxu0 0.0
    %771 = vmatmul.mubr.f32.gmra.mrb[0].mxu0 %v680
    %v772 = vpop.f32.mrb[0].mxu0
    %v773 = vadd.f32 0.0, %v772
    %v774 = vpop.f32.mrb[0].mxu0
    %v775 = vadd.f32 0.0, %v774
    %776 = vdwg.mxu0
    %v778 = vsel %vm666, %v573, 0
    %v781 = vsel %vm666, %v576, 0
    %v784 = vsel %vm666, %v581, 0
    %v787 = vsel %vm666, %v584, 0
    %v790 = vsel %vm666, %v589, 0
    %792 = vmatprep.subr.mxu0 %v651
    %793 = vmatpush1.msra.mxu0 %v650
    %794 = vmatprep.subr.mxu0 %v653
    %795 = vmatpush1.msra.mxu0 %v652
    %796 = vmatprep.subr.mxu0 %v655
    %797 = vmatpush1.msra.mxu0 %v654
    %798 = vmatprep.subr.mxu0 %v657
    %799 = vmatpush1.msra.mxu0 %v656
    %800 = vmatprep.subr.mxu0 0.0
    %801 = vmatpush1.msra.mxu0 0.0
    %802 = vmatprep.subr.mxu0 0.0
    %803 = vmatpush1.msra.mxu0 0.0
    %804 = vmatprep.subr.mxu0 0.0
    %805 = vmatpush1.msra.mxu0 0.0
    %806 = vmatprep.subr.mxu0 0.0
    %807 = vmatpush1.msra.mxu0 0.0
    %808 = vmatprep.subr.mxu0 0.0
    %809 = vmatpush1.msra.mxu0 0.0
    %810 = vmatprep.subr.mxu0 0.0
    %811 = vmatpush1.msra.mxu0 0.0
    %812 = vmatprep.subr.mxu0 0.0
    %813 = vmatpush1.msra.mxu0 0.0
    %814 = vmatprep.subr.mxu0 0.0
    %815 = vmatpush1.msra.mxu0 0.0
    %816 = vmatprep.subr.mxu0 0.0
    %817 = vmatpush1.msra.mxu0 0.0
    %818 = vmatprep.subr.mxu0 0.0
    %819 = vmatpush1.msra.mxu0 0.0
    %820 = vmatprep.subr.mxu0 0.0
    %821 = vmatpush1.msra.mxu0 0.0
    %822 = vmatprep.subr.mxu0 0.0
    %823 = vmatpush1.msra.mxu0 0.0
    %824 = vmatprep.subr.mxu0 0.0
    %825 = vmatpush1.msra.mxu0 0.0
    %826 = vmatprep.subr.mxu0 0.0
    %827 = vmatpush1.msra.mxu0 0.0
    %828 = vmatprep.subr.mxu0 0.0
    %829 = vmatpush1.msra.mxu0 0.0
    %830 = vmatprep.subr.mxu0 0.0
    %831 = vmatpush1.msra.mxu0 0.0
    %832 = vmatprep.subr.mxu0 0.0
    %833 = vmatpush1.msra.mxu0 0.0
    %834 = vmatprep.subr.mxu0 0.0
    %835 = vmatpush1.msra.mxu0 0.0
    %836 = vmatprep.subr.mxu0 0.0
    %837 = vmatpush1.msra.mxu0 0.0
    %838 = vmatprep.subr.mxu0 0.0
    %839 = vmatpush1.msra.mxu0 0.0
    %840 = vmatprep.subr.mxu0 0.0
    %841 = vmatpush1.msra.mxu0 0.0
    %842 = vmatprep.subr.mxu0 0.0
    %843 = vmatpush1.msra.mxu0 0.0
    %844 = vmatprep.subr.mxu0 0.0
    %845 = vmatpush1.msra.mxu0 0.0
    %846 = vmatprep.subr.mxu0 0.0
    %847 = vmatpush1.msra.mxu0 0.0
    %848 = vmatprep.subr.mxu0 0.0
    %849 = vmatpush1.msra.mxu0 0.0
    %850 = vmatprep.subr.mxu0 0.0
    %851 = vmatpush1.msra.mxu0 0.0
    %852 = vmatprep.subr.mxu0 0.0
    %853 = vmatpush1.msra.mxu0 0.0
    %854 = vmatprep.subr.mxu0 0.0
    %855 = vmatpush1.msra.mxu0 0.0
    %856 = vmatprep.mubr.f32.mxu0 0.0
    %857 = vmatmul.mubr.f32.gmra.mrb[0].mxu0 %v778
    %v858 = vpop.f32.mrb[0].mxu0
    %v859 = vadd.f32 %v749, %v858
    %v860 = vpop.f32.mrb[0].mxu0
    %v861 = vadd.f32 %v751, %v860
    %862 = vmatprep.mubr.f32.mxu0 0.0
    %863 = vmatmul.mubr.f32.gmra.mrb[0].mxu0 %v781
    %v864 = vpop.f32.mrb[0].mxu0
    %v865 = vadd.f32 %v755, %v864
    %v866 = vpop.f32.mrb[0].mxu0
    %v867 = vadd.f32 %v757, %v866
    %868 = vmatprep.mubr.f32.mxu0 0.0
    %869 = vmatmul.mubr.f32.gmra.mrb[0].mxu0 %v784
    %v870 = vpop.f32.mrb[0].mxu0
    %v871 = vadd.f32 %v761, %v870
    %v872 = vpop.f32.mrb[0].mxu0
    %v873 = vadd.f32 %v763, %v872
    %874 = vmatprep.mubr.f32.mxu0 0.0
    %875 = vmatmul.mubr.f32.gmra.mrb[0].mxu0 %v787
    %v876 = vpop.f32.mrb[0].mxu0
    %v877 = vadd.f32 %v767, %v876
    %v878 = vpop.f32.mrb[0].mxu0
    %v879 = vadd.f32 %v769, %v878
    %880 = vmatprep.mubr.f32.mxu0 0.0
    %881 = vmatmul.mubr.f32.gmra.mrb[0].mxu0 %v790
    %v882 = vpop.f32.mrb[0].mxu0
    %v883 = vadd.f32 %v773, %v882
    %v884 = vpop.f32.mrb[0].mxu0
    %v885 = vadd.f32 %v775, %v884
    %886 = vdwg.mxu0
    %v887 = vld [vmem:[#allocation16] sm:$0x3]
    %v889 = vlaneseq
    %v890 = vshrl.u32 %v889, 7
    %v891 = vsub.s32 0, %v890
    %v892 = vrot.slane %v887, %v891
    %v893 = vlaneseq
    %v894 = vshrl.u32 %v893, 7
    %v895 = vsub.s32 1, %v894
    %v896 = vrot.slane %v887, %v895
    %v899 = vadd.f32 %v859, %v892
    %v900 = vadd.f32 %v861, %v896
    %v901 = vadd.f32 %v865, %v892
    %v902 = vadd.f32 %v867, %v896
    %v903 = vadd.f32 %v871, %v892
    %v904 = vadd.f32 %v873, %v896
    %v905 = vadd.f32 %v877, %v892
    %v906 = vadd.f32 %v879, %v896
    %v907 = vadd.f32 %v883, %v892
    %v908 = vadd.f32 %v885, %v896
    %v909 = vmax.f32 %v899, 0.0
    %v910 = vmax.f32 %v900, 0.0
    %v911 = vmax.f32 %v901, 0.0
    %v912 = vmax.f32 %v902, 0.0
    %v913 = vmax.f32 %v903, 0.0
    %v914 = vmax.f32 %v904, 0.0
    %v915 = vmax.f32 %v905, 0.0
    %v916 = vmax.f32 %v906, 0.0
    %v917 = vmax.f32 %v907, 0.0
    %v918 = vmax.f32 %v908, 0.0
    %v919 = vld [vmem:[#allocation17] sm:$0xff]
    %v920 = vld [vmem:[#allocation17 + $0x8] sm:$0xff]
    %v921 = vld [vmem:[#allocation17 + $0x10] sm:$0xff]
    %v922 = vld [vmem:[#allocation17 + $0x18] sm:$0xff]
    %v923 = vld [vmem:[#allocation17 + $0x20] sm:$0xff]
    %v924 = vld [vmem:[#allocation17 + $0x28] sm:$0xff]
    %v925 = vld [vmem:[#allocation17 + $0x30] sm:$0xff]
    %v926 = vld [vmem:[#allocation17 + $0x38] sm:$0xff]
    %v927 = vld [vmem:[#allocation17 + $0x40] sm:$0xff]
    %v928 = vld [vmem:[#allocation17 + $0x48] sm:$0xff]
    %v929 = vld [vmem:[#allocation17 + $0x50] sm:$0xff]
    %v930 = vld [vmem:[#allocation17 + $0x58] sm:$0xff]
    %v931 = vld [vmem:[#allocation17 + $0x60] sm:$0xff]
    %v932 = vld [vmem:[#allocation17 + $0x68] sm:$0xff]
    %v933 = vld [vmem:[#allocation17 + $0x70] sm:$0xff]
    %v934 = vld [vmem:[#allocation17 + $0x78] sm:$0xff]
    %v935 = vld [vmem:[#allocation17 + $0x80] sm:$0xff]
    %v936 = vld [vmem:[#allocation17 + $0x88] sm:$0xff]
    %v937 = vld [vmem:[#allocation17 + $0x90] sm:$0xff]
    %v938 = vld [vmem:[#allocation17 + $0x98] sm:$0xff]
    %v939 = vld [vmem:[#allocation17 + $0xa0] sm:$0xff]
    %v940 = vld [vmem:[#allocation17 + $0xa8] sm:$0xff]
    %v941 = vld [vmem:[#allocation17 + $0xb0] sm:$0xff]
    %v942 = vld [vmem:[#allocation17 + $0xb8] sm:$0xff]
    %v943 = vld [vmem:[#allocation19] sm:$0x1]
    %v945 = vlaneseq
    %v946 = vshrl.u32 %v945, 7
    %v947 = vsub.s32 0, %v946
    %v948 = vrot.slane %v943, %v947
    %vm950 = vcmask 523264
    %v952 = vsel %vm950, %v910, 0
    %v955 = vsel %vm950, %v912, 0
    %v958 = vsel %vm950, %v914, 0
    %v961 = vsel %vm950, %v916, 0
    %v964 = vsel %vm950, %v918, 0
    %966 = vmatprep.subr.mxu0 0.0
    %967 = vmatpush1.msra.mxu0 %v919
    %968 = vmatprep.subr.mxu0 0.0
    %969 = vmatpush1.msra.mxu0 %v920
    %970 = vmatprep.subr.mxu0 0.0
    %971 = vmatpush1.msra.mxu0 %v921
    %972 = vmatprep.subr.mxu0 0.0
    %973 = vmatpush1.msra.mxu0 %v922
    %974 = vmatprep.subr.mxu0 0.0
    %975 = vmatpush1.msra.mxu0 %v923
    %976 = vmatprep.subr.mxu0 0.0
    %977 = vmatpush1.msra.mxu0 %v924
    %978 = vmatprep.subr.mxu0 0.0
    %979 = vmatpush1.msra.mxu0 %v925
    %980 = vmatprep.subr.mxu0 0.0
    %981 = vmatpush1.msra.mxu0 %v926
    %982 = vmatprep.subr.mxu0 0.0
    %983 = vmatpush1.msra.mxu0 %v927
    %984 = vmatprep.subr.mxu0 0.0
    %985 = vmatpush1.msra.mxu0 %v928
    %986 = vmatprep.subr.mxu0 0.0
    %987 = vmatpush1.msra.mxu0 %v929
    %988 = vmatprep.subr.mxu0 0.0
    %989 = vmatpush1.msra.mxu0 %v930
    %990 = vmatprep.subr.mxu0 0.0
    %991 = vmatpush1.msra.mxu0 %v931
    %992 = vmatprep.subr.mxu0 0.0
    %993 = vmatpush1.msra.mxu0 %v932
    %994 = vmatprep.subr.mxu0 0.0
    %995 = vmatpush1.msra.mxu0 %v933
    %996 = vmatprep.subr.mxu0 0.0
    %997 = vmatpush1.msra.mxu0 %v934
    %998 = vmatprep.subr.mxu0 0.0
    %999 = vmatpush1.msra.mxu0 %v935
    %1000 = vmatprep.subr.mxu0 0.0
    %1001 = vmatpush1.msra.mxu0 %v936
    %1002 = vmatprep.subr.mxu0 0.0
    %1003 = vmatpush1.msra.mxu0 %v937
    %1004 = vmatprep.subr.mxu0 0.0
    %1005 = vmatpush1.msra.mxu0 %v938
    %1006 = vmatprep.subr.mxu0 0.0
    %1007 = vmatpush1.msra.mxu0 %v939
    %1008 = vmatprep.subr.mxu0 0.0
    %1009 = vmatpush1.msra.mxu0 %v940
    %1010 = vmatprep.subr.mxu0 0.0
    %1011 = vmatpush1.msra.mxu0 %v941
    %1012 = vmatprep.subr.mxu0 0.0
    %1013 = vmatpush1.msra.mxu0 %v942
    %1014 = vmatprep.subr.mxu0 0.0
    %1015 = vmatpush1.msra.mxu0 0.0
    %1016 = vmatprep.subr.mxu0 0.0
    %1017 = vmatpush1.msra.mxu0 0.0
    %1018 = vmatprep.subr.mxu0 0.0
    %1019 = vmatpush1.msra.mxu0 0.0
    %1020 = vmatprep.subr.mxu0 0.0
    %1021 = vmatpush1.msra.mxu0 0.0
    %1022 = vmatprep.subr.mxu0 0.0
    %1023 = vmatpush1.msra.mxu0 0.0
    %1024 = vmatprep.subr.mxu0 0.0
    %1025 = vmatpush1.msra.mxu0 0.0
    %1026 = vmatprep.subr.mxu0 0.0
    %1027 = vmatpush1.msra.mxu0 0.0
    %1028 = vmatprep.subr.mxu0 0.0
    %1029 = vmatpush1.msra.mxu0 0.0
    %1030 = vmatprep.mubr.f32.mxu0 %v952
    %1031 = vmatmul.mubr.f32.gmra.mrb[0].mxu0 %v909
    %v1032 = vpop.f32.mrb[0].mxu0
    %v1033 = vadd.f32 %v948, %v1032
    %v1034 = vpop.f32.mrb[0].mxu0
    %1035 = vmatprep.mubr.f32.mxu0 %v955
    %1036 = vmatmul.mubr.f32.gmra.mrb[0].mxu0 %v911
    %v1037 = vpop.f32.mrb[0].mxu0
    %v1038 = vadd.f32 %v948, %v1037
    %v1039 = vpop.f32.mrb[0].mxu0
    %1040 = vmatprep.mubr.f32.mxu0 %v958
    %1041 = vmatmul.mubr.f32.gmra.mrb[0].mxu0 %v913
    %v1042 = vpop.f32.mrb[0].mxu0
    %v1043 = vadd.f32 %v948, %v1042
    %v1044 = vpop.f32.mrb[0].mxu0
    %1045 = vmatprep.mubr.f32.mxu0 %v961
    %1046 = vmatmul.mubr.f32.gmra.mrb[0].mxu0 %v915
    %v1047 = vpop.f32.mrb[0].mxu0
    %v1048 = vadd.f32 %v948, %v1047
    %v1049 = vpop.f32.mrb[0].mxu0
    %1050 = vmatprep.mubr.f32.mxu0 %v964
    %1051 = vmatmul.mubr.f32.gmra.mrb[0].mxu0 %v917
    %v1052 = vpop.f32.mrb[0].mxu0
    %v1053 = vadd.f32 %v948, %v1052
    %v1054 = vpop.f32.mrb[0].mxu0
    %1055 = vdwg.mxu0
    %1057 = vset.pattern.permute.xlu0 0
    %1058 = vperm.xlu0 %1057, %v1033
    %v1059 = vpop.permute.xlu0 %1058
    %1062 = vset.pattern.permute.xlu0 0
    %1063 = vperm.xlu0 %1062, %v1038
    %v1064 = vpop.permute.xlu0 %1063
    %1067 = vset.pattern.permute.xlu0 0
    %1068 = vperm.xlu0 %1067, %v1043
    %v1069 = vpop.permute.xlu0 %1068
    %1072 = vset.pattern.permute.xlu0 0
    %1073 = vperm.xlu0 %1072, %v1048
    %v1074 = vpop.permute.xlu0 %1073
    %1077 = vset.pattern.permute.xlu0 0
    %1078 = vperm.xlu0 %1077, %v1053
    %v1079 = vpop.permute.xlu0 %1078
    %v1081 = vsel %vm403, %v1059, -1e+30
    %v1082 = vsel %vm404, %v1064, -1e+30
    %v1083 = vsel %vm405, %v1069, -1e+30
    %v1084 = vsel %vm406, %v1074, -1e+30
    %v1085 = vsel %vm407, %v1079, -1e+30
    %v1086 = vsel %vm455, %v1081, -inf
    %v1087 = vsel %vm455, %v1082, -inf
    %v1088 = vsel %vm455, %v1083, -inf
    %v1089 = vsel %vm455, %v1084, -inf
    %vm1090 = vcmask 74752
    %v1091 = vsel %vm1090, %v1085, -inf
    %v1092 = vmax.f32 %v1086, %v1091
    %v1093 = vmax.f32 %v1092, %v1087
    %v1094 = vmax.f32 %v1088, %v1089
    %v1095 = vmax.f32 %v1093, %v1094
    %v1096 = vrot.slane %v1095, 4
    %v1097 = vmax.f32 %v1095, %v1096
    %v1098 = vrot.slane %v1097, 2
    %v1099 = vmax.f32 %v1097, %v1098
    %v1100 = vrot.slane %v1099, 1
    %v1101 = vmax.f32 %v1099, %v1100
    %1102 = vset.pattern.permute.xlu0 1
    %1103 = vperm.xlu0 %1102, %v1033
    %v1104 = vpop.permute.xlu0 %1103
    %1106 = vset.pattern.permute.xlu0 1
    %1107 = vperm.xlu0 %1106, %v1038
    %v1108 = vpop.permute.xlu0 %1107
    %1110 = vset.pattern.permute.xlu0 1
    %1111 = vperm.xlu0 %1110, %v1043
    %v1112 = vpop.permute.xlu0 %1111
    %1114 = vset.pattern.permute.xlu0 1
    %1115 = vperm.xlu0 %1114, %v1048
    %v1116 = vpop.permute.xlu0 %1115
    %1118 = vset.pattern.permute.xlu0 1
    %1119 = vperm.xlu0 %1118, %v1053
    %v1120 = vpop.permute.xlu0 %1119
    %v1122 = vsel %vm403, %v1104, -1e+30
    %v1123 = vsel %vm404, %v1108, -1e+30
    %v1124 = vsel %vm405, %v1112, -1e+30
    %v1125 = vsel %vm406, %v1116, -1e+30
    %v1126 = vsel %vm407, %v1120, -1e+30
    %v1127 = vsel %vm455, %v1122, -inf
    %v1128 = vsel %vm455, %v1123, -inf
    %v1129 = vsel %vm455, %v1124, -inf
    %v1130 = vsel %vm455, %v1125, -inf
    %v1131 = vsel %vm1090, %v1126, -inf
    %v1132 = vmax.f32 %v1127, %v1131
    %v1133 = vmax.f32 %v1132, %v1128
    %v1134 = vmax.f32 %v1129, %v1130
    %v1135 = vmax.f32 %v1133, %v1134
    %v1136 = vrot.slane %v1135, 4
    %v1137 = vmax.f32 %v1135, %v1136
    %v1138 = vrot.slane %v1137, 2
    %v1139 = vmax.f32 %v1137, %v1138
    %v1140 = vrot.slane %v1139, 1
    %v1141 = vmax.f32 %v1139, %v1140
    %1142 = vset.pattern.permute.xlu0 2
    %1143 = vperm.xlu0 %1142, %v1033
    %v1144 = vpop.permute.xlu0 %1143
    %1146 = vset.pattern.permute.xlu0 2
    %1147 = vperm.xlu0 %1146, %v1038
    %v1148 = vpop.permute.xlu0 %1147
    %1150 = vset.pattern.permute.xlu0 2
    %1151 = vperm.xlu0 %1150, %v1043
    %v1152 = vpop.permute.xlu0 %1151
    %1154 = vset.pattern.permute.xlu0 2
    %1155 = vperm.xlu0 %1154, %v1048
    %v1156 = vpop.permute.xlu0 %1155
    %1158 = vset.pattern.permute.xlu0 2
    %1159 = vperm.xlu0 %1158, %v1053
    %v1160 = vpop.permute.xlu0 %1159
    %v1162 = vsel %vm403, %v1144, -1e+30
    %v1163 = vsel %vm404, %v1148, -1e+30
    %v1164 = vsel %vm405, %v1152, -1e+30
    %v1165 = vsel %vm406, %v1156, -1e+30
    %v1166 = vsel %vm407, %v1160, -1e+30
    %v1167 = vsel %vm455, %v1162, -inf
    %v1168 = vsel %vm455, %v1163, -inf
    %v1169 = vsel %vm455, %v1164, -inf
    %v1170 = vsel %vm455, %v1165, -inf
    %v1171 = vsel %vm1090, %v1166, -inf
    %v1172 = vmax.f32 %v1167, %v1171
    %v1173 = vmax.f32 %v1172, %v1168
    %v1174 = vmax.f32 %v1169, %v1170
    %v1175 = vmax.f32 %v1173, %v1174
    %v1176 = vrot.slane %v1175, 4
    %v1177 = vmax.f32 %v1175, %v1176
    %v1178 = vrot.slane %v1177, 2
    %v1179 = vmax.f32 %v1177, %v1178
    %v1180 = vrot.slane %v1179, 1
    %v1181 = vmax.f32 %v1179, %v1180
    %vm1182 = vcmask 1040384
    %v1183 = vsel %vm1182, %v1101, %v1141
    %vm1184 = vcmask 1041408
    %v1185 = vsel %vm1184, %v1183, %v1181
    %v1186 = vpack.c.bf16 %v1185, %v1185
    %v1188 = vsel %vm455, %v1186, 0
    %1190 = vmatprep.subr.bf16.mxu0 0
    %1191 = vmatpush1.bf16.xpose.msra.mxu0 %v1188
    %1192 = vmatprep.subr.bf16.mxu0 0
    %1193 = vmatpush1.bf16.xpose.msra.mxu0 0
    %1194 = vmatprep.subr.bf16.mxu0 0
    %1195 = vmatpush1.bf16.xpose.msra.mxu0 0
    %1196 = vmatprep.subr.bf16.mxu0 0
    %1197 = vmatpush1.bf16.xpose.msra.mxu0 0
    %1198 = vmatprep.subr.bf16.mxu0 0
    %1199 = vmatpush1.bf16.xpose.msra.mxu0 0
    %1200 = vmatprep.subr.bf16.mxu0 0
    %1201 = vmatpush1.bf16.xpose.msra.mxu0 0
    %1202 = vmatprep.subr.bf16.mxu0 0
    %1203 = vmatpush1.bf16.xpose.msra.mxu0 0
    %1204 = vmatprep.subr.bf16.mxu0 0
    %1205 = vmatpush1.bf16.xpose.msra.mxu0 0
    %1206 = vmatprep.subr.bf16.mxu0 0
    %1207 = vmatpush1.bf16.xpose.msra.mxu0 0
    %1208 = vmatprep.subr.bf16.mxu0 0
    %1209 = vmatpush1.bf16.xpose.msra.mxu0 0
    %1210 = vmatprep.subr.bf16.mxu0 0
    %1211 = vmatpush1.bf16.xpose.msra.mxu0 0
    %1212 = vmatprep.subr.bf16.mxu0 0
    %1213 = vmatpush1.bf16.xpose.msra.mxu0 0
    %1214 = vmatprep.subr.bf16.mxu0 0
    %1215 = vmatpush1.bf16.xpose.msra.mxu0 0
    %1216 = vmatprep.subr.bf16.mxu0 0
    %1217 = vmatpush1.bf16.xpose.msra.mxu0 0
    %1218 = vmatprep.subr.bf16.mxu0 0
    %1219 = vmatpush1.bf16.xpose.msra.mxu0 0
    %1220 = vmatprep.subr.bf16.mxu0 0
    %1221 = vmatpush1.bf16.xpose.msra.mxu0 0
    %1222 = vmatprep.mubr.bf16.mxu0 0
    %1223 = vmatmul.mubr.bf16.gmra.mrb[0].mxu0 %v527
    %v1224 = vpop.f32.mrb[0].mxu0
    %v1225 = vadd.f32 0.0, %v1224
    %v1226 = vpop.f32.mrb[0].mxu0
    %v1227 = vpop.f32.mrb[0].mxu0
    %v1228 = vadd.f32 0.0, %v1227
    %v1229 = vpop.f32.mrb[0].mxu0
    %1230 = vmatprep.mubr.bf16.mxu0 0
    %1231 = vmatmul.mubr.bf16.gmra.mrb[0].mxu0 %v530
    %v1232 = vpop.f32.mrb[0].mxu0
    %v1233 = vadd.f32 0.0, %v1232
    %v1234 = vpop.f32.mrb[0].mxu0
    %v1235 = vpop.f32.mrb[0].mxu0
    %v1236 = vadd.f32 0.0, %v1235
    %v1237 = vpop.f32.mrb[0].mxu0
    %1238 = vmatprep.mubr.bf16.mxu0 0
    %1239 = vmatmul.mubr.bf16.gmra.mrb[0].mxu0 %v533
    %v1240 = vpop.f32.mrb[0].mxu0
    %v1241 = vadd.f32 0.0, %v1240
    %v1242 = vpop.f32.mrb[0].mxu0
    %v1243 = vpop.f32.mrb[0].mxu0
    %v1244 = vpop.f32.mrb[0].mxu0
    %1245 = vdwg.mxu0
    %v1246 = vsub.f32 %v1033, %v1225
    %v1247 = vsub.f32 %v1038, %v1228
    %v1248 = vsub.f32 %v1043, %v1233
    %v1249 = vsub.f32 %v1048, %v1236
    %v1250 = vsub.f32 %v1053, %v1241
    %v1251 = vmul.f32 %v1246, 1.442695
    %v1252 = vpow.pop %v1251
    %v1253 = vmul.f32 %v1247, 1.442695
    %v1254 = vpow.pop %v1253
    %v1255 = vmul.f32 %v1248, 1.442695
    %v1256 = vpow.pop %v1255
    %v1257 = vmul.f32 %v1249, 1.442695
    %v1258 = vpow.pop %v1257
    %v1259 = vmul.f32 %v1250, 1.442695
    %v1260 = vpow.pop %v1259
    %1262 = vset.pattern.permute.xlu0 0
    %1263 = vperm.xlu0 %1262, %v504
    %v1264 = vpop.permute.xlu0 %1263
    %1267 = vset.pattern.permute.xlu0 0
    %1268 = vperm.xlu0 %1267, %v507
    %v1269 = vpop.permute.xlu0 %1268
    %1272 = vset.pattern.permute.xlu0 0
    %1273 = vperm.xlu0 %1272, %v512
    %v1274 = vpop.permute.xlu0 %1273
    %1277 = vset.pattern.permute.xlu0 0
    %1278 = vperm.xlu0 %1277, %v515
    %v1279 = vpop.permute.xlu0 %1278
    %1282 = vset.pattern.permute.xlu0 0
    %1283 = vperm.xlu0 %1282, %v520
    %v1284 = vpop.permute.xlu0 %1283
    %v1286 = vmul.f32 %v1264, %v1252
    %v1287 = vmul.f32 %v1269, %v1254
    %v1288 = vmul.f32 %v1274, %v1256
    %v1289 = vmul.f32 %v1279, %v1258
    %v1290 = vmul.f32 %v1284, %v1260
    %v1291 = vpack.c.bf16 %v1287, %v1286
    %v1292 = vpack.c.bf16 %v1289, %v1288
    %v1293 = vpack.c.bf16 %v1290, %v1290
    %1294 = vxpose.xlu0.c.b16.start [1/8] %v418, 128
    %1295 = vxpose.xlu0.c.b16.cont [2/8] %v419, 128
    %1296 = vxpose.xlu0.c.b16.cont [3/8] %v420, 128
    %1297 = vxpose.xlu0.c.b16.cont [4/8] 0, 128
    %1298 = vxpose.xlu0.c.b16.cont [5/8] 0, 128
    %1299 = vxpose.xlu0.c.b16.cont [6/8] 0, 128
    %1300 = vxpose.xlu0.c.b16.cont [7/8] 0, 128
    %1301 = vxpose.xlu0.c.b16.end [8/8] 0, 128
    %v1302 = vpop.trf.xlu0
    %v1303 = vpop.trf.xlu0
    %v1304 = vpop.trf.xlu0
    %v1305 = vpop.trf.xlu0
    %v1306 = vpop.trf.xlu0
    %v1307 = vpop.trf.xlu0
    %v1308 = vpop.trf.xlu0
    %v1309 = vpop.trf.xlu0
    %vm1310 = vcmask 277504
    %v1312 = vsel %vm1310, %v1302, 0
    %v1315 = vsel %vm1182, %v1293, 0
    %1317 = vmatprep.subr.bf16.mxu0 0
    %1318 = vmatpush1.bf16.msra.mxu0 %v1291
    %1319 = vmatprep.subr.bf16.mxu0 0
    %1320 = vmatpush1.bf16.msra.mxu0 %v1292
    %1321 = vmatprep.subr.bf16.mxu0 0
    %1322 = vmatpush1.bf16.msra.mxu0 %v1315
    %1323 = vmatprep.subr.bf16.mxu0 0
    %1324 = vmatpush1.bf16.msra.mxu0 0
    %1325 = vmatprep.subr.bf16.mxu0 0
    %1326 = vmatpush1.bf16.msra.mxu0 0
    %1327 = vmatprep.subr.bf16.mxu0 0
    %1328 = vmatpush1.bf16.msra.mxu0 0
    %1329 = vmatprep.subr.bf16.mxu0 0
    %1330 = vmatpush1.bf16.msra.mxu0 0
    %1331 = vmatprep.subr.bf16.mxu0 0
    %1332 = vmatpush1.bf16.msra.mxu0 0
    %1333 = vmatprep.subr.bf16.mxu0 0
    %1334 = vmatpush1.bf16.msra.mxu0 0
    %1335 = vmatprep.subr.bf16.mxu0 0
    %1336 = vmatpush1.bf16.msra.mxu0 0
    %1337 = vmatprep.subr.bf16.mxu0 0
    %1338 = vmatpush1.bf16.msra.mxu0 0
    %1339 = vmatprep.subr.bf16.mxu0 0
    %1340 = vmatpush1.bf16.msra.mxu0 0
    %1341 = vmatprep.subr.bf16.mxu0 0
    %1342 = vmatpush1.bf16.msra.mxu0 0
    %1343 = vmatprep.subr.bf16.mxu0 0
    %1344 = vmatpush1.bf16.msra.mxu0 0
    %1345 = vmatprep.subr.bf16.mxu0 0
    %1346 = vmatpush1.bf16.msra.mxu0 0
    %1347 = vmatprep.subr.bf16.mxu0 0
    %1348 = vmatpush1.bf16.msra.mxu0 0
    %1349 = vmatprep.mubr.bf16.mxu0 0
    %1350 = vmatmul.mubr.bf16.gmra.mrb[0].mxu0 %v1312
    %v1351 = vpop.f32.mrb[0].mxu0
    %v1352 = vadd.f32 0.0, %v1351
    %v1353 = vpop.f32.mrb[0].mxu0
    %v1354 = vpop.f32.mrb[0].mxu0
    %v1355 = vadd.f32 0.0, %v1354
    %v1356 = vpop.f32.mrb[0].mxu0
    %1357 = vdwg.mxu0
    %v1358 = vpack.c.bf16 %v1355, %v1352
    %v1360 = vsel %vm465, %v1358, 0
    %1362 = vmatprep.subr.bf16.mxu0 0
    %1363 = vmatpush1.bf16.msra.mxu0 %v1360
    %1364 = vmatprep.subr.bf16.mxu0 0
    %1365 = vmatpush1.bf16.msra.mxu0 0
    %1366 = vmatprep.subr.bf16.mxu0 0
    %1367 = vmatpush1.bf16.msra.mxu0 0
    %1368 = vmatprep.subr.bf16.mxu0 0
    %1369 = vmatpush1.bf16.msra.mxu0 0
    %1370 = vmatprep.subr.bf16.mxu0 0
    %1371 = vmatpush1.bf16.msra.mxu0 0
    %1372 = vmatprep.subr.bf16.mxu0 0
    %1373 = vmatpush1.bf16.msra.mxu0 0
    %1374 = vmatprep.subr.bf16.mxu0 0
    %1375 = vmatpush1.bf16.msra.mxu0 0
    %1376 = vmatprep.subr.bf16.mxu0 0
    %1377 = vmatpush1.bf16.msra.mxu0 0
    %1378 = vmatprep.subr.bf16.mxu0 0
    %1379 = vmatpush1.bf16.msra.mxu0 0
    %1380 = vmatprep.subr.bf16.mxu0 0
    %1381 = vmatpush1.bf16.msra.mxu0 0
    %1382 = vmatprep.subr.bf16.mxu0 0
    %1383 = vmatpush1.bf16.msra.mxu0 0
    %1384 = vmatprep.subr.bf16.mxu0 0
    %1385 = vmatpush1.bf16.msra.mxu0 0
    %1386 = vmatprep.subr.bf16.mxu0 0
    %1387 = vmatpush1.bf16.msra.mxu0 0
    %1388 = vmatprep.subr.bf16.mxu0 0
    %1389 = vmatpush1.bf16.msra.mxu0 0
    %1390 = vmatprep.subr.bf16.mxu0 0
    %1391 = vmatpush1.bf16.msra.mxu0 0
    %1392 = vmatprep.subr.bf16.mxu0 0
    %1393 = vmatpush1.bf16.msra.mxu0 0
    %1394 = vmatprep.mubr.bf16.mxu0 0
    %1395 = vmatmul.mubr.bf16.gmra.mrb[0].mxu0 %v527
    %v1396 = vpop.f32.mrb[0].mxu0
    %v1397 = vadd.f32 1e-10, %v1396
    %v1398 = vpop.f32.mrb[0].mxu0
    %v1399 = vpop.f32.mrb[0].mxu0
    %v1400 = vadd.f32 1e-10, %v1399
    %v1401 = vpop.f32.mrb[0].mxu0
    %1402 = vmatprep.mubr.bf16.mxu0 0
    %1403 = vmatmul.mubr.bf16.gmra.mrb[0].mxu0 %v530
    %v1404 = vpop.f32.mrb[0].mxu0
    %v1405 = vadd.f32 1e-10, %v1404
    %v1406 = vpop.f32.mrb[0].mxu0
    %v1407 = vpop.f32.mrb[0].mxu0
    %v1408 = vadd.f32 1e-10, %v1407
    %v1409 = vpop.f32.mrb[0].mxu0
    %1410 = vmatprep.mubr.bf16.mxu0 0
    %1411 = vmatmul.mubr.bf16.gmra.mrb[0].mxu0 %v533
    %v1412 = vpop.f32.mrb[0].mxu0
    %v1413 = vadd.f32 1e-10, %v1412
    %v1414 = vpop.f32.mrb[0].mxu0
    %v1415 = vpop.f32.mrb[0].mxu0
    %v1416 = vpop.f32.mrb[0].mxu0
    %1417 = vdwg.mxu0
    %v1418 = vrcp.pop %v1397
    %v1419 = vrcp.pop %v1400
    %v1420 = vrcp.pop %v1405
    %v1421 = vrcp.pop %v1408
    %v1422 = vrcp.pop %v1413
    %v1423 = vmul.f32 %v1286, %v1418
    %v1424 = vmul.f32 %v1287, %v1419
    %v1425 = vmul.f32 %v1288, %v1420
    %v1426 = vmul.f32 %v1289, %v1421
    %v1427 = vmul.f32 %v1290, %v1422
    %v1428 = vld [vmem:[#allocation20] sm:$0xff]
    %v1429 = vld [vmem:[#allocation20 + $0x8] sm:$0xff]
    %v1430 = vld [vmem:[#allocation20 + $0x10] sm:$0xff]
    %v1431 = vld [vmem:[#allocation20 + $0x18] sm:$0xff]
    %v1432 = vld [vmem:[#allocation20 + $0x20] sm:$0xff]
    %v1433 = vld [vmem:[#allocation20 + $0x28] sm:$0xff]
    %v1434 = vld [vmem:[#allocation20 + $0x30] sm:$0xff]
    %v1435 = vld [vmem:[#allocation20 + $0x38] sm:$0xff]
    %v1436 = vld [vmem:[#allocation22] sm:$0xff]
    %v1437 = vld [vmem:[#allocation22 + $0x8] sm:$0xff]
    %v1438 = vld [vmem:[#allocation22 + $0x10] sm:$0xff]
    %v1439 = vld [vmem:[#allocation22 + $0x18] sm:$0xff]
    %v1440 = vld [vmem:[#allocation22 + $0x20] sm:$0xff]
    %v1441 = vld [vmem:[#allocation22 + $0x28] sm:$0xff]
    %v1442 = vld [vmem:[#allocation22 + $0x30] sm:$0xff]
    %v1443 = vld [vmem:[#allocation22 + $0x38] sm:$0xff]
    %1444 = vmatprep.subr.mxu0 %v1437
    %1445 = vmatpush1.msra.mxu0 %v1436
    %1446 = vmatprep.subr.mxu0 %v1439
    %1447 = vmatpush1.msra.mxu0 %v1438
    %1448 = vmatprep.subr.mxu0 %v1441
    %1449 = vmatpush1.msra.mxu0 %v1440
    %1450 = vmatprep.subr.mxu0 %v1443
    %1451 = vmatpush1.msra.mxu0 %v1442
    %1452 = vmatprep.subr.mxu0 0.0
    %1453 = vmatpush1.msra.mxu0 0.0
    %1454 = vmatprep.subr.mxu0 0.0
    %1455 = vmatpush1.msra.mxu0 0.0
    %1456 = vmatprep.subr.mxu0 0.0
    %1457 = vmatpush1.msra.mxu0 0.0
    %1458 = vmatprep.subr.mxu0 0.0
    %1459 = vmatpush1.msra.mxu0 0.0
    %1460 = vmatprep.subr.mxu0 0.0
    %1461 = vmatpush1.msra.mxu0 0.0
    %1462 = vmatprep.subr.mxu0 0.0
    %1463 = vmatpush1.msra.mxu0 0.0
    %1464 = vmatprep.subr.mxu0 0.0
    %1465 = vmatpush1.msra.mxu0 0.0
    %1466 = vmatprep.subr.mxu0 0.0
    %1467 = vmatpush1.msra.mxu0 0.0
    %1468 = vmatprep.subr.mxu0 0.0
    %1469 = vmatpush1.msra.mxu0 0.0
    %1470 = vmatprep.subr.mxu0 0.0
    %1471 = vmatpush1.msra.mxu0 0.0
    %1472 = vmatprep.subr.mxu0 0.0
    %1473 = vmatpush1.msra.mxu0 0.0
    %1474 = vmatprep.subr.mxu0 0.0
    %1475 = vmatpush1.msra.mxu0 0.0
    %1476 = vmatprep.subr.mxu0 0.0
    %1477 = vmatpush1.msra.mxu0 0.0
    %1478 = vmatprep.subr.mxu0 0.0
    %1479 = vmatpush1.msra.mxu0 0.0
    %1480 = vmatprep.subr.mxu0 0.0
    %1481 = vmatpush1.msra.mxu0 0.0
    %1482 = vmatprep.subr.mxu0 0.0
    %1483 = vmatpush1.msra.mxu0 0.0
    %1484 = vmatprep.subr.mxu0 0.0
    %1485 = vmatpush1.msra.mxu0 0.0
    %1486 = vmatprep.subr.mxu0 0.0
    %1487 = vmatpush1.msra.mxu0 0.0
    %1488 = vmatprep.subr.mxu0 0.0
    %1489 = vmatpush1.msra.mxu0 0.0
    %1490 = vmatprep.subr.mxu0 0.0
    %1491 = vmatpush1.msra.mxu0 0.0
    %1492 = vmatprep.subr.mxu0 0.0
    %1493 = vmatpush1.msra.mxu0 0.0
    %1494 = vmatprep.subr.mxu0 0.0
    %1495 = vmatpush1.msra.mxu0 0.0
    %1496 = vmatprep.subr.mxu0 0.0
    %1497 = vmatpush1.msra.mxu0 0.0
    %1498 = vmatprep.subr.mxu0 0.0
    %1499 = vmatpush1.msra.mxu0 0.0
    %1500 = vmatprep.subr.mxu0 0.0
    %1501 = vmatpush1.msra.mxu0 0.0
    %1502 = vmatprep.subr.mxu0 0.0
    %1503 = vmatpush1.msra.mxu0 0.0
    %1504 = vmatprep.subr.mxu0 0.0
    %1505 = vmatpush1.msra.mxu0 0.0
    %1506 = vmatprep.subr.mxu0 0.0
    %1507 = vmatpush1.msra.mxu0 0.0
    %1508 = vmatprep.mubr.f32.mxu0 0.0
    %1509 = vmatmul.mubr.f32.gmra.mrb[0].mxu0 %v668
    %v1510 = vpop.f32.mrb[0].mxu0
    %v1511 = vadd.f32 0.0, %v1510
    %v1512 = vpop.f32.mrb[0].mxu0
    %v1513 = vadd.f32 0.0, %v1512
    %1514 = vmatprep.mubr.f32.mxu0 0.0
    %1515 = vmatmul.mubr.f32.gmra.mrb[0].mxu0 %v671
    %v1516 = vpop.f32.mrb[0].mxu0
    %v1517 = vadd.f32 0.0, %v1516
    %v1518 = vpop.f32.mrb[0].mxu0
    %v1519 = vadd.f32 0.0, %v1518
    %1520 = vmatprep.mubr.f32.mxu0 0.0
    %1521 = vmatmul.mubr.f32.gmra.mrb[0].mxu0 %v674
    %v1522 = vpop.f32.mrb[0].mxu0
    %v1523 = vadd.f32 0.0, %v1522
    %v1524 = vpop.f32.mrb[0].mxu0
    %v1525 = vadd.f32 0.0, %v1524
    %1526 = vmatprep.mubr.f32.mxu0 0.0
    %1527 = vmatmul.mubr.f32.gmra.mrb[0].mxu0 %v677
    %v1528 = vpop.f32.mrb[0].mxu0
    %v1529 = vadd.f32 0.0, %v1528
    %v1530 = vpop.f32.mrb[0].mxu0
    %v1531 = vadd.f32 0.0, %v1530
    %1532 = vmatprep.mubr.f32.mxu0 0.0
    %1533 = vmatmul.mubr.f32.gmra.mrb[0].mxu0 %v680
    %v1534 = vpop.f32.mrb[0].mxu0
    %v1535 = vadd.f32 0.0, %v1534
    %v1536 = vpop.f32.mrb[0].mxu0
    %v1537 = vadd.f32 0.0, %v1536
    %1538 = vdwg.mxu0
    %1539 = vmatprep.subr.mxu0 %v1429
    %1540 = vmatpush1.msra.mxu0 %v1428
    %1541 = vmatprep.subr.mxu0 %v1431
    %1542 = vmatpush1.msra.mxu0 %v1430
    %1543 = vmatprep.subr.mxu0 %v1433
    %1544 = vmatpush1.msra.mxu0 %v1432
    %1545 = vmatprep.subr.mxu0 %v1435
    %1546 = vmatpush1.msra.mxu0 %v1434
    %1547 = vmatprep.subr.mxu0 0.0
    %1548 = vmatpush1.msra.mxu0 0.0
    %1549 = vmatprep.subr.mxu0 0.0
    %1550 = vmatpush1.msra.mxu0 0.0
    %1551 = vmatprep.subr.mxu0 0.0
    %1552 = vmatpush1.msra.mxu0 0.0
    %1553 = vmatprep.subr.mxu0 0.0
    %1554 = vmatpush1.msra.mxu0 0.0
    %1555 = vmatprep.subr.mxu0 0.0
    %1556 = vmatpush1.msra.mxu0 0.0
    %1557 = vmatprep.subr.mxu0 0.0
    %1558 = vmatpush1.msra.mxu0 0.0
    %1559 = vmatprep.subr.mxu0 0.0
    %1560 = vmatpush1.msra.mxu0 0.0
    %1561 = vmatprep.subr.mxu0 0.0
    %1562 = vmatpush1.msra.mxu0 0.0
    %1563 = vmatprep.subr.mxu0 0.0
    %1564 = vmatpush1.msra.mxu0 0.0
    %1565 = vmatprep.subr.mxu0 0.0
    %1566 = vmatpush1.msra.mxu0 0.0
    %1567 = vmatprep.subr.mxu0 0.0
    %1568 = vmatpush1.msra.mxu0 0.0
    %1569 = vmatprep.subr.mxu0 0.0
    %1570 = vmatpush1.msra.mxu0 0.0
    %1571 = vmatprep.subr.mxu0 0.0
    %1572 = vmatpush1.msra.mxu0 0.0
    %1573 = vmatprep.subr.mxu0 0.0
    %1574 = vmatpush1.msra.mxu0 0.0
    %1575 = vmatprep.subr.mxu0 0.0
    %1576 = vmatpush1.msra.mxu0 0.0
    %1577 = vmatprep.subr.mxu0 0.0
    %1578 = vmatpush1.msra.mxu0 0.0
    %1579 = vmatprep.subr.mxu0 0.0
    %1580 = vmatpush1.msra.mxu0 0.0
    %1581 = vmatprep.subr.mxu0 0.0
    %1582 = vmatpush1.msra.mxu0 0.0
    %1583 = vmatprep.subr.mxu0 0.0
    %1584 = vmatpush1.msra.mxu0 0.0
    %1585 = vmatprep.subr.mxu0 0.0
    %1586 = vmatpush1.msra.mxu0 0.0
    %1587 = vmatprep.subr.mxu0 0.0
    %1588 = vmatpush1.msra.mxu0 0.0
    %1589 = vmatprep.subr.mxu0 0.0
    %1590 = vmatpush1.msra.mxu0 0.0
    %1591 = vmatprep.subr.mxu0 0.0
    %1592 = vmatpush1.msra.mxu0 0.0
    %1593 = vmatprep.subr.mxu0 0.0
    %1594 = vmatpush1.msra.mxu0 0.0
    %1595 = vmatprep.subr.mxu0 0.0
    %1596 = vmatpush1.msra.mxu0 0.0
    %1597 = vmatprep.subr.mxu0 0.0
    %1598 = vmatpush1.msra.mxu0 0.0
    %1599 = vmatprep.subr.mxu0 0.0
    %1600 = vmatpush1.msra.mxu0 0.0
    %1601 = vmatprep.subr.mxu0 0.0
    %1602 = vmatpush1.msra.mxu0 0.0
    %1603 = vmatprep.mubr.f32.mxu0 0.0
    %1604 = vmatmul.mubr.f32.gmra.mrb[0].mxu0 %v778
    %v1605 = vpop.f32.mrb[0].mxu0
    %v1606 = vadd.f32 %v1511, %v1605
    %v1607 = vpop.f32.mrb[0].mxu0
    %v1608 = vadd.f32 %v1513, %v1607
    %1609 = vmatprep.mubr.f32.mxu0 0.0
    %1610 = vmatmul.mubr.f32.gmra.mrb[0].mxu0 %v781
    %v1611 = vpop.f32.mrb[0].mxu0
    %v1612 = vadd.f32 %v1517, %v1611
    %v1613 = vpop.f32.mrb[0].mxu0
    %v1614 = vadd.f32 %v1519, %v1613
    %1615 = vmatprep.mubr.f32.mxu0 0.0
    %1616 = vmatmul.mubr.f32.gmra.mrb[0].mxu0 %v784
    %v1617 = vpop.f32.mrb[0].mxu0
    %v1618 = vadd.f32 %v1523, %v1617
    %v1619 = vpop.f32.mrb[0].mxu0
    %v1620 = vadd.f32 %v1525, %v1619
    %1621 = vmatprep.mubr.f32.mxu0 0.0
    %1622 = vmatmul.mubr.f32.gmra.mrb[0].mxu0 %v787
    %v1623 = vpop.f32.mrb[0].mxu0
    %v1624 = vadd.f32 %v1529, %v1623
    %v1625 = vpop.f32.mrb[0].mxu0
    %v1626 = vadd.f32 %v1531, %v1625
    %1627 = vmatprep.mubr.f32.mxu0 0.0
    %1628 = vmatmul.mubr.f32.gmra.mrb[0].mxu0 %v790
    %v1629 = vpop.f32.mrb[0].mxu0
    %v1630 = vadd.f32 %v1535, %v1629
    %v1631 = vpop.f32.mrb[0].mxu0
    %v1632 = vadd.f32 %v1537, %v1631
    %1633 = vdwg.mxu0
    %v1634 = vld [vmem:[#allocation23] sm:$0x3]
    %v1636 = vlaneseq
    %v1637 = vshrl.u32 %v1636, 7
    %v1638 = vsub.s32 0, %v1637
    %v1639 = vrot.slane %v1634, %v1638
    %v1640 = vlaneseq
    %v1641 = vshrl.u32 %v1640, 7
    %v1642 = vsub.s32 1, %v1641
    %v1643 = vrot.slane %v1634, %v1642
    %v1646 = vadd.f32 %v1606, %v1639
    %v1647 = vadd.f32 %v1608, %v1643
    %v1648 = vadd.f32 %v1612, %v1639
    %v1649 = vadd.f32 %v1614, %v1643
    %v1650 = vadd.f32 %v1618, %v1639
    %v1651 = vadd.f32 %v1620, %v1643
    %v1652 = vadd.f32 %v1624, %v1639
    %v1653 = vadd.f32 %v1626, %v1643
    %v1654 = vadd.f32 %v1630, %v1639
    %v1655 = vadd.f32 %v1632, %v1643
    %v1656 = vmax.f32 %v1646, 0.0
    %v1657 = vmax.f32 %v1647, 0.0
    %v1658 = vmax.f32 %v1648, 0.0
    %v1659 = vmax.f32 %v1649, 0.0
    %v1660 = vmax.f32 %v1650, 0.0
    %v1661 = vmax.f32 %v1651, 0.0
    %v1662 = vmax.f32 %v1652, 0.0
    %v1663 = vmax.f32 %v1653, 0.0
    %v1664 = vmax.f32 %v1654, 0.0
    %v1665 = vmax.f32 %v1655, 0.0
    %v1666 = vld [vmem:[#allocation25] sm:$0xff]
    %v1667 = vld [vmem:[#allocation25 + $0x8] sm:$0xff]
    %v1668 = vld [vmem:[#allocation25 + $0x10] sm:$0xff]
    %v1669 = vld [vmem:[#allocation25 + $0x18] sm:$0xff]
    %v1670 = vld [vmem:[#allocation25 + $0x20] sm:$0xff]
    %v1671 = vld [vmem:[#allocation25 + $0x28] sm:$0xff]
    %v1672 = vld [vmem:[#allocation25 + $0x30] sm:$0xff]
    %v1673 = vld [vmem:[#allocation25 + $0x38] sm:$0xff]
    %v1674 = vld [vmem:[#allocation25 + $0x40] sm:$0xff]
    %v1675 = vld [vmem:[#allocation25 + $0x48] sm:$0xff]
    %v1676 = vld [vmem:[#allocation25 + $0x50] sm:$0xff]
    %v1677 = vld [vmem:[#allocation25 + $0x58] sm:$0xff]
    %v1678 = vld [vmem:[#allocation25 + $0x60] sm:$0xff]
    %v1679 = vld [vmem:[#allocation25 + $0x68] sm:$0xff]
    %v1680 = vld [vmem:[#allocation25 + $0x70] sm:$0xff]
    %v1681 = vld [vmem:[#allocation25 + $0x78] sm:$0xff]
    %v1682 = vld [vmem:[#allocation25 + $0x80] sm:$0xff]
    %v1683 = vld [vmem:[#allocation25 + $0x88] sm:$0xff]
    %v1684 = vld [vmem:[#allocation25 + $0x90] sm:$0xff]
    %v1685 = vld [vmem:[#allocation25 + $0x98] sm:$0xff]
    %v1686 = vld [vmem:[#allocation25 + $0xa0] sm:$0xff]
    %v1687 = vld [vmem:[#allocation25 + $0xa8] sm:$0xff]
    %v1688 = vld [vmem:[#allocation25 + $0xb0] sm:$0xff]
    %v1689 = vld [vmem:[#allocation25 + $0xb8] sm:$0xff]
    %v1690 = vld [vmem:[#allocation26] sm:$0x1]
    %v1692 = vlaneseq
    %v1693 = vshrl.u32 %v1692, 7
    %v1694 = vsub.s32 0, %v1693
    %v1695 = vrot.slane %v1690, %v1694
    %v1698 = vsel %vm950, %v1657, 0
    %v1701 = vsel %vm950, %v1659, 0
    %v1704 = vsel %vm950, %v1661, 0
    %v1707 = vsel %vm950, %v1663, 0
    %v1710 = vsel %vm950, %v1665, 0
    %1712 = vmatprep.subr.mxu0 0.0
    %1713 = vmatpush1.msra.mxu0 %v1666
    %1714 = vmatprep.subr.mxu0 0.0
    %1715 = vmatpush1.msra.mxu0 %v1667
    %1716 = vmatprep.subr.mxu0 0.0
    %1717 = vmatpush1.msra.mxu0 %v1668
    %1718 = vmatprep.subr.mxu0 0.0
    %1719 = vmatpush1.msra.mxu0 %v1669
    %1720 = vmatprep.subr.mxu0 0.0
    %1721 = vmatpush1.msra.mxu0 %v1670
    %1722 = vmatprep.subr.mxu0 0.0
    %1723 = vmatpush1.msra.mxu0 %v1671
    %1724 = vmatprep.subr.mxu0 0.0
    %1725 = vmatpush1.msra.mxu0 %v1672
    %1726 = vmatprep.subr.mxu0 0.0
    %1727 = vmatpush1.msra.mxu0 %v1673
    %1728 = vmatprep.subr.mxu0 0.0
    %1729 = vmatpush1.msra.mxu0 %v1674
    %1730 = vmatprep.subr.mxu0 0.0
    %1731 = vmatpush1.msra.mxu0 %v1675
    %1732 = vmatprep.subr.mxu0 0.0
    %1733 = vmatpush1.msra.mxu0 %v1676
    %1734 = vmatprep.subr.mxu0 0.0
    %1735 = vmatpush1.msra.mxu0 %v1677
    %1736 = vmatprep.subr.mxu0 0.0
    %1737 = vmatpush1.msra.mxu0 %v1678
    %1738 = vmatprep.subr.mxu0 0.0
    %1739 = vmatpush1.msra.mxu0 %v1679
    %1740 = vmatprep.subr.mxu0 0.0
    %1741 = vmatpush1.msra.mxu0 %v1680
    %1742 = vmatprep.subr.mxu0 0.0
    %1743 = vmatpush1.msra.mxu0 %v1681
    %1744 = vmatprep.subr.mxu0 0.0
    %1745 = vmatpush1.msra.mxu0 %v1682
    %1746 = vmatprep.subr.mxu0 0.0
    %1747 = vmatpush1.msra.mxu0 %v1683
    %1748 = vmatprep.subr.mxu0 0.0
    %1749 = vmatpush1.msra.mxu0 %v1684
    %1750 = vmatprep.subr.mxu0 0.0
    %1751 = vmatpush1.msra.mxu0 %v1685
    %1752 = vmatprep.subr.mxu0 0.0
    %1753 = vmatpush1.msra.mxu0 %v1686
    %1754 = vmatprep.subr.mxu0 0.0
    %1755 = vmatpush1.msra.mxu0 %v1687
    %1756 = vmatprep.subr.mxu0 0.0
    %1757 = vmatpush1.msra.mxu0 %v1688
    %1758 = vmatprep.subr.mxu0 0.0
    %1759 = vmatpush1.msra.mxu0 %v1689
    %1760 = vmatprep.subr.mxu0 0.0
    %1761 = vmatpush1.msra.mxu0 0.0
    %1762 = vmatprep.subr.mxu0 0.0
    %1763 = vmatpush1.msra.mxu0 0.0
    %1764 = vmatprep.subr.mxu0 0.0
    %1765 = vmatpush1.msra.mxu0 0.0
    %1766 = vmatprep.subr.mxu0 0.0
    %1767 = vmatpush1.msra.mxu0 0.0
    %1768 = vmatprep.subr.mxu0 0.0
    %1769 = vmatpush1.msra.mxu0 0.0
    %1770 = vmatprep.subr.mxu0 0.0
    %1771 = vmatpush1.msra.mxu0 0.0
    %1772 = vmatprep.subr.mxu0 0.0
    %1773 = vmatpush1.msra.mxu0 0.0
    %1774 = vmatprep.subr.mxu0 0.0
    %1775 = vmatpush1.msra.mxu0 0.0
    %1776 = vmatprep.mubr.f32.mxu0 %v1698
    %1777 = vmatmul.mubr.f32.gmra.mrb[0].mxu0 %v1656
    %v1778 = vpop.f32.mrb[0].mxu0
    %v1779 = vadd.f32 %v1695, %v1778
    %v1780 = vpop.f32.mrb[0].mxu0
    %1781 = vmatprep.mubr.f32.mxu0 %v1701
    %1782 = vmatmul.mubr.f32.gmra.mrb[0].mxu0 %v1658
    %v1783 = vpop.f32.mrb[0].mxu0
    %v1784 = vadd.f32 %v1695, %v1783
    %v1785 = vpop.f32.mrb[0].mxu0
    %1786 = vmatprep.mubr.f32.mxu0 %v1704
    %1787 = vmatmul.mubr.f32.gmra.mrb[0].mxu0 %v1660
    %v1788 = vpop.f32.mrb[0].mxu0
    %v1789 = vadd.f32 %v1695, %v1788
    %v1790 = vpop.f32.mrb[0].mxu0
    %1791 = vmatprep.mubr.f32.mxu0 %v1707
    %1792 = vmatmul.mubr.f32.gmra.mrb[0].mxu0 %v1662
    %v1793 = vpop.f32.mrb[0].mxu0
    %v1794 = vadd.f32 %v1695, %v1793
    %v1795 = vpop.f32.mrb[0].mxu0
    %1796 = vmatprep.mubr.f32.mxu0 %v1710
    %1797 = vmatmul.mubr.f32.gmra.mrb[0].mxu0 %v1664
    %v1798 = vpop.f32.mrb[0].mxu0
    %v1799 = vadd.f32 %v1695, %v1798
    %v1800 = vpop.f32.mrb[0].mxu0
    %1801 = vdwg.mxu0
    %1803 = vset.pattern.permute.xlu0 0
    %1804 = vperm.xlu0 %1803, %v1423
    %v1805 = vpop.permute.xlu0 %1804
    %1808 = vset.pattern.permute.xlu0 0
    %1809 = vperm.xlu0 %1808, %v1424
    %v1810 = vpop.permute.xlu0 %1809
    %1813 = vset.pattern.permute.xlu0 0
    %1814 = vperm.xlu0 %1813, %v1425
    %v1815 = vpop.permute.xlu0 %1814
    %1818 = vset.pattern.permute.xlu0 0
    %1819 = vperm.xlu0 %1818, %v1426
    %v1820 = vpop.permute.xlu0 %1819
    %1823 = vset.pattern.permute.xlu0 0
    %1824 = vperm.xlu0 %1823, %v1427
    %v1825 = vpop.permute.xlu0 %1824
    %v1827 = vmul.f32 %v1805, %v1779
    %v1828 = vmul.f32 %v1810, %v1784
    %v1829 = vmul.f32 %v1815, %v1789
    %v1830 = vmul.f32 %v1820, %v1794
    %v1831 = vmul.f32 %v1825, %v1799
    %1832 = vset.pattern.permute.xlu0 1
    %1833 = vperm.xlu0 %1832, %v1423
    %v1834 = vpop.permute.xlu0 %1833
    %1836 = vset.pattern.permute.xlu0 1
    %1837 = vperm.xlu0 %1836, %v1424
    %v1838 = vpop.permute.xlu0 %1837
    %1840 = vset.pattern.permute.xlu0 1
    %1841 = vperm.xlu0 %1840, %v1425
    %v1842 = vpop.permute.xlu0 %1841
    %1844 = vset.pattern.permute.xlu0 1
    %1845 = vperm.xlu0 %1844, %v1426
    %v1846 = vpop.permute.xlu0 %1845
    %1848 = vset.pattern.permute.xlu0 1
    %1849 = vperm.xlu0 %1848, %v1427
    %v1850 = vpop.permute.xlu0 %1849
    %v1852 = vmul.f32 %v1834, %v1779
    %v1853 = vmul.f32 %v1838, %v1784
    %v1854 = vmul.f32 %v1842, %v1789
    %v1855 = vmul.f32 %v1846, %v1794
    %v1856 = vmul.f32 %v1850, %v1799
    %1862 = vrot.lane.b32.xlu0 %v1852, 96
    %v1863 = vpop.permute.xlu0 %1862
    %1864 = vrot.lane.b32.xlu0 %v1853, 96
    %v1865 = vpop.permute.xlu0 %1864
    %1866 = vrot.lane.b32.xlu0 %v1854, 96
    %v1867 = vpop.permute.xlu0 %1866
    %1868 = vrot.lane.b32.xlu0 %v1855, 96
    %v1869 = vpop.permute.xlu0 %1868
    %1870 = vrot.lane.b32.xlu0 %v1856, 96
    %v1871 = vpop.permute.xlu0 %1870
    %v1877 = vadd.f32 %v1827, %v1863
    %v1878 = vadd.f32 %v1828, %v1865
    %v1879 = vadd.f32 %v1829, %v1867
    %v1880 = vadd.f32 %v1830, %v1869
    %v1881 = vadd.f32 %v1831, %v1871
    %1882 = vset.pattern.permute.xlu0 2
    %1883 = vperm.xlu0 %1882, %v1423
    %v1884 = vpop.permute.xlu0 %1883
    %1886 = vset.pattern.permute.xlu0 2
    %1887 = vperm.xlu0 %1886, %v1424
    %v1888 = vpop.permute.xlu0 %1887
    %1890 = vset.pattern.permute.xlu0 2
    %1891 = vperm.xlu0 %1890, %v1425
    %v1892 = vpop.permute.xlu0 %1891
    %1894 = vset.pattern.permute.xlu0 2
    %1895 = vperm.xlu0 %1894, %v1426
    %v1896 = vpop.permute.xlu0 %1895
    %1898 = vset.pattern.permute.xlu0 2
    %1899 = vperm.xlu0 %1898, %v1427
    %v1900 = vpop.permute.xlu0 %1899
    %v1902 = vmul.f32 %v1884, %v1779
    %v1903 = vmul.f32 %v1888, %v1784
    %v1904 = vmul.f32 %v1892, %v1789
    %v1905 = vmul.f32 %v1896, %v1794
    %v1906 = vmul.f32 %v1900, %v1799
    %1912 = vrot.lane.b32.xlu0 %v1902, 64
    %v1913 = vpop.permute.xlu0 %1912
    %1914 = vrot.lane.b32.xlu0 %v1903, 64
    %v1915 = vpop.permute.xlu0 %1914
    %1916 = vrot.lane.b32.xlu0 %v1904, 64
    %v1917 = vpop.permute.xlu0 %1916
    %1918 = vrot.lane.b32.xlu0 %v1905, 64
    %v1919 = vpop.permute.xlu0 %1918
    %1920 = vrot.lane.b32.xlu0 %v1906, 64
    %v1921 = vpop.permute.xlu0 %1920
    %v1927 = vadd.f32 %v1877, %v1913
    %v1928 = vadd.f32 %v1878, %v1915
    %v1929 = vadd.f32 %v1879, %v1917
    %v1930 = vadd.f32 %v1880, %v1919
    %v1931 = vadd.f32 %v1881, %v1921
    %v1932 = vpack.c.bf16 %v1928, %v1927
    %v1933 = vpack.c.bf16 %v1930, %v1929
    %v1934 = vpack.c.bf16 %v1931, %v1931
    %v1936 = vsel %vm1182, %v1934, 0
    %1938 = vmatprep.subr.bf16.mxu0 0
    %1939 = vmatpush1.bf16.msra.mxu0 %v1932
    %1940 = vmatprep.subr.bf16.mxu0 0
    %1941 = vmatpush1.bf16.msra.mxu0 %v1933
    %1942 = vmatprep.subr.bf16.mxu0 0
    %1943 = vmatpush1.bf16.msra.mxu0 %v1936
    %1944 = vmatprep.subr.bf16.mxu0 0
    %1945 = vmatpush1.bf16.msra.mxu0 0
    %1946 = vmatprep.subr.bf16.mxu0 0
    %1947 = vmatpush1.bf16.msra.mxu0 0
    %1948 = vmatprep.subr.bf16.mxu0 0
    %1949 = vmatpush1.bf16.msra.mxu0 0
    %1950 = vmatprep.subr.bf16.mxu0 0
    %1951 = vmatpush1.bf16.msra.mxu0 0
    %1952 = vmatprep.subr.bf16.mxu0 0
    %1953 = vmatpush1.bf16.msra.mxu0 0
    %1954 = vmatprep.subr.bf16.mxu0 0
    %1955 = vmatpush1.bf16.msra.mxu0 0
    %1956 = vmatprep.subr.bf16.mxu0 0
    %1957 = vmatpush1.bf16.msra.mxu0 0
    %1958 = vmatprep.subr.bf16.mxu0 0
    %1959 = vmatpush1.bf16.msra.mxu0 0
    %1960 = vmatprep.subr.bf16.mxu0 0
    %1961 = vmatpush1.bf16.msra.mxu0 0
    %1962 = vmatprep.subr.bf16.mxu0 0
    %1963 = vmatpush1.bf16.msra.mxu0 0
    %1964 = vmatprep.subr.bf16.mxu0 0
    %1965 = vmatpush1.bf16.msra.mxu0 0
    %1966 = vmatprep.subr.bf16.mxu0 0
    %1967 = vmatpush1.bf16.msra.mxu0 0
    %1968 = vmatprep.subr.bf16.mxu0 0
    %1969 = vmatpush1.bf16.msra.mxu0 0
    %1970 = vmatprep.mubr.bf16.mxu0 0
    %1971 = vmatmul.mubr.bf16.gmra.mrb[0].mxu0 %v1312
    %v1972 = vpop.f32.mrb[0].mxu0
    %v1973 = vadd.f32 0.0, %v1972
    %v1974 = vpop.f32.mrb[0].mxu0
    %v1975 = vpop.f32.mrb[0].mxu0
    %v1976 = vadd.f32 0.0, %v1975
    %v1977 = vpop.f32.mrb[0].mxu0
    %1978 = vdwg.mxu0
    %v1979 = vmul.f32 %v1973, 0.33333334
    %v1980 = vmul.f32 %v1976, 0.33333334
    %v1981 = vadd.f32 %v1979, %v374
    %v1982 = vadd.f32 %v1980, %v375
    %v1983 = vpack.c.bf16 %v1982, %v1981
    %v1985 = vsel %vm465, %v1983, 0
    %1987 = vmatprep.subr.bf16.mxu0 0
    %1988 = vmatpush1.bf16.msra.mxu0 %v1985
    %1989 = vmatprep.subr.bf16.mxu0 0
    %1990 = vmatpush1.bf16.msra.mxu0 0
    %1991 = vmatprep.subr.bf16.mxu0 0
    %1992 = vmatpush1.bf16.msra.mxu0 0
    %1993 = vmatprep.subr.bf16.mxu0 0
    %1994 = vmatpush1.bf16.msra.mxu0 0
    %1995 = vmatprep.subr.bf16.mxu0 0
    %1996 = vmatpush1.bf16.msra.mxu0 0
    %1997 = vmatprep.subr.bf16.mxu0 0
    %1998 = vmatpush1.bf16.msra.mxu0 0
    %1999 = vmatprep.subr.bf16.mxu0 0
    %2000 = vmatpush1.bf16.msra.mxu0 0
    %2001 = vmatprep.subr.bf16.mxu0 0
    %2002 = vmatpush1.bf16.msra.mxu0 0
    %2003 = vmatprep.subr.bf16.mxu0 0
    %2004 = vmatpush1.bf16.msra.mxu0 0
    %2005 = vmatprep.subr.bf16.mxu0 0
    %2006 = vmatpush1.bf16.msra.mxu0 0
    %2007 = vmatprep.subr.bf16.mxu0 0
    %2008 = vmatpush1.bf16.msra.mxu0 0
    %2009 = vmatprep.subr.bf16.mxu0 0
    %2010 = vmatpush1.bf16.msra.mxu0 0
    %2011 = vmatprep.subr.bf16.mxu0 0
    %2012 = vmatpush1.bf16.msra.mxu0 0
    %2013 = vmatprep.subr.bf16.mxu0 0
    %2014 = vmatpush1.bf16.msra.mxu0 0
    %2015 = vmatprep.subr.bf16.mxu0 0
    %2016 = vmatpush1.bf16.msra.mxu0 0
    %2017 = vmatprep.subr.bf16.mxu0 0
    %2018 = vmatpush1.bf16.msra.mxu0 0
    %2019 = vmatprep.mubr.bf16.mxu0 0
    %2020 = vmatmul.mubr.bf16.gmra.mrb[0].mxu0 %v527
    %v2021 = vpop.f32.mrb[0].mxu0
    %v2022 = vadd.f32 0.0, %v2021
    %v2023 = vpop.f32.mrb[0].mxu0
    %v2024 = vpop.f32.mrb[0].mxu0
    %v2025 = vadd.f32 0.0, %v2024
    %v2026 = vpop.f32.mrb[0].mxu0
    %2027 = vmatprep.mubr.bf16.mxu0 0
    %2028 = vmatmul.mubr.bf16.gmra.mrb[0].mxu0 %v530
    %v2029 = vpop.f32.mrb[0].mxu0
    %v2030 = vadd.f32 0.0, %v2029
    %v2031 = vpop.f32.mrb[0].mxu0
    %v2032 = vpop.f32.mrb[0].mxu0
    %v2033 = vadd.f32 0.0, %v2032
    %v2034 = vpop.f32.mrb[0].mxu0
    %2035 = vmatprep.mubr.bf16.mxu0 0
    %2036 = vmatmul.mubr.bf16.gmra.mrb[0].mxu0 %v533
    %v2037 = vpop.f32.mrb[0].mxu0
    %v2038 = vadd.f32 0.0, %v2037
    %v2039 = vpop.f32.mrb[0].mxu0
    %v2040 = vpop.f32.mrb[0].mxu0
    %v2041 = vpop.f32.mrb[0].mxu0
    %2042 = vdwg.mxu0
    %2043 = vmatprep.subr.bf16.mxu0 0
    %2044 = vmatpush1.bf16.msra.mxu0 %v1985
    %2045 = vmatprep.subr.bf16.mxu0 0
    %2046 = vmatpush1.bf16.msra.mxu0 0
    %2047 = vmatprep.subr.bf16.mxu0 0
    %2048 = vmatpush1.bf16.msra.mxu0 0
    %2049 = vmatprep.subr.bf16.mxu0 0
    %2050 = vmatpush1.bf16.msra.mxu0 0
    %2051 = vmatprep.subr.bf16.mxu0 0
    %2052 = vmatpush1.bf16.msra.mxu0 0
    %2053 = vmatprep.subr.bf16.mxu0 0
    %2054 = vmatpush1.bf16.msra.mxu0 0
    %2055 = vmatprep.subr.bf16.mxu0 0
    %2056 = vmatpush1.bf16.msra.mxu0 0
    %2057 = vmatprep.subr.bf16.mxu0 0
    %2058 = vmatpush1.bf16.msra.mxu0 0
    %2059 = vmatprep.subr.bf16.mxu0 0
    %2060 = vmatpush1.bf16.msra.mxu0 0
    %2061 = vmatprep.subr.bf16.mxu0 0
    %2062 = vmatpush1.bf16.msra.mxu0 0
    %2063 = vmatprep.subr.bf16.mxu0 0
    %2064 = vmatpush1.bf16.msra.mxu0 0
    %2065 = vmatprep.subr.bf16.mxu0 0
    %2066 = vmatpush1.bf16.msra.mxu0 0
    %2067 = vmatprep.subr.bf16.mxu0 0
    %2068 = vmatpush1.bf16.msra.mxu0 0
    %2069 = vmatprep.subr.bf16.mxu0 0
    %2070 = vmatpush1.bf16.msra.mxu0 0
    %2071 = vmatprep.subr.bf16.mxu0 0
    %2072 = vmatpush1.bf16.msra.mxu0 0
    %2073 = vmatprep.subr.bf16.mxu0 0
    %2074 = vmatpush1.bf16.msra.mxu0 0
    %2075 = vmatprep.mubr.bf16.mxu0 0
    %2076 = vmatmul.mubr.bf16.gmra.mrb[0].mxu0 %v457
    %v2077 = vpop.f32.mrb[0].mxu0
    %v2078 = vadd.f32 0.0, %v2077
    %v2079 = vpop.f32.mrb[0].mxu0
    %v2080 = vpop.f32.mrb[0].mxu0
    %v2081 = vadd.f32 0.0, %v2080
    %v2082 = vpop.f32.mrb[0].mxu0
    %2083 = vmatprep.mubr.bf16.mxu0 0
    %2084 = vmatmul.mubr.bf16.gmra.mrb[0].mxu0 %v460
    %v2085 = vpop.f32.mrb[0].mxu0
    %v2086 = vadd.f32 0.0, %v2085
    %v2087 = vpop.f32.mrb[0].mxu0
    %v2088 = vpop.f32.mrb[0].mxu0
    %v2089 = vadd.f32 0.0, %v2088
    %v2090 = vpop.f32.mrb[0].mxu0
    %2091 = vmatprep.mubr.bf16.mxu0 0
    %2092 = vmatmul.mubr.bf16.gmra.mrb[0].mxu0 %v463
    %v2093 = vpop.f32.mrb[0].mxu0
    %v2094 = vadd.f32 0.0, %v2093
    %v2095 = vpop.f32.mrb[0].mxu0
    %v2096 = vpop.f32.mrb[0].mxu0
    %v2097 = vpop.f32.mrb[0].mxu0
    %2098 = vdwg.mxu0
    %s2099 = scalar_lea.vmem [#allocation13], 64
    %v2100 = vld [vmem:[%s2099] sm:$0xff]
    %v2101 = vld [vmem:[%s2099 + $0x8] sm:$0xff]
    %v2102 = vld [vmem:[%s2099 + $0x10] sm:$0xff]
    %v2103 = vld [vmem:[%s2099 + $0x18] sm:$0xff]
    %v2104 = vld [vmem:[%s2099 + $0x20] sm:$0xff]
    %v2105 = vld [vmem:[%s2099 + $0x28] sm:$0xff]
    %v2106 = vld [vmem:[%s2099 + $0x30] sm:$0xff]
    %v2107 = vld [vmem:[%s2099 + $0x38] sm:$0xff]
    %s2108 = scalar_lea.vmem [#allocation14], 64
    %v2109 = vld [vmem:[%s2108] sm:$0xff]
    %v2110 = vld [vmem:[%s2108 + $0x8] sm:$0xff]
    %v2111 = vld [vmem:[%s2108 + $0x10] sm:$0xff]
    %v2112 = vld [vmem:[%s2108 + $0x18] sm:$0xff]
    %v2113 = vld [vmem:[%s2108 + $0x20] sm:$0xff]
    %v2114 = vld [vmem:[%s2108 + $0x28] sm:$0xff]
    %v2115 = vld [vmem:[%s2108 + $0x30] sm:$0xff]
    %v2116 = vld [vmem:[%s2108 + $0x38] sm:$0xff]
    %v2118 = vsel %vm666, %v2078, 0
    %v2121 = vsel %vm666, %v2081, 0
    %v2124 = vsel %vm666, %v2086, 0
    %v2127 = vsel %vm666, %v2089, 0
    %v2130 = vsel %vm666, %v2094, 0
    %2132 = vmatprep.subr.mxu0 %v2110
    %2133 = vmatpush1.msra.mxu0 %v2109
    %2134 = vmatprep.subr.mxu0 %v2112
    %2135 = vmatpush1.msra.mxu0 %v2111
    %2136 = vmatprep.subr.mxu0 %v2114
    %2137 = vmatpush1.msra.mxu0 %v2113
    %2138 = vmatprep.subr.mxu0 %v2116
    %2139 = vmatpush1.msra.mxu0 %v2115
    %2140 = vmatprep.subr.mxu0 0.0
    %2141 = vmatpush1.msra.mxu0 0.0
    %2142 = vmatprep.subr.mxu0 0.0
    %2143 = vmatpush1.msra.mxu0 0.0
    %2144 = vmatprep.subr.mxu0 0.0
    %2145 = vmatpush1.msra.mxu0 0.0
    %2146 = vmatprep.subr.mxu0 0.0
    %2147 = vmatpush1.msra.mxu0 0.0
    %2148 = vmatprep.subr.mxu0 0.0
    %2149 = vmatpush1.msra.mxu0 0.0
    %2150 = vmatprep.subr.mxu0 0.0
    %2151 = vmatpush1.msra.mxu0 0.0
    %2152 = vmatprep.subr.mxu0 0.0
    %2153 = vmatpush1.msra.mxu0 0.0
    %2154 = vmatprep.subr.mxu0 0.0
    %2155 = vmatpush1.msra.mxu0 0.0
    %2156 = vmatprep.subr.mxu0 0.0
    %2157 = vmatpush1.msra.mxu0 0.0
    %2158 = vmatprep.subr.mxu0 0.0
    %2159 = vmatpush1.msra.mxu0 0.0
    %2160 = vmatprep.subr.mxu0 0.0
    %2161 = vmatpush1.msra.mxu0 0.0
    %2162 = vmatprep.subr.mxu0 0.0
    %2163 = vmatpush1.msra.mxu0 0.0
    %2164 = vmatprep.subr.mxu0 0.0
    %2165 = vmatpush1.msra.mxu0 0.0
    %2166 = vmatprep.subr.mxu0 0.0
    %2167 = vmatpush1.msra.mxu0 0.0
    %2168 = vmatprep.subr.mxu0 0.0
    %2169 = vmatpush1.msra.mxu0 0.0
    %2170 = vmatprep.subr.mxu0 0.0
    %2171 = vmatpush1.msra.mxu0 0.0
    %2172 = vmatprep.subr.mxu0 0.0
    %2173 = vmatpush1.msra.mxu0 0.0
    %2174 = vmatprep.subr.mxu0 0.0
    %2175 = vmatpush1.msra.mxu0 0.0
    %2176 = vmatprep.subr.mxu0 0.0
    %2177 = vmatpush1.msra.mxu0 0.0
    %2178 = vmatprep.subr.mxu0 0.0
    %2179 = vmatpush1.msra.mxu0 0.0
    %2180 = vmatprep.subr.mxu0 0.0
    %2181 = vmatpush1.msra.mxu0 0.0
    %2182 = vmatprep.subr.mxu0 0.0
    %2183 = vmatpush1.msra.mxu0 0.0
    %2184 = vmatprep.subr.mxu0 0.0
    %2185 = vmatpush1.msra.mxu0 0.0
    %2186 = vmatprep.subr.mxu0 0.0
    %2187 = vmatpush1.msra.mxu0 0.0
    %2188 = vmatprep.subr.mxu0 0.0
    %2189 = vmatpush1.msra.mxu0 0.0
    %2190 = vmatprep.subr.mxu0 0.0
    %2191 = vmatpush1.msra.mxu0 0.0
    %2192 = vmatprep.subr.mxu0 0.0
    %2193 = vmatpush1.msra.mxu0 0.0
    %2194 = vmatprep.subr.mxu0 0.0
    %2195 = vmatpush1.msra.mxu0 0.0
    %2196 = vmatprep.mubr.f32.mxu0 0.0
    %2197 = vmatmul.mubr.f32.gmra.mrb[0].mxu0 %v2118
    %v2198 = vpop.f32.mrb[0].mxu0
    %v2199 = vadd.f32 0.0, %v2198
    %v2200 = vpop.f32.mrb[0].mxu0
    %v2201 = vadd.f32 0.0, %v2200
    %2202 = vmatprep.mubr.f32.mxu0 0.0
    %2203 = vmatmul.mubr.f32.gmra.mrb[0].mxu0 %v2121
    %v2204 = vpop.f32.mrb[0].mxu0
    %v2205 = vadd.f32 0.0, %v2204
    %v2206 = vpop.f32.mrb[0].mxu0
    %v2207 = vadd.f32 0.0, %v2206
    %2208 = vmatprep.mubr.f32.mxu0 0.0
    %2209 = vmatmul.mubr.f32.gmra.mrb[0].mxu0 %v2124
    %v2210 = vpop.f32.mrb[0].mxu0
    %v2211 = vadd.f32 0.0, %v2210
    %v2212 = vpop.f32.mrb[0].mxu0
    %v2213 = vadd.f32 0.0, %v2212
    %2214 = vmatprep.mubr.f32.mxu0 0.0
    %2215 = vmatmul.mubr.f32.gmra.mrb[0].mxu0 %v2127
    %v2216 = vpop.f32.mrb[0].mxu0
    %v2217 = vadd.f32 0.0, %v2216
    %v2218 = vpop.f32.mrb[0].mxu0
    %v2219 = vadd.f32 0.0, %v2218
    %2220 = vmatprep.mubr.f32.mxu0 0.0
    %2221 = vmatmul.mubr.f32.gmra.mrb[0].mxu0 %v2130
    %v2222 = vpop.f32.mrb[0].mxu0
    %v2223 = vadd.f32 0.0, %v2222
    %v2224 = vpop.f32.mrb[0].mxu0
    %v2225 = vadd.f32 0.0, %v2224
    %2226 = vdwg.mxu0
    %v2228 = vsel %vm666, %v2022, 0
    %v2231 = vsel %vm666, %v2025, 0
    %v2234 = vsel %vm666, %v2030, 0
    %v2237 = vsel %vm666, %v2033, 0
    %v2240 = vsel %vm666, %v2038, 0
    %2242 = vmatprep.subr.mxu0 %v2101
    %2243 = vmatpush1.msra.mxu0 %v2100
    %2244 = vmatprep.subr.mxu0 %v2103
    %2245 = vmatpush1.msra.mxu0 %v2102
    %2246 = vmatprep.subr.mxu0 %v2105
    %2247 = vmatpush1.msra.mxu0 %v2104
    %2248 = vmatprep.subr.mxu0 %v2107
    %2249 = vmatpush1.msra.mxu0 %v2106
    %2250 = vmatprep.subr.mxu0 0.0
    %2251 = vmatpush1.msra.mxu0 0.0
    %2252 = vmatprep.subr.mxu0 0.0
    %2253 = vmatpush1.msra.mxu0 0.0
    %2254 = vmatprep.subr.mxu0 0.0
    %2255 = vmatpush1.msra.mxu0 0.0
    %2256 = vmatprep.subr.mxu0 0.0
    %2257 = vmatpush1.msra.mxu0 0.0
    %2258 = vmatprep.subr.mxu0 0.0
    %2259 = vmatpush1.msra.mxu0 0.0
    %2260 = vmatprep.subr.mxu0 0.0
    %2261 = vmatpush1.msra.mxu0 0.0
    %2262 = vmatprep.subr.mxu0 0.0
    %2263 = vmatpush1.msra.mxu0 0.0
    %2264 = vmatprep.subr.mxu0 0.0
    %2265 = vmatpush1.msra.mxu0 0.0
    %2266 = vmatprep.subr.mxu0 0.0
    %2267 = vmatpush1.msra.mxu0 0.0
    %2268 = vmatprep.subr.mxu0 0.0
    %2269 = vmatpush1.msra.mxu0 0.0
    %2270 = vmatprep.subr.mxu0 0.0
    %2271 = vmatpush1.msra.mxu0 0.0
    %2272 = vmatprep.subr.mxu0 0.0
    %2273 = vmatpush1.msra.mxu0 0.0
    %2274 = vmatprep.subr.mxu0 0.0
    %2275 = vmatpush1.msra.mxu0 0.0
    %2276 = vmatprep.subr.mxu0 0.0
    %2277 = vmatpush1.msra.mxu0 0.0
    %2278 = vmatprep.subr.mxu0 0.0
    %2279 = vmatpush1.msra.mxu0 0.0
    %2280 = vmatprep.subr.mxu0 0.0
    %2281 = vmatpush1.msra.mxu0 0.0
    %2282 = vmatprep.subr.mxu0 0.0
    %2283 = vmatpush1.msra.mxu0 0.0
    %2284 = vmatprep.subr.mxu0 0.0
    %2285 = vmatpush1.msra.mxu0 0.0
    %2286 = vmatprep.subr.mxu0 0.0
    %2287 = vmatpush1.msra.mxu0 0.0
    %2288 = vmatprep.subr.mxu0 0.0
    %2289 = vmatpush1.msra.mxu0 0.0
    %2290 = vmatprep.subr.mxu0 0.0
    %2291 = vmatpush1.msra.mxu0 0.0
    %2292 = vmatprep.subr.mxu0 0.0
    %2293 = vmatpush1.msra.mxu0 0.0
    %2294 = vmatprep.subr.mxu0 0.0
    %2295 = vmatpush1.msra.mxu0 0.0
    %2296 = vmatprep.subr.mxu0 0.0
    %2297 = vmatpush1.msra.mxu0 0.0
    %2298 = vmatprep.subr.mxu0 0.0
    %2299 = vmatpush1.msra.mxu0 0.0
    %2300 = vmatprep.subr.mxu0 0.0
    %2301 = vmatpush1.msra.mxu0 0.0
    %2302 = vmatprep.subr.mxu0 0.0
    %2303 = vmatpush1.msra.mxu0 0.0
    %2304 = vmatprep.subr.mxu0 0.0
    %2305 = vmatpush1.msra.mxu0 0.0
    %2306 = vmatprep.mubr.f32.mxu0 0.0
    %2307 = vmatmul.mubr.f32.gmra.mrb[0].mxu0 %v2228
    %v2308 = vpop.f32.mrb[0].mxu0
    %v2309 = vadd.f32 %v2199, %v2308
    %v2310 = vpop.f32.mrb[0].mxu0
    %v2311 = vadd.f32 %v2201, %v2310
    %2312 = vmatprep.mubr.f32.mxu0 0.0
    %2313 = vmatmul.mubr.f32.gmra.mrb[0].mxu0 %v2231
    %v2314 = vpop.f32.mrb[0].mxu0
    %v2315 = vadd.f32 %v2205, %v2314
    %v2316 = vpop.f32.mrb[0].mxu0
    %v2317 = vadd.f32 %v2207, %v2316
    %2318 = vmatprep.mubr.f32.mxu0 0.0
    %2319 = vmatmul.mubr.f32.gmra.mrb[0].mxu0 %v2234
    %v2320 = vpop.f32.mrb[0].mxu0
    %v2321 = vadd.f32 %v2211, %v2320
    %v2322 = vpop.f32.mrb[0].mxu0
    %v2323 = vadd.f32 %v2213, %v2322
    %2324 = vmatprep.mubr.f32.mxu0 0.0
    %2325 = vmatmul.mubr.f32.gmra.mrb[0].mxu0 %v2237
    %v2326 = vpop.f32.mrb[0].mxu0
    %v2327 = vadd.f32 %v2217, %v2326
    %v2328 = vpop.f32.mrb[0].mxu0
    %v2329 = vadd.f32 %v2219, %v2328
    %2330 = vmatprep.mubr.f32.mxu0 0.0
    %2331 = vmatmul.mubr.f32.gmra.mrb[0].mxu0 %v2240
    %v2332 = vpop.f32.mrb[0].mxu0
    %v2333 = vadd.f32 %v2223, %v2332
    %v2334 = vpop.f32.mrb[0].mxu0
    %v2335 = vadd.f32 %v2225, %v2334
    %2336 = vdwg.mxu0
    %s2337 = scalar_lea.vmem [#allocation16], 2
    %v2338 = vld [vmem:[%s2337] sm:$0x3]
    %v2340 = vlaneseq
    %v2341 = vshrl.u32 %v2340, 7
    %v2342 = vsub.s32 0, %v2341
    %v2343 = vrot.slane %v2338, %v2342
    %v2344 = vlaneseq
    %v2345 = vshrl.u32 %v2344, 7
    %v2346 = vsub.s32 1, %v2345
    %v2347 = vrot.slane %v2338, %v2346
    %v2350 = vadd.f32 %v2309, %v2343
    %v2351 = vadd.f32 %v2311, %v2347
    %v2352 = vadd.f32 %v2315, %v2343
    %v2353 = vadd.f32 %v2317, %v2347
    %v2354 = vadd.f32 %v2321, %v2343
    %v2355 = vadd.f32 %v2323, %v2347
    %v2356 = vadd.f32 %v2327, %v2343
    %v2357 = vadd.f32 %v2329, %v2347
    %v2358 = vadd.f32 %v2333, %v2343
    %v2359 = vadd.f32 %v2335, %v2347
    %v2360 = vmax.f32 %v2350, 0.0
    %v2361 = vmax.f32 %v2351, 0.0
    %v2362 = vmax.f32 %v2352, 0.0
    %v2363 = vmax.f32 %v2353, 0.0
    %v2364 = vmax.f32 %v2354, 0.0
    %v2365 = vmax.f32 %v2355, 0.0
    %v2366 = vmax.f32 %v2356, 0.0
    %v2367 = vmax.f32 %v2357, 0.0
    %v2368 = vmax.f32 %v2358, 0.0
    %v2369 = vmax.f32 %v2359, 0.0
    %s2370 = scalar_lea.vmem [#allocation17], 192
    %v2371 = vld [vmem:[%s2370] sm:$0xff]
    %v2372 = vld [vmem:[%s2370 + $0x8] sm:$0xff]
    %v2373 = vld [vmem:[%s2370 + $0x10] sm:$0xff]
    %v2374 = vld [vmem:[%s2370 + $0x18] sm:$0xff]
    %v2375 = vld [vmem:[%s2370 + $0x20] sm:$0xff]
    %v2376 = vld [vmem:[%s2370 + $0x28] sm:$0xff]
    %v2377 = vld [vmem:[%s2370 + $0x30] sm:$0xff]
    %v2378 = vld [vmem:[%s2370 + $0x38] sm:$0xff]
    %v2379 = vld [vmem:[%s2370 + $0x40] sm:$0xff]
    %v2380 = vld [vmem:[%s2370 + $0x48] sm:$0xff]
    %v2381 = vld [vmem:[%s2370 + $0x50] sm:$0xff]
    %v2382 = vld [vmem:[%s2370 + $0x58] sm:$0xff]
    %v2383 = vld [vmem:[%s2370 + $0x60] sm:$0xff]
    %v2384 = vld [vmem:[%s2370 + $0x68] sm:$0xff]
    %v2385 = vld [vmem:[%s2370 + $0x70] sm:$0xff]
    %v2386 = vld [vmem:[%s2370 + $0x78] sm:$0xff]
    %v2387 = vld [vmem:[%s2370 + $0x80] sm:$0xff]
    %v2388 = vld [vmem:[%s2370 + $0x88] sm:$0xff]
    %v2389 = vld [vmem:[%s2370 + $0x90] sm:$0xff]
    %v2390 = vld [vmem:[%s2370 + $0x98] sm:$0xff]
    %v2391 = vld [vmem:[%s2370 + $0xa0] sm:$0xff]
    %v2392 = vld [vmem:[%s2370 + $0xa8] sm:$0xff]
    %v2393 = vld [vmem:[%s2370 + $0xb0] sm:$0xff]
    %v2394 = vld [vmem:[%s2370 + $0xb8] sm:$0xff]
    %s2395 = scalar_lea.vmem [#allocation19], 1
    %v2396 = vld [vmem:[%s2395] sm:$0x1]
    %v2398 = vlaneseq
    %v2399 = vshrl.u32 %v2398, 7
    %v2400 = vsub.s32 0, %v2399
    %v2401 = vrot.slane %v2396, %v2400
    %v2404 = vsel %vm950, %v2361, 0
    %v2407 = vsel %vm950, %v2363, 0
    %v2410 = vsel %vm950, %v2365, 0
    %v2413 = vsel %vm950, %v2367, 0
    %v2416 = vsel %vm950, %v2369, 0
    %2418 = vmatprep.subr.mxu0 0.0
    %2419 = vmatpush1.msra.mxu0 %v2371
    %2420 = vmatprep.subr.mxu0 0.0
    %2421 = vmatpush1.msra.mxu0 %v2372
    %2422 = vmatprep.subr.mxu0 0.0
    %2423 = vmatpush1.msra.mxu0 %v2373
    %2424 = vmatprep.subr.mxu0 0.0
    %2425 = vmatpush1.msra.mxu0 %v2374
    %2426 = vmatprep.subr.mxu0 0.0
    %2427 = vmatpush1.msra.mxu0 %v2375
    %2428 = vmatprep.subr.mxu0 0.0
    %2429 = vmatpush1.msra.mxu0 %v2376
    %2430 = vmatprep.subr.mxu0 0.0
    %2431 = vmatpush1.msra.mxu0 %v2377
    %2432 = vmatprep.subr.mxu0 0.0
    %2433 = vmatpush1.msra.mxu0 %v2378
    %2434 = vmatprep.subr.mxu0 0.0
    %2435 = vmatpush1.msra.mxu0 %v2379
    %2436 = vmatprep.subr.mxu0 0.0
    %2437 = vmatpush1.msra.mxu0 %v2380
    %2438 = vmatprep.subr.mxu0 0.0
    %2439 = vmatpush1.msra.mxu0 %v2381
    %2440 = vmatprep.subr.mxu0 0.0
    %2441 = vmatpush1.msra.mxu0 %v2382
    %2442 = vmatprep.subr.mxu0 0.0
    %2443 = vmatpush1.msra.mxu0 %v2383
    %2444 = vmatprep.subr.mxu0 0.0
    %2445 = vmatpush1.msra.mxu0 %v2384
    %2446 = vmatprep.subr.mxu0 0.0
    %2447 = vmatpush1.msra.mxu0 %v2385
    %2448 = vmatprep.subr.mxu0 0.0
    %2449 = vmatpush1.msra.mxu0 %v2386
    %2450 = vmatprep.subr.mxu0 0.0
    %2451 = vmatpush1.msra.mxu0 %v2387
    %2452 = vmatprep.subr.mxu0 0.0
    %2453 = vmatpush1.msra.mxu0 %v2388
    %2454 = vmatprep.subr.mxu0 0.0
    %2455 = vmatpush1.msra.mxu0 %v2389
    %2456 = vmatprep.subr.mxu0 0.0
    %2457 = vmatpush1.msra.mxu0 %v2390
    %2458 = vmatprep.subr.mxu0 0.0
    %2459 = vmatpush1.msra.mxu0 %v2391
    %2460 = vmatprep.subr.mxu0 0.0
    %2461 = vmatpush1.msra.mxu0 %v2392
    %2462 = vmatprep.subr.mxu0 0.0
    %2463 = vmatpush1.msra.mxu0 %v2393
    %2464 = vmatprep.subr.mxu0 0.0
    %2465 = vmatpush1.msra.mxu0 %v2394
    %2466 = vmatprep.subr.mxu0 0.0
    %2467 = vmatpush1.msra.mxu0 0.0
    %2468 = vmatprep.subr.mxu0 0.0
    %2469 = vmatpush1.msra.mxu0 0.0
    %2470 = vmatprep.subr.mxu0 0.0
    %2471 = vmatpush1.msra.mxu0 0.0
    %2472 = vmatprep.subr.mxu0 0.0
    %2473 = vmatpush1.msra.mxu0 0.0
    %2474 = vmatprep.subr.mxu0 0.0
    %2475 = vmatpush1.msra.mxu0 0.0
    %2476 = vmatprep.subr.mxu0 0.0
    %2477 = vmatpush1.msra.mxu0 0.0
    %2478 = vmatprep.subr.mxu0 0.0
    %2479 = vmatpush1.msra.mxu0 0.0
    %2480 = vmatprep.subr.mxu0 0.0
    %2481 = vmatpush1.msra.mxu0 0.0
    %2482 = vmatprep.mubr.f32.mxu0 %v2404
    %2483 = vmatmul.mubr.f32.gmra.mrb[0].mxu0 %v2360
    %v2484 = vpop.f32.mrb[0].mxu0
    %v2485 = vadd.f32 %v2401, %v2484
    %v2486 = vpop.f32.mrb[0].mxu0
    %2487 = vmatprep.mubr.f32.mxu0 %v2407
    %2488 = vmatmul.mubr.f32.gmra.mrb[0].mxu0 %v2362
    %v2489 = vpop.f32.mrb[0].mxu0
    %v2490 = vadd.f32 %v2401, %v2489
    %v2491 = vpop.f32.mrb[0].mxu0
    %2492 = vmatprep.mubr.f32.mxu0 %v2410
    %2493 = vmatmul.mubr.f32.gmra.mrb[0].mxu0 %v2364
    %v2494 = vpop.f32.mrb[0].mxu0
    %v2495 = vadd.f32 %v2401, %v2494
    %v2496 = vpop.f32.mrb[0].mxu0
    %2497 = vmatprep.mubr.f32.mxu0 %v2413
    %2498 = vmatmul.mubr.f32.gmra.mrb[0].mxu0 %v2366
    %v2499 = vpop.f32.mrb[0].mxu0
    %v2500 = vadd.f32 %v2401, %v2499
    %v2501 = vpop.f32.mrb[0].mxu0
    %2502 = vmatprep.mubr.f32.mxu0 %v2416
    %2503 = vmatmul.mubr.f32.gmra.mrb[0].mxu0 %v2368
    %v2504 = vpop.f32.mrb[0].mxu0
    %v2505 = vadd.f32 %v2401, %v2504
    %v2506 = vpop.f32.mrb[0].mxu0
    %2507 = vdwg.mxu0
    %2509 = vset.pattern.permute.xlu0 0
    %2510 = vperm.xlu0 %2509, %v2485
    %v2511 = vpop.permute.xlu0 %2510
    %2514 = vset.pattern.permute.xlu0 0
    %2515 = vperm.xlu0 %2514, %v2490
    %v2516 = vpop.permute.xlu0 %2515
    %2519 = vset.pattern.permute.xlu0 0
    %2520 = vperm.xlu0 %2519, %v2495
    %v2521 = vpop.permute.xlu0 %2520
    %2524 = vset.pattern.permute.xlu0 0
    %2525 = vperm.xlu0 %2524, %v2500
    %v2526 = vpop.permute.xlu0 %2525
    %2529 = vset.pattern.permute.xlu0 0
    %2530 = vperm.xlu0 %2529, %v2505
    %v2531 = vpop.permute.xlu0 %2530
    %v2533 = vsel %vm403, %v2511, -1e+30
    %v2534 = vsel %vm404, %v2516, -1e+30
    %v2535 = vsel %vm405, %v2521, -1e+30
    %v2536 = vsel %vm406, %v2526, -1e+30
    %v2537 = vsel %vm407, %v2531, -1e+30
    %v2538 = vsel %vm455, %v2533, -inf
    %v2539 = vsel %vm455, %v2534, -inf
    %v2540 = vsel %vm455, %v2535, -inf
    %v2541 = vsel %vm455, %v2536, -inf
    %v2542 = vsel %vm1090, %v2537, -inf
    %v2543 = vmax.f32 %v2538, %v2542
    %v2544 = vmax.f32 %v2543, %v2539
    %v2545 = vmax.f32 %v2540, %v2541
    %v2546 = vmax.f32 %v2544, %v2545
    %v2547 = vrot.slane %v2546, 4
    %v2548 = vmax.f32 %v2546, %v2547
    %v2549 = vrot.slane %v2548, 2
    %v2550 = vmax.f32 %v2548, %v2549
    %v2551 = vrot.slane %v2550, 1
    %v2552 = vmax.f32 %v2550, %v2551
    %2553 = vset.pattern.permute.xlu0 1
    %2554 = vperm.xlu0 %2553, %v2485
    %v2555 = vpop.permute.xlu0 %2554
    %2557 = vset.pattern.permute.xlu0 1
    %2558 = vperm.xlu0 %2557, %v2490
    %v2559 = vpop.permute.xlu0 %2558
    %2561 = vset.pattern.permute.xlu0 1
    %2562 = vperm.xlu0 %2561, %v2495
    %v2563 = vpop.permute.xlu0 %2562
    %2565 = vset.pattern.permute.xlu0 1
    %2566 = vperm.xlu0 %2565, %v2500
    %v2567 = vpop.permute.xlu0 %2566
    %2569 = vset.pattern.permute.xlu0 1
    %2570 = vperm.xlu0 %2569, %v2505
    %v2571 = vpop.permute.xlu0 %2570
    %v2573 = vsel %vm403, %v2555, -1e+30
    %v2574 = vsel %vm404, %v2559, -1e+30
    %v2575 = vsel %vm405, %v2563, -1e+30
    %v2576 = vsel %vm406, %v2567, -1e+30
    %v2577 = vsel %vm407, %v2571, -1e+30
    %v2578 = vsel %vm455, %v2573, -inf
    %v2579 = vsel %vm455, %v2574, -inf
    %v2580 = vsel %vm455, %v2575, -inf
    %v2581 = vsel %vm455, %v2576, -inf
    %v2582 = vsel %vm1090, %v2577, -inf
    %v2583 = vmax.f32 %v2578, %v2582
    %v2584 = vmax.f32 %v2583, %v2579
    %v2585 = vmax.f32 %v2580, %v2581
    %v2586 = vmax.f32 %v2584, %v2585
    %v2587 = vrot.slane %v2586, 4
    %v2588 = vmax.f32 %v2586, %v2587
    %v2589 = vrot.slane %v2588, 2
    %v2590 = vmax.f32 %v2588, %v2589
    %v2591 = vrot.slane %v2590, 1
    %v2592 = vmax.f32 %v2590, %v2591
    %2593 = vset.pattern.permute.xlu0 2
    %2594 = vperm.xlu0 %2593, %v2485
    %v2595 = vpop.permute.xlu0 %2594
    %2597 = vset.pattern.permute.xlu0 2
    %2598 = vperm.xlu0 %2597, %v2490
    %v2599 = vpop.permute.xlu0 %2598
    %2601 = vset.pattern.permute.xlu0 2
    %2602 = vperm.xlu0 %2601, %v2495
    %v2603 = vpop.permute.xlu0 %2602
    %2605 = vset.pattern.permute.xlu0 2
    %2606 = vperm.xlu0 %2605, %v2500
    %v2607 = vpop.permute.xlu0 %2606
    %2609 = vset.pattern.permute.xlu0 2
    %2610 = vperm.xlu0 %2609, %v2505
    %v2611 = vpop.permute.xlu0 %2610
    %v2613 = vsel %vm403, %v2595, -1e+30
    %v2614 = vsel %vm404, %v2599, -1e+30
    %v2615 = vsel %vm405, %v2603, -1e+30
    %v2616 = vsel %vm406, %v2607, -1e+30
    %v2617 = vsel %vm407, %v2611, -1e+30
    %v2618 = vsel %vm455, %v2613, -inf
    %v2619 = vsel %vm455, %v2614, -inf
    %v2620 = vsel %vm455, %v2615, -inf
    %v2621 = vsel %vm455, %v2616, -inf
    %v2622 = vsel %vm1090, %v2617, -inf
    %v2623 = vmax.f32 %v2618, %v2622
    %v2624 = vmax.f32 %v2623, %v2619
    %v2625 = vmax.f32 %v2620, %v2621
    %v2626 = vmax.f32 %v2624, %v2625
    %v2627 = vrot.slane %v2626, 4
    %v2628 = vmax.f32 %v2626, %v2627
    %v2629 = vrot.slane %v2628, 2
    %v2630 = vmax.f32 %v2628, %v2629
    %v2631 = vrot.slane %v2630, 1
    %v2632 = vmax.f32 %v2630, %v2631
    %v2633 = vsel %vm1182, %v2552, %v2592
    %v2634 = vsel %vm1184, %v2633, %v2632
    %v2635 = vpack.c.bf16 %v2634, %v2634
    %v2637 = vsel %vm455, %v2635, 0
    %2639 = vmatprep.subr.bf16.mxu0 0
    %2640 = vmatpush1.bf16.xpose.msra.mxu0 %v2637
    %2641 = vmatprep.subr.bf16.mxu0 0
    %2642 = vmatpush1.bf16.xpose.msra.mxu0 0
    %2643 = vmatprep.subr.bf16.mxu0 0
    %2644 = vmatpush1.bf16.xpose.msra.mxu0 0
    %2645 = vmatprep.subr.bf16.mxu0 0
    %2646 = vmatpush1.bf16.xpose.msra.mxu0 0
    %2647 = vmatprep.subr.bf16.mxu0 0
    %2648 = vmatpush1.bf16.xpose.msra.mxu0 0
    %2649 = vmatprep.subr.bf16.mxu0 0
    %2650 = vmatpush1.bf16.xpose.msra.mxu0 0
    %2651 = vmatprep.subr.bf16.mxu0 0
    %2652 = vmatpush1.bf16.xpose.msra.mxu0 0
    %2653 = vmatprep.subr.bf16.mxu0 0
    %2654 = vmatpush1.bf16.xpose.msra.mxu0 0
    %2655 = vmatprep.subr.bf16.mxu0 0
    %2656 = vmatpush1.bf16.xpose.msra.mxu0 0
    %2657 = vmatprep.subr.bf16.mxu0 0
    %2658 = vmatpush1.bf16.xpose.msra.mxu0 0
    %2659 = vmatprep.subr.bf16.mxu0 0
    %2660 = vmatpush1.bf16.xpose.msra.mxu0 0
    %2661 = vmatprep.subr.bf16.mxu0 0
    %2662 = vmatpush1.bf16.xpose.msra.mxu0 0
    %2663 = vmatprep.subr.bf16.mxu0 0
    %2664 = vmatpush1.bf16.xpose.msra.mxu0 0
    %2665 = vmatprep.subr.bf16.mxu0 0
    %2666 = vmatpush1.bf16.xpose.msra.mxu0 0
    %2667 = vmatprep.subr.bf16.mxu0 0
    %2668 = vmatpush1.bf16.xpose.msra.mxu0 0
    %2669 = vmatprep.subr.bf16.mxu0 0
    %2670 = vmatpush1.bf16.xpose.msra.mxu0 0
    %2671 = vmatprep.mubr.bf16.mxu0 0
    %2672 = vmatmul.mubr.bf16.gmra.mrb[0].mxu0 %v527
    %v2673 = vpop.f32.mrb[0].mxu0
    %v2674 = vadd.f32 0.0, %v2673
    %v2675 = vpop.f32.mrb[0].mxu0
    %v2676 = vpop.f32.mrb[0].mxu0
    %v2677 = vadd.f32 0.0, %v2676
    %v2678 = vpop.f32.mrb[0].mxu0
    %2679 = vmatprep.mubr.bf16.mxu0 0
    %2680 = vmatmul.mubr.bf16.gmra.mrb[0].mxu0 %v530
    %v2681 = vpop.f32.mrb[0].mxu0
    %v2682 = vadd.f32 0.0, %v2681
    %v2683 = vpop.f32.mrb[0].mxu0
    %v2684 = vpop.f32.mrb[0].mxu0
    %v2685 = vadd.f32 0.0, %v2684
    %v2686 = vpop.f32.mrb[0].mxu0
    %2687 = vmatprep.mubr.bf16.mxu0 0
    %2688 = vmatmul.mubr.bf16.gmra.mrb[0].mxu0 %v533
    %v2689 = vpop.f32.mrb[0].mxu0
    %v2690 = vadd.f32 0.0, %v2689
    %v2691 = vpop.f32.mrb[0].mxu0
    %v2692 = vpop.f32.mrb[0].mxu0
    %v2693 = vpop.f32.mrb[0].mxu0
    %2694 = vdwg.mxu0
    %v2695 = vsub.f32 %v2485, %v2674
    %v2696 = vsub.f32 %v2490, %v2677
    %v2697 = vsub.f32 %v2495, %v2682
    %v2698 = vsub.f32 %v2500, %v2685
    %v2699 = vsub.f32 %v2505, %v2690
    %v2700 = vmul.f32 %v2695, 1.442695
    %v2701 = vpow.pop %v2700
    %v2702 = vmul.f32 %v2696, 1.442695
    %v2703 = vpow.pop %v2702
    %v2704 = vmul.f32 %v2697, 1.442695
    %v2705 = vpow.pop %v2704
    %v2706 = vmul.f32 %v2698, 1.442695
    %v2707 = vpow.pop %v2706
    %v2708 = vmul.f32 %v2699, 1.442695
    %v2709 = vpow.pop %v2708
    %v2710 = vmul.f32 %v1264, %v2701
    %v2711 = vmul.f32 %v1269, %v2703
    %v2712 = vmul.f32 %v1274, %v2705
    %v2713 = vmul.f32 %v1279, %v2707
    %v2714 = vmul.f32 %v1284, %v2709
    %v2715 = vpack.c.bf16 %v2711, %v2710
    %v2716 = vpack.c.bf16 %v2713, %v2712
    %v2717 = vpack.c.bf16 %v2714, %v2714
    %v2719 = vsel %vm1182, %v2717, 0
    %2721 = vmatprep.subr.bf16.mxu0 0
    %2722 = vmatpush1.bf16.msra.mxu0 %v2715
    %2723 = vmatprep.subr.bf16.mxu0 0
    %2724 = vmatpush1.bf16.msra.mxu0 %v2716
    %2725 = vmatprep.subr.bf16.mxu0 0
    %2726 = vmatpush1.bf16.msra.mxu0 %v2719
    %2727 = vmatprep.subr.bf16.mxu0 0
    %2728 = vmatpush1.bf16.msra.mxu0 0
    %2729 = vmatprep.subr.bf16.mxu0 0
    %2730 = vmatpush1.bf16.msra.mxu0 0
    %2731 = vmatprep.subr.bf16.mxu0 0
    %2732 = vmatpush1.bf16.msra.mxu0 0
    %2733 = vmatprep.subr.bf16.mxu0 0
    %2734 = vmatpush1.bf16.msra.mxu0 0
    %2735 = vmatprep.subr.bf16.mxu0 0
    %2736 = vmatpush1.bf16.msra.mxu0 0
    %2737 = vmatprep.subr.bf16.mxu0 0
    %2738 = vmatpush1.bf16.msra.mxu0 0
    %2739 = vmatprep.subr.bf16.mxu0 0
    %2740 = vmatpush1.bf16.msra.mxu0 0
    %2741 = vmatprep.subr.bf16.mxu0 0
    %2742 = vmatpush1.bf16.msra.mxu0 0
    %2743 = vmatprep.subr.bf16.mxu0 0
    %2744 = vmatpush1.bf16.msra.mxu0 0
    %2745 = vmatprep.subr.bf16.mxu0 0
    %2746 = vmatpush1.bf16.msra.mxu0 0
    %2747 = vmatprep.subr.bf16.mxu0 0
    %2748 = vmatpush1.bf16.msra.mxu0 0
    %2749 = vmatprep.subr.bf16.mxu0 0
    %2750 = vmatpush1.bf16.msra.mxu0 0
    %2751 = vmatprep.subr.bf16.mxu0 0
    %2752 = vmatpush1.bf16.msra.mxu0 0
    %2753 = vmatprep.mubr.bf16.mxu0 0
    %2754 = vmatmul.mubr.bf16.gmra.mrb[0].mxu0 %v1312
    %v2755 = vpop.f32.mrb[0].mxu0
    %v2756 = vadd.f32 0.0, %v2755
    %v2757 = vpop.f32.mrb[0].mxu0
    %v2758 = vpop.f32.mrb[0].mxu0
    %v2759 = vadd.f32 0.0, %v2758
    %v2760 = vpop.f32.mrb[0].mxu0
    %2761 = vdwg.mxu0
    %v2762 = vpack.c.bf16 %v2759, %v2756
    %v2764 = vsel %vm465, %v2762, 0
    %2766 = vmatprep.subr.bf16.mxu0 0
    %2767 = vmatpush1.bf16.msra.mxu0 %v2764
    %2768 = vmatprep.subr.bf16.mxu0 0
    %2769 = vmatpush1.bf16.msra.mxu0 0
    %2770 = vmatprep.subr.bf16.mxu0 0
    %2771 = vmatpush1.bf16.msra.mxu0 0
    %2772 = vmatprep.subr.bf16.mxu0 0
    %2773 = vmatpush1.bf16.msra.mxu0 0
    %2774 = vmatprep.subr.bf16.mxu0 0
    %2775 = vmatpush1.bf16.msra.mxu0 0
    %2776 = vmatprep.subr.bf16.mxu0 0
    %2777 = vmatpush1.bf16.msra.mxu0 0
    %2778 = vmatprep.subr.bf16.mxu0 0
    %2779 = vmatpush1.bf16.msra.mxu0 0
    %2780 = vmatprep.subr.bf16.mxu0 0
    %2781 = vmatpush1.bf16.msra.mxu0 0
    %2782 = vmatprep.subr.bf16.mxu0 0
    %2783 = vmatpush1.bf16.msra.mxu0 0
    %2784 = vmatprep.subr.bf16.mxu0 0
    %2785 = vmatpush1.bf16.msra.mxu0 0
    %2786 = vmatprep.subr.bf16.mxu0 0
    %2787 = vmatpush1.bf16.msra.mxu0 0
    %2788 = vmatprep.subr.bf16.mxu0 0
    %2789 = vmatpush1.bf16.msra.mxu0 0
    %2790 = vmatprep.subr.bf16.mxu0 0
    %2791 = vmatpush1.bf16.msra.mxu0 0
    %2792 = vmatprep.subr.bf16.mxu0 0
    %2793 = vmatpush1.bf16.msra.mxu0 0
    %2794 = vmatprep.subr.bf16.mxu0 0
    %2795 = vmatpush1.bf16.msra.mxu0 0
    %2796 = vmatprep.subr.bf16.mxu0 0
    %2797 = vmatpush1.bf16.msra.mxu0 0
    %2798 = vmatprep.mubr.bf16.mxu0 0
    %2799 = vmatmul.mubr.bf16.gmra.mrb[0].mxu0 %v527
    %v2800 = vpop.f32.mrb[0].mxu0
    %v2801 = vadd.f32 1e-10, %v2800
    %v2802 = vpop.f32.mrb[0].mxu0
    %v2803 = vpop.f32.mrb[0].mxu0
    %v2804 = vadd.f32 1e-10, %v2803
    %v2805 = vpop.f32.mrb[0].mxu0
    %2806 = vmatprep.mubr.bf16.mxu0 0
    %2807 = vmatmul.mubr.bf16.gmra.mrb[0].mxu0 %v530
    %v2808 = vpop.f32.mrb[0].mxu0
    %v2809 = vadd.f32 1e-10, %v2808
    %v2810 = vpop.f32.mrb[0].mxu0
    %v2811 = vpop.f32.mrb[0].mxu0
    %v2812 = vadd.f32 1e-10, %v2811
    %v2813 = vpop.f32.mrb[0].mxu0
    %2814 = vmatprep.mubr.bf16.mxu0 0
    %2815 = vmatmul.mubr.bf16.gmra.mrb[0].mxu0 %v533
    %v2816 = vpop.f32.mrb[0].mxu0
    %v2817 = vadd.f32 1e-10, %v2816
    %v2818 = vpop.f32.mrb[0].mxu0
    %v2819 = vpop.f32.mrb[0].mxu0
    %v2820 = vpop.f32.mrb[0].mxu0
    %2821 = vdwg.mxu0
    %v2822 = vrcp.pop %v2801
    %v2823 = vrcp.pop %v2804
    %v2824 = vrcp.pop %v2809
    %v2825 = vrcp.pop %v2812
    %v2826 = vrcp.pop %v2817
    %v2827 = vmul.f32 %v2710, %v2822
    %v2828 = vmul.f32 %v2711, %v2823
    %v2829 = vmul.f32 %v2712, %v2824
    %v2830 = vmul.f32 %v2713, %v2825
    %v2831 = vmul.f32 %v2714, %v2826
    %s2832 = scalar_lea.vmem [#allocation20], 64
    %v2833 = vld [vmem:[%s2832] sm:$0xff]
    %v2834 = vld [vmem:[%s2832 + $0x8] sm:$0xff]
    %v2835 = vld [vmem:[%s2832 + $0x10] sm:$0xff]
    %v2836 = vld [vmem:[%s2832 + $0x18] sm:$0xff]
    %v2837 = vld [vmem:[%s2832 + $0x20] sm:$0xff]
    %v2838 = vld [vmem:[%s2832 + $0x28] sm:$0xff]
    %v2839 = vld [vmem:[%s2832 + $0x30] sm:$0xff]
    %v2840 = vld [vmem:[%s2832 + $0x38] sm:$0xff]
    %s2841 = scalar_lea.vmem [#allocation22], 64
    %v2842 = vld [vmem:[%s2841] sm:$0xff]
    %v2843 = vld [vmem:[%s2841 + $0x8] sm:$0xff]
    %v2844 = vld [vmem:[%s2841 + $0x10] sm:$0xff]
    %v2845 = vld [vmem:[%s2841 + $0x18] sm:$0xff]
    %v2846 = vld [vmem:[%s2841 + $0x20] sm:$0xff]
    %v2847 = vld [vmem:[%s2841 + $0x28] sm:$0xff]
    %v2848 = vld [vmem:[%s2841 + $0x30] sm:$0xff]
    %v2849 = vld [vmem:[%s2841 + $0x38] sm:$0xff]
    %2850 = vmatprep.subr.mxu0 %v2843
    %2851 = vmatpush1.msra.mxu0 %v2842
    %2852 = vmatprep.subr.mxu0 %v2845
    %2853 = vmatpush1.msra.mxu0 %v2844
    %2854 = vmatprep.subr.mxu0 %v2847
    %2855 = vmatpush1.msra.mxu0 %v2846
    %2856 = vmatprep.subr.mxu0 %v2849
    %2857 = vmatpush1.msra.mxu0 %v2848
    %2858 = vmatprep.subr.mxu0 0.0
    %2859 = vmatpush1.msra.mxu0 0.0
    %2860 = vmatprep.subr.mxu0 0.0
    %2861 = vmatpush1.msra.mxu0 0.0
    %2862 = vmatprep.subr.mxu0 0.0
    %2863 = vmatpush1.msra.mxu0 0.0
    %2864 = vmatprep.subr.mxu0 0.0
    %2865 = vmatpush1.msra.mxu0 0.0
    %2866 = vmatprep.subr.mxu0 0.0
    %2867 = vmatpush1.msra.mxu0 0.0
    %2868 = vmatprep.subr.mxu0 0.0
    %2869 = vmatpush1.msra.mxu0 0.0
    %2870 = vmatprep.subr.mxu0 0.0
    %2871 = vmatpush1.msra.mxu0 0.0
    %2872 = vmatprep.subr.mxu0 0.0
    %2873 = vmatpush1.msra.mxu0 0.0
    %2874 = vmatprep.subr.mxu0 0.0
    %2875 = vmatpush1.msra.mxu0 0.0
    %2876 = vmatprep.subr.mxu0 0.0
    %2877 = vmatpush1.msra.mxu0 0.0
    %2878 = vmatprep.subr.mxu0 0.0
    %2879 = vmatpush1.msra.mxu0 0.0
    %2880 = vmatprep.subr.mxu0 0.0
    %2881 = vmatpush1.msra.mxu0 0.0
    %2882 = vmatprep.subr.mxu0 0.0
    %2883 = vmatpush1.msra.mxu0 0.0
    %2884 = vmatprep.subr.mxu0 0.0
    %2885 = vmatpush1.msra.mxu0 0.0
    %2886 = vmatprep.subr.mxu0 0.0
    %2887 = vmatpush1.msra.mxu0 0.0
    %2888 = vmatprep.subr.mxu0 0.0
    %2889 = vmatpush1.msra.mxu0 0.0
    %2890 = vmatprep.subr.mxu0 0.0
    %2891 = vmatpush1.msra.mxu0 0.0
    %2892 = vmatprep.subr.mxu0 0.0
    %2893 = vmatpush1.msra.mxu0 0.0
    %2894 = vmatprep.subr.mxu0 0.0
    %2895 = vmatpush1.msra.mxu0 0.0
    %2896 = vmatprep.subr.mxu0 0.0
    %2897 = vmatpush1.msra.mxu0 0.0
    %2898 = vmatprep.subr.mxu0 0.0
    %2899 = vmatpush1.msra.mxu0 0.0
    %2900 = vmatprep.subr.mxu0 0.0
    %2901 = vmatpush1.msra.mxu0 0.0
    %2902 = vmatprep.subr.mxu0 0.0
    %2903 = vmatpush1.msra.mxu0 0.0
    %2904 = vmatprep.subr.mxu0 0.0
    %2905 = vmatpush1.msra.mxu0 0.0
    %2906 = vmatprep.subr.mxu0 0.0
    %2907 = vmatpush1.msra.mxu0 0.0
    %2908 = vmatprep.subr.mxu0 0.0
    %2909 = vmatpush1.msra.mxu0 0.0
    %2910 = vmatprep.subr.mxu0 0.0
    %2911 = vmatpush1.msra.mxu0 0.0
    %2912 = vmatprep.subr.mxu0 0.0
    %2913 = vmatpush1.msra.mxu0 0.0
    %2914 = vmatprep.mubr.f32.mxu0 0.0
    %2915 = vmatmul.mubr.f32.gmra.mrb[0].mxu0 %v2118
    %v2916 = vpop.f32.mrb[0].mxu0
    %v2917 = vadd.f32 0.0, %v2916
    %v2918 = vpop.f32.mrb[0].mxu0
    %v2919 = vadd.f32 0.0, %v2918
    %2920 = vmatprep.mubr.f32.mxu0 0.0
    %2921 = vmatmul.mubr.f32.gmra.mrb[0].mxu0 %v2121
    %v2922 = vpop.f32.mrb[0].mxu0
    %v2923 = vadd.f32 0.0, %v2922
    %v2924 = vpop.f32.mrb[0].mxu0
    %v2925 = vadd.f32 0.0, %v2924
    %2926 = vmatprep.mubr.f32.mxu0 0.0
    %2927 = vmatmul.mubr.f32.gmra.mrb[0].mxu0 %v2124
    %v2928 = vpop.f32.mrb[0].mxu0
    %v2929 = vadd.f32 0.0, %v2928
    %v2930 = vpop.f32.mrb[0].mxu0
    %v2931 = vadd.f32 0.0, %v2930
    %2932 = vmatprep.mubr.f32.mxu0 0.0
    %2933 = vmatmul.mubr.f32.gmra.mrb[0].mxu0 %v2127
    %v2934 = vpop.f32.mrb[0].mxu0
    %v2935 = vadd.f32 0.0, %v2934
    %v2936 = vpop.f32.mrb[0].mxu0
    %v2937 = vadd.f32 0.0, %v2936
    %2938 = vmatprep.mubr.f32.mxu0 0.0
    %2939 = vmatmul.mubr.f32.gmra.mrb[0].mxu0 %v2130
    %v2940 = vpop.f32.mrb[0].mxu0
    %v2941 = vadd.f32 0.0, %v2940
    %v2942 = vpop.f32.mrb[0].mxu0
    %v2943 = vadd.f32 0.0, %v2942
    %2944 = vdwg.mxu0
    %2945 = vmatprep.subr.mxu0 %v2834
    %2946 = vmatpush1.msra.mxu0 %v2833
    %2947 = vmatprep.subr.mxu0 %v2836
    %2948 = vmatpush1.msra.mxu0 %v2835
    %2949 = vmatprep.subr.mxu0 %v2838
    %2950 = vmatpush1.msra.mxu0 %v2837
    %2951 = vmatprep.subr.mxu0 %v2840
    %2952 = vmatpush1.msra.mxu0 %v2839
    %2953 = vmatprep.subr.mxu0 0.0
    %2954 = vmatpush1.msra.mxu0 0.0
    %2955 = vmatprep.subr.mxu0 0.0
    %2956 = vmatpush1.msra.mxu0 0.0
    %2957 = vmatprep.subr.mxu0 0.0
    %2958 = vmatpush1.msra.mxu0 0.0
    %2959 = vmatprep.subr.mxu0 0.0
    %2960 = vmatpush1.msra.mxu0 0.0
    %2961 = vmatprep.subr.mxu0 0.0
    %2962 = vmatpush1.msra.mxu0 0.0
    %2963 = vmatprep.subr.mxu0 0.0
    %2964 = vmatpush1.msra.mxu0 0.0
    %2965 = vmatprep.subr.mxu0 0.0
    %2966 = vmatpush1.msra.mxu0 0.0
    %2967 = vmatprep.subr.mxu0 0.0
    %2968 = vmatpush1.msra.mxu0 0.0
    %2969 = vmatprep.subr.mxu0 0.0
    %2970 = vmatpush1.msra.mxu0 0.0
    %2971 = vmatprep.subr.mxu0 0.0
    %2972 = vmatpush1.msra.mxu0 0.0
    %2973 = vmatprep.subr.mxu0 0.0
    %2974 = vmatpush1.msra.mxu0 0.0
    %2975 = vmatprep.subr.mxu0 0.0
    %2976 = vmatpush1.msra.mxu0 0.0
    %2977 = vmatprep.subr.mxu0 0.0
    %2978 = vmatpush1.msra.mxu0 0.0
    %2979 = vmatprep.subr.mxu0 0.0
    %2980 = vmatpush1.msra.mxu0 0.0
    %2981 = vmatprep.subr.mxu0 0.0
    %2982 = vmatpush1.msra.mxu0 0.0
    %2983 = vmatprep.subr.mxu0 0.0
    %2984 = vmatpush1.msra.mxu0 0.0
    %2985 = vmatprep.subr.mxu0 0.0
    %2986 = vmatpush1.msra.mxu0 0.0
    %2987 = vmatprep.subr.mxu0 0.0
    %2988 = vmatpush1.msra.mxu0 0.0
    %2989 = vmatprep.subr.mxu0 0.0
    %2990 = vmatpush1.msra.mxu0 0.0
    %2991 = vmatprep.subr.mxu0 0.0
    %2992 = vmatpush1.msra.mxu0 0.0
    %2993 = vmatprep.subr.mxu0 0.0
    %2994 = vmatpush1.msra.mxu0 0.0
    %2995 = vmatprep.subr.mxu0 0.0
    %2996 = vmatpush1.msra.mxu0 0.0
    %2997 = vmatprep.subr.mxu0 0.0
    %2998 = vmatpush1.msra.mxu0 0.0
    %2999 = vmatprep.subr.mxu0 0.0
    %3000 = vmatpush1.msra.mxu0 0.0
    %3001 = vmatprep.subr.mxu0 0.0
    %3002 = vmatpush1.msra.mxu0 0.0
    %3003 = vmatprep.subr.mxu0 0.0
    %3004 = vmatpush1.msra.mxu0 0.0
    %3005 = vmatprep.subr.mxu0 0.0
    %3006 = vmatpush1.msra.mxu0 0.0
    %3007 = vmatprep.subr.mxu0 0.0
    %3008 = vmatpush1.msra.mxu0 0.0
    %3009 = vmatprep.mubr.f32.mxu0 0.0
    %3010 = vmatmul.mubr.f32.gmra.mrb[0].mxu0 %v2228
    %v3011 = vpop.f32.mrb[0].mxu0
    %v3012 = vadd.f32 %v2917, %v3011
    %v3013 = vpop.f32.mrb[0].mxu0
    %v3014 = vadd.f32 %v2919, %v3013
    %3015 = vmatprep.mubr.f32.mxu0 0.0
    %3016 = vmatmul.mubr.f32.gmra.mrb[0].mxu0 %v2231
    %v3017 = vpop.f32.mrb[0].mxu0
    %v3018 = vadd.f32 %v2923, %v3017
    %v3019 = vpop.f32.mrb[0].mxu0
    %v3020 = vadd.f32 %v2925, %v3019
    %3021 = vmatprep.mubr.f32.mxu0 0.0
    %3022 = vmatmul.mubr.f32.gmra.mrb[0].mxu0 %v2234
    %v3023 = vpop.f32.mrb[0].mxu0
    %v3024 = vadd.f32 %v2929, %v3023
    %v3025 = vpop.f32.mrb[0].mxu0
    %v3026 = vadd.f32 %v2931, %v3025
    %3027 = vmatprep.mubr.f32.mxu0 0.0
    %3028 = vmatmul.mubr.f32.gmra.mrb[0].mxu0 %v2237
    %v3029 = vpop.f32.mrb[0].mxu0
    %v3030 = vadd.f32 %v2935, %v3029
    %v3031 = vpop.f32.mrb[0].mxu0
    %v3032 = vadd.f32 %v2937, %v3031
    %3033 = vmatprep.mubr.f32.mxu0 0.0
    %3034 = vmatmul.mubr.f32.gmra.mrb[0].mxu0 %v2240
    %v3035 = vpop.f32.mrb[0].mxu0
    %v3036 = vadd.f32 %v2941, %v3035
    %v3037 = vpop.f32.mrb[0].mxu0
    %v3038 = vadd.f32 %v2943, %v3037
    %3039 = vdwg.mxu0
    %s3040 = scalar_lea.vmem [#allocation23], 2
    %v3041 = vld [vmem:[%s3040] sm:$0x3]
    %v3043 = vlaneseq
    %v3044 = vshrl.u32 %v3043, 7
    %v3045 = vsub.s32 0, %v3044
    %v3046 = vrot.slane %v3041, %v3045
    %v3047 = vlaneseq
    %v3048 = vshrl.u32 %v3047, 7
    %v3049 = vsub.s32 1, %v3048
    %v3050 = vrot.slane %v3041, %v3049
    %v3053 = vadd.f32 %v3012, %v3046
    %v3054 = vadd.f32 %v3014, %v3050
    %v3055 = vadd.f32 %v3018, %v3046
    %v3056 = vadd.f32 %v3020, %v3050
    %v3057 = vadd.f32 %v3024, %v3046
    %v3058 = vadd.f32 %v3026, %v3050
    %v3059 = vadd.f32 %v3030, %v3046
    %v3060 = vadd.f32 %v3032, %v3050
    %v3061 = vadd.f32 %v3036, %v3046
    %v3062 = vadd.f32 %v3038, %v3050
    %v3063 = vmax.f32 %v3053, 0.0
    %v3064 = vmax.f32 %v3054, 0.0
    %v3065 = vmax.f32 %v3055, 0.0
    %v3066 = vmax.f32 %v3056, 0.0
    %v3067 = vmax.f32 %v3057, 0.0
    %v3068 = vmax.f32 %v3058, 0.0
    %v3069 = vmax.f32 %v3059, 0.0
    %v3070 = vmax.f32 %v3060, 0.0
    %v3071 = vmax.f32 %v3061, 0.0
    %v3072 = vmax.f32 %v3062, 0.0
    %s3073 = scalar_lea.vmem [#allocation25], 192
    %v3074 = vld [vmem:[%s3073] sm:$0xff]
    %v3075 = vld [vmem:[%s3073 + $0x8] sm:$0xff]
    %v3076 = vld [vmem:[%s3073 + $0x10] sm:$0xff]
    %v3077 = vld [vmem:[%s3073 + $0x18] sm:$0xff]
    %v3078 = vld [vmem:[%s3073 + $0x20] sm:$0xff]
    %v3079 = vld [vmem:[%s3073 + $0x28] sm:$0xff]
    %v3080 = vld [vmem:[%s3073 + $0x30] sm:$0xff]
    %v3081 = vld [vmem:[%s3073 + $0x38] sm:$0xff]
    %v3082 = vld [vmem:[%s3073 + $0x40] sm:$0xff]
    %v3083 = vld [vmem:[%s3073 + $0x48] sm:$0xff]
    %v3084 = vld [vmem:[%s3073 + $0x50] sm:$0xff]
    %v3085 = vld [vmem:[%s3073 + $0x58] sm:$0xff]
    %v3086 = vld [vmem:[%s3073 + $0x60] sm:$0xff]
    %v3087 = vld [vmem:[%s3073 + $0x68] sm:$0xff]
    %v3088 = vld [vmem:[%s3073 + $0x70] sm:$0xff]
    %v3089 = vld [vmem:[%s3073 + $0x78] sm:$0xff]
    %v3090 = vld [vmem:[%s3073 + $0x80] sm:$0xff]
    %v3091 = vld [vmem:[%s3073 + $0x88] sm:$0xff]
    %v3092 = vld [vmem:[%s3073 + $0x90] sm:$0xff]
    %v3093 = vld [vmem:[%s3073 + $0x98] sm:$0xff]
    %v3094 = vld [vmem:[%s3073 + $0xa0] sm:$0xff]
    %v3095 = vld [vmem:[%s3073 + $0xa8] sm:$0xff]
    %v3096 = vld [vmem:[%s3073 + $0xb0] sm:$0xff]
    %v3097 = vld [vmem:[%s3073 + $0xb8] sm:$0xff]
    %s3098 = scalar_lea.vmem [#allocation26], 1
    %v3099 = vld [vmem:[%s3098] sm:$0x1]
    %v3101 = vlaneseq
    %v3102 = vshrl.u32 %v3101, 7
    %v3103 = vsub.s32 0, %v3102
    %v3104 = vrot.slane %v3099, %v3103
    %v3107 = vsel %vm950, %v3064, 0
    %v3110 = vsel %vm950, %v3066, 0
    %v3113 = vsel %vm950, %v3068, 0
    %v3116 = vsel %vm950, %v3070, 0
    %v3119 = vsel %vm950, %v3072, 0
    %3121 = vmatprep.subr.mxu0 0.0
    %3122 = vmatpush1.msra.mxu0 %v3074
    %3123 = vmatprep.subr.mxu0 0.0
    %3124 = vmatpush1.msra.mxu0 %v3075
    %3125 = vmatprep.subr.mxu0 0.0
    %3126 = vmatpush1.msra.mxu0 %v3076
    %3127 = vmatprep.subr.mxu0 0.0
    %3128 = vmatpush1.msra.mxu0 %v3077
    %3129 = vmatprep.subr.mxu0 0.0
    %3130 = vmatpush1.msra.mxu0 %v3078
    %3131 = vmatprep.subr.mxu0 0.0
    %3132 = vmatpush1.msra.mxu0 %v3079
    %3133 = vmatprep.subr.mxu0 0.0
    %3134 = vmatpush1.msra.mxu0 %v3080
    %3135 = vmatprep.subr.mxu0 0.0
    %3136 = vmatpush1.msra.mxu0 %v3081
    %3137 = vmatprep.subr.mxu0 0.0
    %3138 = vmatpush1.msra.mxu0 %v3082
    %3139 = vmatprep.subr.mxu0 0.0
    %3140 = vmatpush1.msra.mxu0 %v3083
    %3141 = vmatprep.subr.mxu0 0.0
    %3142 = vmatpush1.msra.mxu0 %v3084
    %3143 = vmatprep.subr.mxu0 0.0
    %3144 = vmatpush1.msra.mxu0 %v3085
    %3145 = vmatprep.subr.mxu0 0.0
    %3146 = vmatpush1.msra.mxu0 %v3086
    %3147 = vmatprep.subr.mxu0 0.0
    %3148 = vmatpush1.msra.mxu0 %v3087
    %3149 = vmatprep.subr.mxu0 0.0
    %3150 = vmatpush1.msra.mxu0 %v3088
    %3151 = vmatprep.subr.mxu0 0.0
    %3152 = vmatpush1.msra.mxu0 %v3089
    %3153 = vmatprep.subr.mxu0 0.0
    %3154 = vmatpush1.msra.mxu0 %v3090
    %3155 = vmatprep.subr.mxu0 0.0
    %3156 = vmatpush1.msra.mxu0 %v3091
    %3157 = vmatprep.subr.mxu0 0.0
    %3158 = vmatpush1.msra.mxu0 %v3092
    %3159 = vmatprep.subr.mxu0 0.0
    %3160 = vmatpush1.msra.mxu0 %v3093
    %3161 = vmatprep.subr.mxu0 0.0
    %3162 = vmatpush1.msra.mxu0 %v3094
    %3163 = vmatprep.subr.mxu0 0.0
    %3164 = vmatpush1.msra.mxu0 %v3095
    %3165 = vmatprep.subr.mxu0 0.0
    %3166 = vmatpush1.msra.mxu0 %v3096
    %3167 = vmatprep.subr.mxu0 0.0
    %3168 = vmatpush1.msra.mxu0 %v3097
    %3169 = vmatprep.subr.mxu0 0.0
    %3170 = vmatpush1.msra.mxu0 0.0
    %3171 = vmatprep.subr.mxu0 0.0
    %3172 = vmatpush1.msra.mxu0 0.0
    %3173 = vmatprep.subr.mxu0 0.0
    %3174 = vmatpush1.msra.mxu0 0.0
    %3175 = vmatprep.subr.mxu0 0.0
    %3176 = vmatpush1.msra.mxu0 0.0
    %3177 = vmatprep.subr.mxu0 0.0
    %3178 = vmatpush1.msra.mxu0 0.0
    %3179 = vmatprep.subr.mxu0 0.0
    %3180 = vmatpush1.msra.mxu0 0.0
    %3181 = vmatprep.subr.mxu0 0.0
    %3182 = vmatpush1.msra.mxu0 0.0
    %3183 = vmatprep.subr.mxu0 0.0
    %3184 = vmatpush1.msra.mxu0 0.0
    %3185 = vmatprep.mubr.f32.mxu0 %v3107
    %3186 = vmatmul.mubr.f32.gmra.mrb[0].mxu0 %v3063
    %v3187 = vpop.f32.mrb[0].mxu0
    %v3188 = vadd.f32 %v3104, %v3187
    %v3189 = vpop.f32.mrb[0].mxu0
    %3190 = vmatprep.mubr.f32.mxu0 %v3110
    %3191 = vmatmul.mubr.f32.gmra.mrb[0].mxu0 %v3065
    %v3192 = vpop.f32.mrb[0].mxu0
    %v3193 = vadd.f32 %v3104, %v3192
    %v3194 = vpop.f32.mrb[0].mxu0
    %3195 = vmatprep.mubr.f32.mxu0 %v3113
    %3196 = vmatmul.mubr.f32.gmra.mrb[0].mxu0 %v3067
    %v3197 = vpop.f32.mrb[0].mxu0
    %v3198 = vadd.f32 %v3104, %v3197
    %v3199 = vpop.f32.mrb[0].mxu0
    %3200 = vmatprep.mubr.f32.mxu0 %v3116
    %3201 = vmatmul.mubr.f32.gmra.mrb[0].mxu0 %v3069
    %v3202 = vpop.f32.mrb[0].mxu0
    %v3203 = vadd.f32 %v3104, %v3202
    %v3204 = vpop.f32.mrb[0].mxu0
    %3205 = vmatprep.mubr.f32.mxu0 %v3119
    %3206 = vmatmul.mubr.f32.gmra.mrb[0].mxu0 %v3071
    %v3207 = vpop.f32.mrb[0].mxu0
    %v3208 = vadd.f32 %v3104, %v3207
    %v3209 = vpop.f32.mrb[0].mxu0
    %3210 = vdwg.mxu0
    %3212 = vset.pattern.permute.xlu0 0
    %3213 = vperm.xlu0 %3212, %v2827
    %v3214 = vpop.permute.xlu0 %3213
    %3217 = vset.pattern.permute.xlu0 0
    %3218 = vperm.xlu0 %3217, %v2828
    %v3219 = vpop.permute.xlu0 %3218
    %3222 = vset.pattern.permute.xlu0 0
    %3223 = vperm.xlu0 %3222, %v2829
    %v3224 = vpop.permute.xlu0 %3223
    %3227 = vset.pattern.permute.xlu0 0
    %3228 = vperm.xlu0 %3227, %v2830
    %v3229 = vpop.permute.xlu0 %3228
    %3232 = vset.pattern.permute.xlu0 0
    %3233 = vperm.xlu0 %3232, %v2831
    %v3234 = vpop.permute.xlu0 %3233
    %v3236 = vmul.f32 %v3214, %v3188
    %v3237 = vmul.f32 %v3219, %v3193
    %v3238 = vmul.f32 %v3224, %v3198
    %v3239 = vmul.f32 %v3229, %v3203
    %v3240 = vmul.f32 %v3234, %v3208
    %3241 = vset.pattern.permute.xlu0 1
    %3242 = vperm.xlu0 %3241, %v2827
    %v3243 = vpop.permute.xlu0 %3242
    %3245 = vset.pattern.permute.xlu0 1
    %3246 = vperm.xlu0 %3245, %v2828
    %v3247 = vpop.permute.xlu0 %3246
    %3249 = vset.pattern.permute.xlu0 1
    %3250 = vperm.xlu0 %3249, %v2829
    %v3251 = vpop.permute.xlu0 %3250
    %3253 = vset.pattern.permute.xlu0 1
    %3254 = vperm.xlu0 %3253, %v2830
    %v3255 = vpop.permute.xlu0 %3254
    %3257 = vset.pattern.permute.xlu0 1
    %3258 = vperm.xlu0 %3257, %v2831
    %v3259 = vpop.permute.xlu0 %3258
    %v3261 = vmul.f32 %v3243, %v3188
    %v3262 = vmul.f32 %v3247, %v3193
    %v3263 = vmul.f32 %v3251, %v3198
    %v3264 = vmul.f32 %v3255, %v3203
    %v3265 = vmul.f32 %v3259, %v3208
    %3271 = vrot.lane.b32.xlu0 %v3261, 96
    %v3272 = vpop.permute.xlu0 %3271
    %3273 = vrot.lane.b32.xlu0 %v3262, 96
    %v3274 = vpop.permute.xlu0 %3273
    %3275 = vrot.lane.b32.xlu0 %v3263, 96
    %v3276 = vpop.permute.xlu0 %3275
    %3277 = vrot.lane.b32.xlu0 %v3264, 96
    %v3278 = vpop.permute.xlu0 %3277
    %3279 = vrot.lane.b32.xlu0 %v3265, 96
    %v3280 = vpop.permute.xlu0 %3279
    %v3286 = vadd.f32 %v3236, %v3272
    %v3287 = vadd.f32 %v3237, %v3274
    %v3288 = vadd.f32 %v3238, %v3276
    %v3289 = vadd.f32 %v3239, %v3278
    %v3290 = vadd.f32 %v3240, %v3280
    %3291 = vset.pattern.permute.xlu0 2
    %3292 = vperm.xlu0 %3291, %v2827
    %v3293 = vpop.permute.xlu0 %3292
    %3295 = vset.pattern.permute.xlu0 2
    %3296 = vperm.xlu0 %3295, %v2828
    %v3297 = vpop.permute.xlu0 %3296
    %3299 = vset.pattern.permute.xlu0 2
    %3300 = vperm.xlu0 %3299, %v2829
    %v3301 = vpop.permute.xlu0 %3300
    %3303 = vset.pattern.permute.xlu0 2
    %3304 = vperm.xlu0 %3303, %v2830
    %v3305 = vpop.permute.xlu0 %3304
    %3307 = vset.pattern.permute.xlu0 2
    %3308 = vperm.xlu0 %3307, %v2831
    %v3309 = vpop.permute.xlu0 %3308
    %v3311 = vmul.f32 %v3293, %v3188
    %v3312 = vmul.f32 %v3297, %v3193
    %v3313 = vmul.f32 %v3301, %v3198
    %v3314 = vmul.f32 %v3305, %v3203
    %v3315 = vmul.f32 %v3309, %v3208
    %3321 = vrot.lane.b32.xlu0 %v3311, 64
    %v3322 = vpop.permute.xlu0 %3321
    %3323 = vrot.lane.b32.xlu0 %v3312, 64
    %v3324 = vpop.permute.xlu0 %3323
    %3325 = vrot.lane.b32.xlu0 %v3313, 64
    %v3326 = vpop.permute.xlu0 %3325
    %3327 = vrot.lane.b32.xlu0 %v3314, 64
    %v3328 = vpop.permute.xlu0 %3327
    %3329 = vrot.lane.b32.xlu0 %v3315, 64
    %v3330 = vpop.permute.xlu0 %3329
    %v3336 = vadd.f32 %v3286, %v3322
    %v3337 = vadd.f32 %v3287, %v3324
    %v3338 = vadd.f32 %v3288, %v3326
    %v3339 = vadd.f32 %v3289, %v3328
    %v3340 = vadd.f32 %v3290, %v3330
    %v3341 = vpack.c.bf16 %v3337, %v3336
    %v3342 = vpack.c.bf16 %v3339, %v3338
    %v3343 = vpack.c.bf16 %v3340, %v3340
    %v3345 = vsel %vm1182, %v3343, 0
    %3347 = vmatprep.subr.bf16.mxu0 0
    %3348 = vmatpush1.bf16.msra.mxu0 %v3341
    %3349 = vmatprep.subr.bf16.mxu0 0
    %3350 = vmatpush1.bf16.msra.mxu0 %v3342
    %3351 = vmatprep.subr.bf16.mxu0 0
    %3352 = vmatpush1.bf16.msra.mxu0 %v3345
    %3353 = vmatprep.subr.bf16.mxu0 0
    %3354 = vmatpush1.bf16.msra.mxu0 0
    %3355 = vmatprep.subr.bf16.mxu0 0
    %3356 = vmatpush1.bf16.msra.mxu0 0
    %3357 = vmatprep.subr.bf16.mxu0 0
    %3358 = vmatpush1.bf16.msra.mxu0 0
    %3359 = vmatprep.subr.bf16.mxu0 0
    %3360 = vmatpush1.bf16.msra.mxu0 0
    %3361 = vmatprep.subr.bf16.mxu0 0
    %3362 = vmatpush1.bf16.msra.mxu0 0
    %3363 = vmatprep.subr.bf16.mxu0 0
    %3364 = vmatpush1.bf16.msra.mxu0 0
    %3365 = vmatprep.subr.bf16.mxu0 0
    %3366 = vmatpush1.bf16.msra.mxu0 0
    %3367 = vmatprep.subr.bf16.mxu0 0
    %3368 = vmatpush1.bf16.msra.mxu0 0
    %3369 = vmatprep.subr.bf16.mxu0 0
    %3370 = vmatpush1.bf16.msra.mxu0 0
    %3371 = vmatprep.subr.bf16.mxu0 0
    %3372 = vmatpush1.bf16.msra.mxu0 0
    %3373 = vmatprep.subr.bf16.mxu0 0
    %3374 = vmatpush1.bf16.msra.mxu0 0
    %3375 = vmatprep.subr.bf16.mxu0 0
    %3376 = vmatpush1.bf16.msra.mxu0 0
    %3377 = vmatprep.subr.bf16.mxu0 0
    %3378 = vmatpush1.bf16.msra.mxu0 0
    %3379 = vmatprep.mubr.bf16.mxu0 0
    %3380 = vmatmul.mubr.bf16.gmra.mrb[0].mxu0 %v1312
    %v3381 = vpop.f32.mrb[0].mxu0
    %v3382 = vadd.f32 0.0, %v3381
    %v3383 = vpop.f32.mrb[0].mxu0
    %v3384 = vpop.f32.mrb[0].mxu0
    %v3385 = vadd.f32 0.0, %v3384
    %v3386 = vpop.f32.mrb[0].mxu0
    %3387 = vdwg.mxu0
    %v3388 = vmul.f32 %v3382, 0.33333334
    %v3389 = vmul.f32 %v3385, 0.33333334
    %v3390 = vadd.f32 %v3388, %v1981
    %v3391 = vadd.f32 %v3389, %v1982
    %v3392 = vpack.c.bf16 %v3391, %v3390
    %v3394 = vsel %vm465, %v3392, 0
    %3396 = vmatprep.subr.bf16.mxu0 0
    %3397 = vmatpush1.bf16.msra.mxu0 %v3394
    %3398 = vmatprep.subr.bf16.mxu0 0
    %3399 = vmatpush1.bf16.msra.mxu0 0
    %3400 = vmatprep.subr.bf16.mxu0 0
    %3401 = vmatpush1.bf16.msra.mxu0 0
    %3402 = vmatprep.subr.bf16.mxu0 0
    %3403 = vmatpush1.bf16.msra.mxu0 0
    %3404 = vmatprep.subr.bf16.mxu0 0
    %3405 = vmatpush1.bf16.msra.mxu0 0
    %3406 = vmatprep.subr.bf16.mxu0 0
    %3407 = vmatpush1.bf16.msra.mxu0 0
    %3408 = vmatprep.subr.bf16.mxu0 0
    %3409 = vmatpush1.bf16.msra.mxu0 0
    %3410 = vmatprep.subr.bf16.mxu0 0
    %3411 = vmatpush1.bf16.msra.mxu0 0
    %3412 = vmatprep.subr.bf16.mxu0 0
    %3413 = vmatpush1.bf16.msra.mxu0 0
    %3414 = vmatprep.subr.bf16.mxu0 0
    %3415 = vmatpush1.bf16.msra.mxu0 0
    %3416 = vmatprep.subr.bf16.mxu0 0
    %3417 = vmatpush1.bf16.msra.mxu0 0
    %3418 = vmatprep.subr.bf16.mxu0 0
    %3419 = vmatpush1.bf16.msra.mxu0 0
    %3420 = vmatprep.subr.bf16.mxu0 0
    %3421 = vmatpush1.bf16.msra.mxu0 0
    %3422 = vmatprep.subr.bf16.mxu0 0
    %3423 = vmatpush1.bf16.msra.mxu0 0
    %3424 = vmatprep.subr.bf16.mxu0 0
    %3425 = vmatpush1.bf16.msra.mxu0 0
    %3426 = vmatprep.subr.bf16.mxu0 0
    %3427 = vmatpush1.bf16.msra.mxu0 0
    %3428 = vmatprep.mubr.bf16.mxu0 0
    %3429 = vmatmul.mubr.bf16.gmra.mrb[0].mxu0 %v527
    %v3430 = vpop.f32.mrb[0].mxu0
    %v3431 = vadd.f32 0.0, %v3430
    %v3432 = vpop.f32.mrb[0].mxu0
    %v3433 = vpop.f32.mrb[0].mxu0
    %v3434 = vadd.f32 0.0, %v3433
    %v3435 = vpop.f32.mrb[0].mxu0
    %3436 = vmatprep.mubr.bf16.mxu0 0
    %3437 = vmatmul.mubr.bf16.gmra.mrb[0].mxu0 %v530
    %v3438 = vpop.f32.mrb[0].mxu0
    %v3439 = vadd.f32 0.0, %v3438
    %v3440 = vpop.f32.mrb[0].mxu0
    %v3441 = vpop.f32.mrb[0].mxu0
    %v3442 = vadd.f32 0.0, %v3441
    %v3443 = vpop.f32.mrb[0].mxu0
    %3444 = vmatprep.mubr.bf16.mxu0 0
    %3445 = vmatmul.mubr.bf16.gmra.mrb[0].mxu0 %v533
    %v3446 = vpop.f32.mrb[0].mxu0
    %v3447 = vadd.f32 0.0, %v3446
    %v3448 = vpop.f32.mrb[0].mxu0
    %v3449 = vpop.f32.mrb[0].mxu0
    %v3450 = vpop.f32.mrb[0].mxu0
    %3451 = vdwg.mxu0
    %3452 = vmatprep.subr.bf16.mxu0 0
    %3453 = vmatpush1.bf16.msra.mxu0 %v3394
    %3454 = vmatprep.subr.bf16.mxu0 0
    %3455 = vmatpush1.bf16.msra.mxu0 0
    %3456 = vmatprep.subr.bf16.mxu0 0
    %3457 = vmatpush1.bf16.msra.mxu0 0
    %3458 = vmatprep.subr.bf16.mxu0 0
    %3459 = vmatpush1.bf16.msra.mxu0 0
    %3460 = vmatprep.subr.bf16.mxu0 0
    %3461 = vmatpush1.bf16.msra.mxu0 0
    %3462 = vmatprep.subr.bf16.mxu0 0
    %3463 = vmatpush1.bf16.msra.mxu0 0
    %3464 = vmatprep.subr.bf16.mxu0 0
    %3465 = vmatpush1.bf16.msra.mxu0 0
    %3466 = vmatprep.subr.bf16.mxu0 0
    %3467 = vmatpush1.bf16.msra.mxu0 0
    %3468 = vmatprep.subr.bf16.mxu0 0
    %3469 = vmatpush1.bf16.msra.mxu0 0
    %3470 = vmatprep.subr.bf16.mxu0 0
    %3471 = vmatpush1.bf16.msra.mxu0 0
    %3472 = vmatprep.subr.bf16.mxu0 0
    %3473 = vmatpush1.bf16.msra.mxu0 0
    %3474 = vmatprep.subr.bf16.mxu0 0
    %3475 = vmatpush1.bf16.msra.mxu0 0
    %3476 = vmatprep.subr.bf16.mxu0 0
    %3477 = vmatpush1.bf16.msra.mxu0 0
    %3478 = vmatprep.subr.bf16.mxu0 0
    %3479 = vmatpush1.bf16.msra.mxu0 0
    %3480 = vmatprep.subr.bf16.mxu0 0
    %3481 = vmatpush1.bf16.msra.mxu0 0
    %3482 = vmatprep.subr.bf16.mxu0 0
    %3483 = vmatpush1.bf16.msra.mxu0 0
    %3484 = vmatprep.mubr.bf16.mxu0 0
    %3485 = vmatmul.mubr.bf16.gmra.mrb[0].mxu0 %v457
    %v3486 = vpop.f32.mrb[0].mxu0
    %v3487 = vadd.f32 0.0, %v3486
    %v3488 = vpop.f32.mrb[0].mxu0
    %v3489 = vpop.f32.mrb[0].mxu0
    %v3490 = vadd.f32 0.0, %v3489
    %v3491 = vpop.f32.mrb[0].mxu0
    %3492 = vmatprep.mubr.bf16.mxu0 0
    %3493 = vmatmul.mubr.bf16.gmra.mrb[0].mxu0 %v460
    %v3494 = vpop.f32.mrb[0].mxu0
    %v3495 = vadd.f32 0.0, %v3494
    %v3496 = vpop.f32.mrb[0].mxu0
    %v3497 = vpop.f32.mrb[0].mxu0
    %v3498 = vadd.f32 0.0, %v3497
    %v3499 = vpop.f32.mrb[0].mxu0
    %3500 = vmatprep.mubr.bf16.mxu0 0
    %3501 = vmatmul.mubr.bf16.gmra.mrb[0].mxu0 %v463
    %v3502 = vpop.f32.mrb[0].mxu0
    %v3503 = vadd.f32 0.0, %v3502
    %v3504 = vpop.f32.mrb[0].mxu0
    %v3505 = vpop.f32.mrb[0].mxu0
    %v3506 = vpop.f32.mrb[0].mxu0
    %3507 = vdwg.mxu0
    %s3508 = scalar_lea.vmem [#allocation13], 128
    %v3509 = vld [vmem:[%s3508] sm:$0xff]
    %v3510 = vld [vmem:[%s3508 + $0x8] sm:$0xff]
    %v3511 = vld [vmem:[%s3508 + $0x10] sm:$0xff]
    %v3512 = vld [vmem:[%s3508 + $0x18] sm:$0xff]
    %v3513 = vld [vmem:[%s3508 + $0x20] sm:$0xff]
    %v3514 = vld [vmem:[%s3508 + $0x28] sm:$0xff]
    %v3515 = vld [vmem:[%s3508 + $0x30] sm:$0xff]
    %v3516 = vld [vmem:[%s3508 + $0x38] sm:$0xff]
    %s3517 = scalar_lea.vmem [#allocation14], 128
    %v3518 = vld [vmem:[%s3517] sm:$0xff]
    %v3519 = vld [vmem:[%s3517 + $0x8] sm:$0xff]
    %v3520 = vld [vmem:[%s3517 + $0x10] sm:$0xff]
    %v3521 = vld [vmem:[%s3517 + $0x18] sm:$0xff]
    %v3522 = vld [vmem:[%s3517 + $0x20] sm:$0xff]
    %v3523 = vld [vmem:[%s3517 + $0x28] sm:$0xff]
    %v3524 = vld [vmem:[%s3517 + $0x30] sm:$0xff]
    %v3525 = vld [vmem:[%s3517 + $0x38] sm:$0xff]
    %v3527 = vsel %vm666, %v3487, 0
    %v3530 = vsel %vm666, %v3490, 0
    %v3533 = vsel %vm666, %v3495, 0
    %v3536 = vsel %vm666, %v3498, 0
    %v3539 = vsel %vm666, %v3503, 0
    %3541 = vmatprep.subr.mxu0 %v3519
    %3542 = vmatpush1.msra.mxu0 %v3518
    %3543 = vmatprep.subr.mxu0 %v3521
    %3544 = vmatpush1.msra.mxu0 %v3520
    %3545 = vmatprep.subr.mxu0 %v3523
    %3546 = vmatpush1.msra.mxu0 %v3522
    %3547 = vmatprep.subr.mxu0 %v3525
    %3548 = vmatpush1.msra.mxu0 %v3524
    %3549 = vmatprep.subr.mxu0 0.0
    %3550 = vmatpush1.msra.mxu0 0.0
    %3551 = vmatprep.subr.mxu0 0.0
    %3552 = vmatpush1.msra.mxu0 0.0
    %3553 = vmatprep.subr.mxu0 0.0
    %3554 = vmatpush1.msra.mxu0 0.0
    %3555 = vmatprep.subr.mxu0 0.0
    %3556 = vmatpush1.msra.mxu0 0.0
    %3557 = vmatprep.subr.mxu0 0.0
    %3558 = vmatpush1.msra.mxu0 0.0
    %3559 = vmatprep.subr.mxu0 0.0
    %3560 = vmatpush1.msra.mxu0 0.0
    %3561 = vmatprep.subr.mxu0 0.0
    %3562 = vmatpush1.msra.mxu0 0.0
    %3563 = vmatprep.subr.mxu0 0.0
    %3564 = vmatpush1.msra.mxu0 0.0
    %3565 = vmatprep.subr.mxu0 0.0
    %3566 = vmatpush1.msra.mxu0 0.0
    %3567 = vmatprep.subr.mxu0 0.0
    %3568 = vmatpush1.msra.mxu0 0.0
    %3569 = vmatprep.subr.mxu0 0.0
    %3570 = vmatpush1.msra.mxu0 0.0
    %3571 = vmatprep.subr.mxu0 0.0
    %3572 = vmatpush1.msra.mxu0 0.0
    %3573 = vmatprep.subr.mxu0 0.0
    %3574 = vmatpush1.msra.mxu0 0.0
    %3575 = vmatprep.subr.mxu0 0.0
    %3576 = vmatpush1.msra.mxu0 0.0
    %3577 = vmatprep.subr.mxu0 0.0
    %3578 = vmatpush1.msra.mxu0 0.0
    %3579 = vmatprep.subr.mxu0 0.0
    %3580 = vmatpush1.msra.mxu0 0.0
    %3581 = vmatprep.subr.mxu0 0.0
    %3582 = vmatpush1.msra.mxu0 0.0
    %3583 = vmatprep.subr.mxu0 0.0
    %3584 = vmatpush1.msra.mxu0 0.0
    %3585 = vmatprep.subr.mxu0 0.0
    %3586 = vmatpush1.msra.mxu0 0.0
    %3587 = vmatprep.subr.mxu0 0.0
    %3588 = vmatpush1.msra.mxu0 0.0
    %3589 = vmatprep.subr.mxu0 0.0
    %3590 = vmatpush1.msra.mxu0 0.0
    %3591 = vmatprep.subr.mxu0 0.0
    %3592 = vmatpush1.msra.mxu0 0.0
    %3593 = vmatprep.subr.mxu0 0.0
    %3594 = vmatpush1.msra.mxu0 0.0
    %3595 = vmatprep.subr.mxu0 0.0
    %3596 = vmatpush1.msra.mxu0 0.0
    %3597 = vmatprep.subr.mxu0 0.0
    %3598 = vmatpush1.msra.mxu0 0.0
    %3599 = vmatprep.subr.mxu0 0.0
    %3600 = vmatpush1.msra.mxu0 0.0
    %3601 = vmatprep.subr.mxu0 0.0
    %3602 = vmatpush1.msra.mxu0 0.0
    %3603 = vmatprep.subr.mxu0 0.0
    %3604 = vmatpush1.msra.mxu0 0.0
    %3605 = vmatprep.mubr.f32.mxu0 0.0
    %3606 = vmatmul.mubr.f32.gmra.mrb[0].mxu0 %v3527
    %v3607 = vpop.f32.mrb[0].mxu0
    %v3608 = vadd.f32 0.0, %v3607
    %v3609 = vpop.f32.mrb[0].mxu0
    %v3610 = vadd.f32 0.0, %v3609
    %3611 = vmatprep.mubr.f32.mxu0 0.0
    %3612 = vmatmul.mubr.f32.gmra.mrb[0].mxu0 %v3530
    %v3613 = vpop.f32.mrb[0].mxu0
    %v3614 = vadd.f32 0.0, %v3613
    %v3615 = vpop.f32.mrb[0].mxu0
    %v3616 = vadd.f32 0.0, %v3615
    %3617 = vmatprep.mubr.f32.mxu0 0.0
    %3618 = vmatmul.mubr.f32.gmra.mrb[0].mxu0 %v3533
    %v3619 = vpop.f32.mrb[0].mxu0
    %v3620 = vadd.f32 0.0, %v3619
    %v3621 = vpop.f32.mrb[0].mxu0
    %v3622 = vadd.f32 0.0, %v3621
    %3623 = vmatprep.mubr.f32.mxu0 0.0
    %3624 = vmatmul.mubr.f32.gmra.mrb[0].mxu0 %v3536
    %v3625 = vpop.f32.mrb[0].mxu0
    %v3626 = vadd.f32 0.0, %v3625
    %v3627 = vpop.f32.mrb[0].mxu0
    %v3628 = vadd.f32 0.0, %v3627
    %3629 = vmatprep.mubr.f32.mxu0 0.0
    %3630 = vmatmul.mubr.f32.gmra.mrb[0].mxu0 %v3539
    %v3631 = vpop.f32.mrb[0].mxu0
    %v3632 = vadd.f32 0.0, %v3631
    %v3633 = vpop.f32.mrb[0].mxu0
    %v3634 = vadd.f32 0.0, %v3633
    %3635 = vdwg.mxu0
    %v3637 = vsel %vm666, %v3431, 0
    %v3640 = vsel %vm666, %v3434, 0
    %v3643 = vsel %vm666, %v3439, 0
    %v3646 = vsel %vm666, %v3442, 0
    %v3649 = vsel %vm666, %v3447, 0
    %3651 = vmatprep.subr.mxu0 %v3510
    %3652 = vmatpush1.msra.mxu0 %v3509
    %3653 = vmatprep.subr.mxu0 %v3512
    %3654 = vmatpush1.msra.mxu0 %v3511
    %3655 = vmatprep.subr.mxu0 %v3514
    %3656 = vmatpush1.msra.mxu0 %v3513
    %3657 = vmatprep.subr.mxu0 %v3516
    %3658 = vmatpush1.msra.mxu0 %v3515
    %3659 = vmatprep.subr.mxu0 0.0
    %3660 = vmatpush1.msra.mxu0 0.0
    %3661 = vmatprep.subr.mxu0 0.0
    %3662 = vmatpush1.msra.mxu0 0.0
    %3663 = vmatprep.subr.mxu0 0.0
    %3664 = vmatpush1.msra.mxu0 0.0
    %3665 = vmatprep.subr.mxu0 0.0
    %3666 = vmatpush1.msra.mxu0 0.0
    %3667 = vmatprep.subr.mxu0 0.0
    %3668 = vmatpush1.msra.mxu0 0.0
    %3669 = vmatprep.subr.mxu0 0.0
    %3670 = vmatpush1.msra.mxu0 0.0
    %3671 = vmatprep.subr.mxu0 0.0
    %3672 = vmatpush1.msra.mxu0 0.0
    %3673 = vmatprep.subr.mxu0 0.0
    %3674 = vmatpush1.msra.mxu0 0.0
    %3675 = vmatprep.subr.mxu0 0.0
    %3676 = vmatpush1.msra.mxu0 0.0
    %3677 = vmatprep.subr.mxu0 0.0
    %3678 = vmatpush1.msra.mxu0 0.0
    %3679 = vmatprep.subr.mxu0 0.0
    %3680 = vmatpush1.msra.mxu0 0.0
    %3681 = vmatprep.subr.mxu0 0.0
    %3682 = vmatpush1.msra.mxu0 0.0
    %3683 = vmatprep.subr.mxu0 0.0
    %3684 = vmatpush1.msra.mxu0 0.0
    %3685 = vmatprep.subr.mxu0 0.0
    %3686 = vmatpush1.msra.mxu0 0.0
    %3687 = vmatprep.subr.mxu0 0.0
    %3688 = vmatpush1.msra.mxu0 0.0
    %3689 = vmatprep.subr.mxu0 0.0
    %3690 = vmatpush1.msra.mxu0 0.0
    %3691 = vmatprep.subr.mxu0 0.0
    %3692 = vmatpush1.msra.mxu0 0.0
    %3693 = vmatprep.subr.mxu0 0.0
    %3694 = vmatpush1.msra.mxu0 0.0
    %3695 = vmatprep.subr.mxu0 0.0
    %3696 = vmatpush1.msra.mxu0 0.0
    %3697 = vmatprep.subr.mxu0 0.0
    %3698 = vmatpush1.msra.mxu0 0.0
    %3699 = vmatprep.subr.mxu0 0.0
    %3700 = vmatpush1.msra.mxu0 0.0
    %3701 = vmatprep.subr.mxu0 0.0
    %3702 = vmatpush1.msra.mxu0 0.0
    %3703 = vmatprep.subr.mxu0 0.0
    %3704 = vmatpush1.msra.mxu0 0.0
    %3705 = vmatprep.subr.mxu0 0.0
    %3706 = vmatpush1.msra.mxu0 0.0
    %3707 = vmatprep.subr.mxu0 0.0
    %3708 = vmatpush1.msra.mxu0 0.0
    %3709 = vmatprep.subr.mxu0 0.0
    %3710 = vmatpush1.msra.mxu0 0.0
    %3711 = vmatprep.subr.mxu0 0.0
    %3712 = vmatpush1.msra.mxu0 0.0
    %3713 = vmatprep.subr.mxu0 0.0
    %3714 = vmatpush1.msra.mxu0 0.0
    %3715 = vmatprep.mubr.f32.mxu0 0.0
    %3716 = vmatmul.mubr.f32.gmra.mrb[0].mxu0 %v3637
    %v3717 = vpop.f32.mrb[0].mxu0
    %v3718 = vadd.f32 %v3608, %v3717
    %v3719 = vpop.f32.mrb[0].mxu0
    %v3720 = vadd.f32 %v3610, %v3719
    %3721 = vmatprep.mubr.f32.mxu0 0.0
    %3722 = vmatmul.mubr.f32.gmra.mrb[0].mxu0 %v3640
    %v3723 = vpop.f32.mrb[0].mxu0
    %v3724 = vadd.f32 %v3614, %v3723
    %v3725 = vpop.f32.mrb[0].mxu0
    %v3726 = vadd.f32 %v3616, %v3725
    %3727 = vmatprep.mubr.f32.mxu0 0.0
    %3728 = vmatmul.mubr.f32.gmra.mrb[0].mxu0 %v3643
    %v3729 = vpop.f32.mrb[0].mxu0
    %v3730 = vadd.f32 %v3620, %v3729
    %v3731 = vpop.f32.mrb[0].mxu0
    %v3732 = vadd.f32 %v3622, %v3731
    %3733 = vmatprep.mubr.f32.mxu0 0.0
    %3734 = vmatmul.mubr.f32.gmra.mrb[0].mxu0 %v3646
    %v3735 = vpop.f32.mrb[0].mxu0
    %v3736 = vadd.f32 %v3626, %v3735
    %v3737 = vpop.f32.mrb[0].mxu0
    %v3738 = vadd.f32 %v3628, %v3737
    %3739 = vmatprep.mubr.f32.mxu0 0.0
    %3740 = vmatmul.mubr.f32.gmra.mrb[0].mxu0 %v3649
    %v3741 = vpop.f32.mrb[0].mxu0
    %v3742 = vadd.f32 %v3632, %v3741
    %v3743 = vpop.f32.mrb[0].mxu0
    %v3744 = vadd.f32 %v3634, %v3743
    %3745 = vdwg.mxu0
    %s3746 = scalar_lea.vmem [#allocation16], 4
    %v3747 = vld [vmem:[%s3746] sm:$0x3]
    %v3749 = vlaneseq
    %v3750 = vshrl.u32 %v3749, 7
    %v3751 = vsub.s32 0, %v3750
    %v3752 = vrot.slane %v3747, %v3751
    %v3753 = vlaneseq
    %v3754 = vshrl.u32 %v3753, 7
    %v3755 = vsub.s32 1, %v3754
    %v3756 = vrot.slane %v3747, %v3755
    %v3759 = vadd.f32 %v3718, %v3752
    %v3760 = vadd.f32 %v3720, %v3756
    %v3761 = vadd.f32 %v3724, %v3752
    %v3762 = vadd.f32 %v3726, %v3756
    %v3763 = vadd.f32 %v3730, %v3752
    %v3764 = vadd.f32 %v3732, %v3756
    %v3765 = vadd.f32 %v3736, %v3752
    %v3766 = vadd.f32 %v3738, %v3756
    %v3767 = vadd.f32 %v3742, %v3752
    %v3768 = vadd.f32 %v3744, %v3756
    %v3769 = vmax.f32 %v3759, 0.0
    %v3770 = vmax.f32 %v3760, 0.0
    %v3771 = vmax.f32 %v3761, 0.0
    %v3772 = vmax.f32 %v3762, 0.0
    %v3773 = vmax.f32 %v3763, 0.0
    %v3774 = vmax.f32 %v3764, 0.0
    %v3775 = vmax.f32 %v3765, 0.0
    %v3776 = vmax.f32 %v3766, 0.0
    %v3777 = vmax.f32 %v3767, 0.0
    %v3778 = vmax.f32 %v3768, 0.0
    %s3779 = scalar_lea.vmem [#allocation17], 384
    %v3780 = vld [vmem:[%s3779] sm:$0xff]
    %v3781 = vld [vmem:[%s3779 + $0x8] sm:$0xff]
    %v3782 = vld [vmem:[%s3779 + $0x10] sm:$0xff]
    %v3783 = vld [vmem:[%s3779 + $0x18] sm:$0xff]
    %v3784 = vld [vmem:[%s3779 + $0x20] sm:$0xff]
    %v3785 = vld [vmem:[%s3779 + $0x28] sm:$0xff]
    %v3786 = vld [vmem:[%s3779 + $0x30] sm:$0xff]
    %v3787 = vld [vmem:[%s3779 + $0x38] sm:$0xff]
    %v3788 = vld [vmem:[%s3779 + $0x40] sm:$0xff]
    %v3789 = vld [vmem:[%s3779 + $0x48] sm:$0xff]
    %v3790 = vld [vmem:[%s3779 + $0x50] sm:$0xff]
    %v3791 = vld [vmem:[%s3779 + $0x58] sm:$0xff]
    %v3792 = vld [vmem:[%s3779 + $0x60] sm:$0xff]
    %v3793 = vld [vmem:[%s3779 + $0x68] sm:$0xff]
    %v3794 = vld [vmem:[%s3779 + $0x70] sm:$0xff]
    %v3795 = vld [vmem:[%s3779 + $0x78] sm:$0xff]
    %v3796 = vld [vmem:[%s3779 + $0x80] sm:$0xff]
    %v3797 = vld [vmem:[%s3779 + $0x88] sm:$0xff]
    %v3798 = vld [vmem:[%s3779 + $0x90] sm:$0xff]
    %v3799 = vld [vmem:[%s3779 + $0x98] sm:$0xff]
    %v3800 = vld [vmem:[%s3779 + $0xa0] sm:$0xff]
    %v3801 = vld [vmem:[%s3779 + $0xa8] sm:$0xff]
    %v3802 = vld [vmem:[%s3779 + $0xb0] sm:$0xff]
    %v3803 = vld [vmem:[%s3779 + $0xb8] sm:$0xff]
    %s3804 = scalar_lea.vmem [#allocation19], 2
    %v3805 = vld [vmem:[%s3804] sm:$0x1]
    %v3807 = vlaneseq
    %v3808 = vshrl.u32 %v3807, 7
    %v3809 = vsub.s32 0, %v3808
    %v3810 = vrot.slane %v3805, %v3809
    %v3813 = vsel %vm950, %v3770, 0
    %v3816 = vsel %vm950, %v3772, 0
    %v3819 = vsel %vm950, %v3774, 0
    %v3822 = vsel %vm950, %v3776, 0
    %v3825 = vsel %vm950, %v3778, 0
    %3827 = vmatprep.subr.mxu0 0.0
    %3828 = vmatpush1.msra.mxu0 %v3780
    %3829 = vmatprep.subr.mxu0 0.0
    %3830 = vmatpush1.msra.mxu0 %v3781
    %3831 = vmatprep.subr.mxu0 0.0
    %3832 = vmatpush1.msra.mxu0 %v3782
    %3833 = vmatprep.subr.mxu0 0.0
    %3834 = vmatpush1.msra.mxu0 %v3783
    %3835 = vmatprep.subr.mxu0 0.0
    %3836 = vmatpush1.msra.mxu0 %v3784
    %3837 = vmatprep.subr.mxu0 0.0
    %3838 = vmatpush1.msra.mxu0 %v3785
    %3839 = vmatprep.subr.mxu0 0.0
    %3840 = vmatpush1.msra.mxu0 %v3786
    %3841 = vmatprep.subr.mxu0 0.0
    %3842 = vmatpush1.msra.mxu0 %v3787
    %3843 = vmatprep.subr.mxu0 0.0
    %3844 = vmatpush1.msra.mxu0 %v3788
    %3845 = vmatprep.subr.mxu0 0.0
    %3846 = vmatpush1.msra.mxu0 %v3789
    %3847 = vmatprep.subr.mxu0 0.0
    %3848 = vmatpush1.msra.mxu0 %v3790
    %3849 = vmatprep.subr.mxu0 0.0
    %3850 = vmatpush1.msra.mxu0 %v3791
    %3851 = vmatprep.subr.mxu0 0.0
    %3852 = vmatpush1.msra.mxu0 %v3792
    %3853 = vmatprep.subr.mxu0 0.0
    %3854 = vmatpush1.msra.mxu0 %v3793
    %3855 = vmatprep.subr.mxu0 0.0
    %3856 = vmatpush1.msra.mxu0 %v3794
    %3857 = vmatprep.subr.mxu0 0.0
    %3858 = vmatpush1.msra.mxu0 %v3795
    %3859 = vmatprep.subr.mxu0 0.0
    %3860 = vmatpush1.msra.mxu0 %v3796
    %3861 = vmatprep.subr.mxu0 0.0
    %3862 = vmatpush1.msra.mxu0 %v3797
    %3863 = vmatprep.subr.mxu0 0.0
    %3864 = vmatpush1.msra.mxu0 %v3798
    %3865 = vmatprep.subr.mxu0 0.0
    %3866 = vmatpush1.msra.mxu0 %v3799
    %3867 = vmatprep.subr.mxu0 0.0
    %3868 = vmatpush1.msra.mxu0 %v3800
    %3869 = vmatprep.subr.mxu0 0.0
    %3870 = vmatpush1.msra.mxu0 %v3801
    %3871 = vmatprep.subr.mxu0 0.0
    %3872 = vmatpush1.msra.mxu0 %v3802
    %3873 = vmatprep.subr.mxu0 0.0
    %3874 = vmatpush1.msra.mxu0 %v3803
    %3875 = vmatprep.subr.mxu0 0.0
    %3876 = vmatpush1.msra.mxu0 0.0
    %3877 = vmatprep.subr.mxu0 0.0
    %3878 = vmatpush1.msra.mxu0 0.0
    %3879 = vmatprep.subr.mxu0 0.0
    %3880 = vmatpush1.msra.mxu0 0.0
    %3881 = vmatprep.subr.mxu0 0.0
    %3882 = vmatpush1.msra.mxu0 0.0
    %3883 = vmatprep.subr.mxu0 0.0
    %3884 = vmatpush1.msra.mxu0 0.0
    %3885 = vmatprep.subr.mxu0 0.0
    %3886 = vmatpush1.msra.mxu0 0.0
    %3887 = vmatprep.subr.mxu0 0.0
    %3888 = vmatpush1.msra.mxu0 0.0
    %3889 = vmatprep.subr.mxu0 0.0
    %3890 = vmatpush1.msra.mxu0 0.0
    %3891 = vmatprep.mubr.f32.mxu0 %v3813
    %3892 = vmatmul.mubr.f32.gmra.mrb[0].mxu0 %v3769
    %v3893 = vpop.f32.mrb[0].mxu0
    %v3894 = vadd.f32 %v3810, %v3893
    %v3895 = vpop.f32.mrb[0].mxu0
    %3896 = vmatprep.mubr.f32.mxu0 %v3816
    %3897 = vmatmul.mubr.f32.gmra.mrb[0].mxu0 %v3771
    %v3898 = vpop.f32.mrb[0].mxu0
    %v3899 = vadd.f32 %v3810, %v3898
    %v3900 = vpop.f32.mrb[0].mxu0
    %3901 = vmatprep.mubr.f32.mxu0 %v3819
    %3902 = vmatmul.mubr.f32.gmra.mrb[0].mxu0 %v3773
    %v3903 = vpop.f32.mrb[0].mxu0
    %v3904 = vadd.f32 %v3810, %v3903
    %v3905 = vpop.f32.mrb[0].mxu0
    %3906 = vmatprep.mubr.f32.mxu0 %v3822
    %3907 = vmatmul.mubr.f32.gmra.mrb[0].mxu0 %v3775
    %v3908 = vpop.f32.mrb[0].mxu0
    %v3909 = vadd.f32 %v3810, %v3908
    %v3910 = vpop.f32.mrb[0].mxu0
    %3911 = vmatprep.mubr.f32.mxu0 %v3825
    %3912 = vmatmul.mubr.f32.gmra.mrb[0].mxu0 %v3777
    %v3913 = vpop.f32.mrb[0].mxu0
    %v3914 = vadd.f32 %v3810, %v3913
    %v3915 = vpop.f32.mrb[0].mxu0
    %3916 = vdwg.mxu0
    %3918 = vset.pattern.permute.xlu0 0
    %3919 = vperm.xlu0 %3918, %v3894
    %v3920 = vpop.permute.xlu0 %3919
    %3923 = vset.pattern.permute.xlu0 0
    %3924 = vperm.xlu0 %3923, %v3899
    %v3925 = vpop.permute.xlu0 %3924
    %3928 = vset.pattern.permute.xlu0 0
    %3929 = vperm.xlu0 %3928, %v3904
    %v3930 = vpop.permute.xlu0 %3929
    %3933 = vset.pattern.permute.xlu0 0
    %3934 = vperm.xlu0 %3933, %v3909
    %v3935 = vpop.permute.xlu0 %3934
    %3938 = vset.pattern.permute.xlu0 0
    %3939 = vperm.xlu0 %3938, %v3914
    %v3940 = vpop.permute.xlu0 %3939
    %v3942 = vsel %vm403, %v3920, -1e+30
    %v3943 = vsel %vm404, %v3925, -1e+30
    %v3944 = vsel %vm405, %v3930, -1e+30
    %v3945 = vsel %vm406, %v3935, -1e+30
    %v3946 = vsel %vm407, %v3940, -1e+30
    %v3947 = vsel %vm455, %v3942, -inf
    %v3948 = vsel %vm455, %v3943, -inf
    %v3949 = vsel %vm455, %v3944, -inf
    %v3950 = vsel %vm455, %v3945, -inf
    %v3951 = vsel %vm1090, %v3946, -inf
    %v3952 = vmax.f32 %v3947, %v3951
    %v3953 = vmax.f32 %v3952, %v3948
    %v3954 = vmax.f32 %v3949, %v3950
    %v3955 = vmax.f32 %v3953, %v3954
    %v3956 = vrot.slane %v3955, 4
    %v3957 = vmax.f32 %v3955, %v3956
    %v3958 = vrot.slane %v3957, 2
    %v3959 = vmax.f32 %v3957, %v3958
    %v3960 = vrot.slane %v3959, 1
    %v3961 = vmax.f32 %v3959, %v3960
    %3962 = vset.pattern.permute.xlu0 1
    %3963 = vperm.xlu0 %3962, %v3894
    %v3964 = vpop.permute.xlu0 %3963
    %3966 = vset.pattern.permute.xlu0 1
    %3967 = vperm.xlu0 %3966, %v3899
    %v3968 = vpop.permute.xlu0 %3967
    %3970 = vset.pattern.permute.xlu0 1
    %3971 = vperm.xlu0 %3970, %v3904
    %v3972 = vpop.permute.xlu0 %3971
    %3974 = vset.pattern.permute.xlu0 1
    %3975 = vperm.xlu0 %3974, %v3909
    %v3976 = vpop.permute.xlu0 %3975
    %3978 = vset.pattern.permute.xlu0 1
    %3979 = vperm.xlu0 %3978, %v3914
    %v3980 = vpop.permute.xlu0 %3979
    %v3982 = vsel %vm403, %v3964, -1e+30
    %v3983 = vsel %vm404, %v3968, -1e+30
    %v3984 = vsel %vm405, %v3972, -1e+30
    %v3985 = vsel %vm406, %v3976, -1e+30
    %v3986 = vsel %vm407, %v3980, -1e+30
    %v3987 = vsel %vm455, %v3982, -inf
    %v3988 = vsel %vm455, %v3983, -inf
    %v3989 = vsel %vm455, %v3984, -inf
    %v3990 = vsel %vm455, %v3985, -inf
    %v3991 = vsel %vm1090, %v3986, -inf
    %v3992 = vmax.f32 %v3987, %v3991
    %v3993 = vmax.f32 %v3992, %v3988
    %v3994 = vmax.f32 %v3989, %v3990
    %v3995 = vmax.f32 %v3993, %v3994
    %v3996 = vrot.slane %v3995, 4
    %v3997 = vmax.f32 %v3995, %v3996
    %v3998 = vrot.slane %v3997, 2
    %v3999 = vmax.f32 %v3997, %v3998
    %v4000 = vrot.slane %v3999, 1
    %v4001 = vmax.f32 %v3999, %v4000
    %4002 = vset.pattern.permute.xlu0 2
    %4003 = vperm.xlu0 %4002, %v3894
    %v4004 = vpop.permute.xlu0 %4003
    %4006 = vset.pattern.permute.xlu0 2
    %4007 = vperm.xlu0 %4006, %v3899
    %v4008 = vpop.permute.xlu0 %4007
    %4010 = vset.pattern.permute.xlu0 2
    %4011 = vperm.xlu0 %4010, %v3904
    %v4012 = vpop.permute.xlu0 %4011
    %4014 = vset.pattern.permute.xlu0 2
    %4015 = vperm.xlu0 %4014, %v3909
    %v4016 = vpop.permute.xlu0 %4015
    %4018 = vset.pattern.permute.xlu0 2
    %4019 = vperm.xlu0 %4018, %v3914
    %v4020 = vpop.permute.xlu0 %4019
    %v4022 = vsel %vm403, %v4004, -1e+30
    %v4023 = vsel %vm404, %v4008, -1e+30
    %v4024 = vsel %vm405, %v4012, -1e+30
    %v4025 = vsel %vm406, %v4016, -1e+30
    %v4026 = vsel %vm407, %v4020, -1e+30
    %v4027 = vsel %vm455, %v4022, -inf
    %v4028 = vsel %vm455, %v4023, -inf
    %v4029 = vsel %vm455, %v4024, -inf
    %v4030 = vsel %vm455, %v4025, -inf
    %v4031 = vsel %vm1090, %v4026, -inf
    %v4032 = vmax.f32 %v4027, %v4031
    %v4033 = vmax.f32 %v4032, %v4028
    %v4034 = vmax.f32 %v4029, %v4030
    %v4035 = vmax.f32 %v4033, %v4034
    %v4036 = vrot.slane %v4035, 4
    %v4037 = vmax.f32 %v4035, %v4036
    %v4038 = vrot.slane %v4037, 2
    %v4039 = vmax.f32 %v4037, %v4038
    %v4040 = vrot.slane %v4039, 1
    %v4041 = vmax.f32 %v4039, %v4040
    %v4042 = vsel %vm1182, %v3961, %v4001
    %v4043 = vsel %vm1184, %v4042, %v4041
    %v4044 = vpack.c.bf16 %v4043, %v4043
    %v4046 = vsel %vm455, %v4044, 0
    %4048 = vmatprep.subr.bf16.mxu0 0
    %4049 = vmatpush1.bf16.xpose.msra.mxu0 %v4046
    %4050 = vmatprep.subr.bf16.mxu0 0
    %4051 = vmatpush1.bf16.xpose.msra.mxu0 0
    %4052 = vmatprep.subr.bf16.mxu0 0
    %4053 = vmatpush1.bf16.xpose.msra.mxu0 0
    %4054 = vmatprep.subr.bf16.mxu0 0
    %4055 = vmatpush1.bf16.xpose.msra.mxu0 0
    %4056 = vmatprep.subr.bf16.mxu0 0
    %4057 = vmatpush1.bf16.xpose.msra.mxu0 0
    %4058 = vmatprep.subr.bf16.mxu0 0
    %4059 = vmatpush1.bf16.xpose.msra.mxu0 0
    %4060 = vmatprep.subr.bf16.mxu0 0
    %4061 = vmatpush1.bf16.xpose.msra.mxu0 0
    %4062 = vmatprep.subr.bf16.mxu0 0
    %4063 = vmatpush1.bf16.xpose.msra.mxu0 0
    %4064 = vmatprep.subr.bf16.mxu0 0
    %4065 = vmatpush1.bf16.xpose.msra.mxu0 0
    %4066 = vmatprep.subr.bf16.mxu0 0
    %4067 = vmatpush1.bf16.xpose.msra.mxu0 0
    %4068 = vmatprep.subr.bf16.mxu0 0
    %4069 = vmatpush1.bf16.xpose.msra.mxu0 0
    %4070 = vmatprep.subr.bf16.mxu0 0
    %4071 = vmatpush1.bf16.xpose.msra.mxu0 0
    %4072 = vmatprep.subr.bf16.mxu0 0
    %4073 = vmatpush1.bf16.xpose.msra.mxu0 0
    %4074 = vmatprep.subr.bf16.mxu0 0
    %4075 = vmatpush1.bf16.xpose.msra.mxu0 0
    %4076 = vmatprep.subr.bf16.mxu0 0
    %4077 = vmatpush1.bf16.xpose.msra.mxu0 0
    %4078 = vmatprep.subr.bf16.mxu0 0
    %4079 = vmatpush1.bf16.xpose.msra.mxu0 0
    %4080 = vmatprep.mubr.bf16.mxu0 0
    %4081 = vmatmul.mubr.bf16.gmra.mrb[0].mxu0 %v527
    %v4082 = vpop.f32.mrb[0].mxu0
    %v4083 = vadd.f32 0.0, %v4082
    %v4084 = vpop.f32.mrb[0].mxu0
    %v4085 = vpop.f32.mrb[0].mxu0
    %v4086 = vadd.f32 0.0, %v4085
    %v4087 = vpop.f32.mrb[0].mxu0
    %4088 = vmatprep.mubr.bf16.mxu0 0
    %4089 = vmatmul.mubr.bf16.gmra.mrb[0].mxu0 %v530
    %v4090 = vpop.f32.mrb[0].mxu0
    %v4091 = vadd.f32 0.0, %v4090
    %v4092 = vpop.f32.mrb[0].mxu0
    %v4093 = vpop.f32.mrb[0].mxu0
    %v4094 = vadd.f32 0.0, %v4093
    %v4095 = vpop.f32.mrb[0].mxu0
    %4096 = vmatprep.mubr.bf16.mxu0 0
    %4097 = vmatmul.mubr.bf16.gmra.mrb[0].mxu0 %v533
    %v4098 = vpop.f32.mrb[0].mxu0
    %v4099 = vadd.f32 0.0, %v4098
    %v4100 = vpop.f32.mrb[0].mxu0
    %v4101 = vpop.f32.mrb[0].mxu0
    %v4102 = vpop.f32.mrb[0].mxu0
    %4103 = vdwg.mxu0
    %v4104 = vsub.f32 %v3894, %v4083
    %v4105 = vsub.f32 %v3899, %v4086
    %v4106 = vsub.f32 %v3904, %v4091
    %v4107 = vsub.f32 %v3909, %v4094
    %v4108 = vsub.f32 %v3914, %v4099
    %v4109 = vmul.f32 %v4104, 1.442695
    %v4110 = vpow.pop %v4109
    %v4111 = vmul.f32 %v4105, 1.442695
    %v4112 = vpow.pop %v4111
    %v4113 = vmul.f32 %v4106, 1.442695
    %v4114 = vpow.pop %v4113
    %v4115 = vmul.f32 %v4107, 1.442695
    %v4116 = vpow.pop %v4115
    %v4117 = vmul.f32 %v4108, 1.442695
    %v4118 = vpow.pop %v4117
    %v4119 = vmul.f32 %v1264, %v4110
    %v4120 = vmul.f32 %v1269, %v4112
    %v4121 = vmul.f32 %v1274, %v4114
    %v4122 = vmul.f32 %v1279, %v4116
    %v4123 = vmul.f32 %v1284, %v4118
    %v4124 = vpack.c.bf16 %v4120, %v4119
    %v4125 = vpack.c.bf16 %v4122, %v4121
    %v4126 = vpack.c.bf16 %v4123, %v4123
    %v4128 = vsel %vm1182, %v4126, 0
    %4130 = vmatprep.subr.bf16.mxu0 0
    %4131 = vmatpush1.bf16.msra.mxu0 %v4124
    %4132 = vmatprep.subr.bf16.mxu0 0
    %4133 = vmatpush1.bf16.msra.mxu0 %v4125
    %4134 = vmatprep.subr.bf16.mxu0 0
    %4135 = vmatpush1.bf16.msra.mxu0 %v4128
    %4136 = vmatprep.subr.bf16.mxu0 0
    %4137 = vmatpush1.bf16.msra.mxu0 0
    %4138 = vmatprep.subr.bf16.mxu0 0
    %4139 = vmatpush1.bf16.msra.mxu0 0
    %4140 = vmatprep.subr.bf16.mxu0 0
    %4141 = vmatpush1.bf16.msra.mxu0 0
    %4142 = vmatprep.subr.bf16.mxu0 0
    %4143 = vmatpush1.bf16.msra.mxu0 0
    %4144 = vmatprep.subr.bf16.mxu0 0
    %4145 = vmatpush1.bf16.msra.mxu0 0
    %4146 = vmatprep.subr.bf16.mxu0 0
    %4147 = vmatpush1.bf16.msra.mxu0 0
    %4148 = vmatprep.subr.bf16.mxu0 0
    %4149 = vmatpush1.bf16.msra.mxu0 0
    %4150 = vmatprep.subr.bf16.mxu0 0
    %4151 = vmatpush1.bf16.msra.mxu0 0
    %4152 = vmatprep.subr.bf16.mxu0 0
    %4153 = vmatpush1.bf16.msra.mxu0 0
    %4154 = vmatprep.subr.bf16.mxu0 0
    %4155 = vmatpush1.bf16.msra.mxu0 0
    %4156 = vmatprep.subr.bf16.mxu0 0
    %4157 = vmatpush1.bf16.msra.mxu0 0
    %4158 = vmatprep.subr.bf16.mxu0 0
    %4159 = vmatpush1.bf16.msra.mxu0 0
    %4160 = vmatprep.subr.bf16.mxu0 0
    %4161 = vmatpush1.bf16.msra.mxu0 0
    %4162 = vmatprep.mubr.bf16.mxu0 0
    %4163 = vmatmul.mubr.bf16.gmra.mrb[0].mxu0 %v1312
    %v4164 = vpop.f32.mrb[0].mxu0
    %v4165 = vadd.f32 0.0, %v4164
    %v4166 = vpop.f32.mrb[0].mxu0
    %v4167 = vpop.f32.mrb[0].mxu0
    %v4168 = vadd.f32 0.0, %v4167
    %v4169 = vpop.f32.mrb[0].mxu0
    %4170 = vdwg.mxu0
    %v4171 = vpack.c.bf16 %v4168, %v4165
    %v4173 = vsel %vm465, %v4171, 0
    %4175 = vmatprep.subr.bf16.mxu0 0
    %4176 = vmatpush1.bf16.msra.mxu0 %v4173
    %4177 = vmatprep.subr.bf16.mxu0 0
    %4178 = vmatpush1.bf16.msra.mxu0 0
    %4179 = vmatprep.subr.bf16.mxu0 0
    %4180 = vmatpush1.bf16.msra.mxu0 0
    %4181 = vmatprep.subr.bf16.mxu0 0
    %4182 = vmatpush1.bf16.msra.mxu0 0
    %4183 = vmatprep.subr.bf16.mxu0 0
    %4184 = vmatpush1.bf16.msra.mxu0 0
    %4185 = vmatprep.subr.bf16.mxu0 0
    %4186 = vmatpush1.bf16.msra.mxu0 0
    %4187 = vmatprep.subr.bf16.mxu0 0
    %4188 = vmatpush1.bf16.msra.mxu0 0
    %4189 = vmatprep.subr.bf16.mxu0 0
    %4190 = vmatpush1.bf16.msra.mxu0 0
    %4191 = vmatprep.subr.bf16.mxu0 0
    %4192 = vmatpush1.bf16.msra.mxu0 0
    %4193 = vmatprep.subr.bf16.mxu0 0
    %4194 = vmatpush1.bf16.msra.mxu0 0
    %4195 = vmatprep.subr.bf16.mxu0 0
    %4196 = vmatpush1.bf16.msra.mxu0 0
    %4197 = vmatprep.subr.bf16.mxu0 0
    %4198 = vmatpush1.bf16.msra.mxu0 0
    %4199 = vmatprep.subr.bf16.mxu0 0
    %4200 = vmatpush1.bf16.msra.mxu0 0
    %4201 = vmatprep.subr.bf16.mxu0 0
    %4202 = vmatpush1.bf16.msra.mxu0 0
    %4203 = vmatprep.subr.bf16.mxu0 0
    %4204 = vmatpush1.bf16.msra.mxu0 0
    %4205 = vmatprep.subr.bf16.mxu0 0
    %4206 = vmatpush1.bf16.msra.mxu0 0
    %4207 = vmatprep.mubr.bf16.mxu0 0
    %4208 = vmatmul.mubr.bf16.gmra.mrb[0].mxu0 %v527
    %v4209 = vpop.f32.mrb[0].mxu0
    %v4210 = vadd.f32 1e-10, %v4209
    %v4211 = vpop.f32.mrb[0].mxu0
    %v4212 = vpop.f32.mrb[0].mxu0
    %v4213 = vadd.f32 1e-10, %v4212
    %v4214 = vpop.f32.mrb[0].mxu0
    %4215 = vmatprep.mubr.bf16.mxu0 0
    %4216 = vmatmul.mubr.bf16.gmra.mrb[0].mxu0 %v530
    %v4217 = vpop.f32.mrb[0].mxu0
    %v4218 = vadd.f32 1e-10, %v4217
    %v4219 = vpop.f32.mrb[0].mxu0
    %v4220 = vpop.f32.mrb[0].mxu0
    %v4221 = vadd.f32 1e-10, %v4220
    %v4222 = vpop.f32.mrb[0].mxu0
    %4223 = vmatprep.mubr.bf16.mxu0 0
    %4224 = vmatmul.mubr.bf16.gmra.mrb[0].mxu0 %v533
    %v4225 = vpop.f32.mrb[0].mxu0
    %v4226 = vadd.f32 1e-10, %v4225
    %v4227 = vpop.f32.mrb[0].mxu0
    %v4228 = vpop.f32.mrb[0].mxu0
    %v4229 = vpop.f32.mrb[0].mxu0
    %4230 = vdwg.mxu0
    %v4231 = vrcp.pop %v4210
    %v4232 = vrcp.pop %v4213
    %v4233 = vrcp.pop %v4218
    %v4234 = vrcp.pop %v4221
    %v4235 = vrcp.pop %v4226
    %v4236 = vmul.f32 %v4119, %v4231
    %v4237 = vmul.f32 %v4120, %v4232
    %v4238 = vmul.f32 %v4121, %v4233
    %v4239 = vmul.f32 %v4122, %v4234
    %v4240 = vmul.f32 %v4123, %v4235
    %s4241 = scalar_lea.vmem [#allocation20], 128
    %v4242 = vld [vmem:[%s4241] sm:$0xff]
    %v4243 = vld [vmem:[%s4241 + $0x8] sm:$0xff]
    %v4244 = vld [vmem:[%s4241 + $0x10] sm:$0xff]
    %v4245 = vld [vmem:[%s4241 + $0x18] sm:$0xff]
    %v4246 = vld [vmem:[%s4241 + $0x20] sm:$0xff]
    %v4247 = vld [vmem:[%s4241 + $0x28] sm:$0xff]
    %v4248 = vld [vmem:[%s4241 + $0x30] sm:$0xff]
    %v4249 = vld [vmem:[%s4241 + $0x38] sm:$0xff]
    %s4250 = scalar_lea.vmem [#allocation22], 128
    %v4251 = vld [vmem:[%s4250] sm:$0xff]
    %v4252 = vld [vmem:[%s4250 + $0x8] sm:$0xff]
    %v4253 = vld [vmem:[%s4250 + $0x10] sm:$0xff]
    %v4254 = vld [vmem:[%s4250 + $0x18] sm:$0xff]
    %v4255 = vld [vmem:[%s4250 + $0x20] sm:$0xff]
    %v4256 = vld [vmem:[%s4250 + $0x28] sm:$0xff]
    %v4257 = vld [vmem:[%s4250 + $0x30] sm:$0xff]
    %v4258 = vld [vmem:[%s4250 + $0x38] sm:$0xff]
    %4259 = vmatprep.subr.mxu0 %v4252
    %4260 = vmatpush1.msra.mxu0 %v4251
    %4261 = vmatprep.subr.mxu0 %v4254
    %4262 = vmatpush1.msra.mxu0 %v4253
    %4263 = vmatprep.subr.mxu0 %v4256
    %4264 = vmatpush1.msra.mxu0 %v4255
    %4265 = vmatprep.subr.mxu0 %v4258
    %4266 = vmatpush1.msra.mxu0 %v4257
    %4267 = vmatprep.subr.mxu0 0.0
    %4268 = vmatpush1.msra.mxu0 0.0
    %4269 = vmatprep.subr.mxu0 0.0
    %4270 = vmatpush1.msra.mxu0 0.0
    %4271 = vmatprep.subr.mxu0 0.0
    %4272 = vmatpush1.msra.mxu0 0.0
    %4273 = vmatprep.subr.mxu0 0.0
    %4274 = vmatpush1.msra.mxu0 0.0
    %4275 = vmatprep.subr.mxu0 0.0
    %4276 = vmatpush1.msra.mxu0 0.0
    %4277 = vmatprep.subr.mxu0 0.0
    %4278 = vmatpush1.msra.mxu0 0.0
    %4279 = vmatprep.subr.mxu0 0.0
    %4280 = vmatpush1.msra.mxu0 0.0
    %4281 = vmatprep.subr.mxu0 0.0
    %4282 = vmatpush1.msra.mxu0 0.0
    %4283 = vmatprep.subr.mxu0 0.0
    %4284 = vmatpush1.msra.mxu0 0.0
    %4285 = vmatprep.subr.mxu0 0.0
    %4286 = vmatpush1.msra.mxu0 0.0
    %4287 = vmatprep.subr.mxu0 0.0
    %4288 = vmatpush1.msra.mxu0 0.0
    %4289 = vmatprep.subr.mxu0 0.0
    %4290 = vmatpush1.msra.mxu0 0.0
    %4291 = vmatprep.subr.mxu0 0.0
    %4292 = vmatpush1.msra.mxu0 0.0
    %4293 = vmatprep.subr.mxu0 0.0
    %4294 = vmatpush1.msra.mxu0 0.0
    %4295 = vmatprep.subr.mxu0 0.0
    %4296 = vmatpush1.msra.mxu0 0.0
    %4297 = vmatprep.subr.mxu0 0.0
    %4298 = vmatpush1.msra.mxu0 0.0
    %4299 = vmatprep.subr.mxu0 0.0
    %4300 = vmatpush1.msra.mxu0 0.0
    %4301 = vmatprep.subr.mxu0 0.0
    %4302 = vmatpush1.msra.mxu0 0.0
    %4303 = vmatprep.subr.mxu0 0.0
    %4304 = vmatpush1.msra.mxu0 0.0
    %4305 = vmatprep.subr.mxu0 0.0
    %4306 = vmatpush1.msra.mxu0 0.0
    %4307 = vmatprep.subr.mxu0 0.0
    %4308 = vmatpush1.msra.mxu0 0.0
    %4309 = vmatprep.subr.mxu0 0.0
    %4310 = vmatpush1.msra.mxu0 0.0
    %4311 = vmatprep.subr.mxu0 0.0
    %4312 = vmatpush1.msra.mxu0 0.0
    %4313 = vmatprep.subr.mxu0 0.0
    %4314 = vmatpush1.msra.mxu0 0.0
    %4315 = vmatprep.subr.mxu0 0.0
    %4316 = vmatpush1.msra.mxu0 0.0
    %4317 = vmatprep.subr.mxu0 0.0
    %4318 = vmatpush1.msra.mxu0 0.0
    %4319 = vmatprep.subr.mxu0 0.0
    %4320 = vmatpush1.msra.mxu0 0.0
    %4321 = vmatprep.subr.mxu0 0.0
    %4322 = vmatpush1.msra.mxu0 0.0
    %4323 = vmatprep.mubr.f32.mxu0 0.0
    %4324 = vmatmul.mubr.f32.gmra.mrb[0].mxu0 %v3527
    %v4325 = vpop.f32.mrb[0].mxu0
    %v4326 = vadd.f32 0.0, %v4325
    %v4327 = vpop.f32.mrb[0].mxu0
    %v4328 = vadd.f32 0.0, %v4327
    %4329 = vmatprep.mubr.f32.mxu0 0.0
    %4330 = vmatmul.mubr.f32.gmra.mrb[0].mxu0 %v3530
    %v4331 = vpop.f32.mrb[0].mxu0
    %v4332 = vadd.f32 0.0, %v4331
    %v4333 = vpop.f32.mrb[0].mxu0
    %v4334 = vadd.f32 0.0, %v4333
    %4335 = vmatprep.mubr.f32.mxu0 0.0
    %4336 = vmatmul.mubr.f32.gmra.mrb[0].mxu0 %v3533
    %v4337 = vpop.f32.mrb[0].mxu0
    %v4338 = vadd.f32 0.0, %v4337
    %v4339 = vpop.f32.mrb[0].mxu0
    %v4340 = vadd.f32 0.0, %v4339
    %4341 = vmatprep.mubr.f32.mxu0 0.0
    %4342 = vmatmul.mubr.f32.gmra.mrb[0].mxu0 %v3536
    %v4343 = vpop.f32.mrb[0].mxu0
    %v4344 = vadd.f32 0.0, %v4343
    %v4345 = vpop.f32.mrb[0].mxu0
    %v4346 = vadd.f32 0.0, %v4345
    %4347 = vmatprep.mubr.f32.mxu0 0.0
    %4348 = vmatmul.mubr.f32.gmra.mrb[0].mxu0 %v3539
    %v4349 = vpop.f32.mrb[0].mxu0
    %v4350 = vadd.f32 0.0, %v4349
    %v4351 = vpop.f32.mrb[0].mxu0
    %v4352 = vadd.f32 0.0, %v4351
    %4353 = vdwg.mxu0
    %4354 = vmatprep.subr.mxu0 %v4243
    %4355 = vmatpush1.msra.mxu0 %v4242
    %4356 = vmatprep.subr.mxu0 %v4245
    %4357 = vmatpush1.msra.mxu0 %v4244
    %4358 = vmatprep.subr.mxu0 %v4247
    %4359 = vmatpush1.msra.mxu0 %v4246
    %4360 = vmatprep.subr.mxu0 %v4249
    %4361 = vmatpush1.msra.mxu0 %v4248
    %4362 = vmatprep.subr.mxu0 0.0
    %4363 = vmatpush1.msra.mxu0 0.0
    %4364 = vmatprep.subr.mxu0 0.0
    %4365 = vmatpush1.msra.mxu0 0.0
    %4366 = vmatprep.subr.mxu0 0.0
    %4367 = vmatpush1.msra.mxu0 0.0
    %4368 = vmatprep.subr.mxu0 0.0
    %4369 = vmatpush1.msra.mxu0 0.0
    %4370 = vmatprep.subr.mxu0 0.0
    %4371 = vmatpush1.msra.mxu0 0.0
    %4372 = vmatprep.subr.mxu0 0.0
    %4373 = vmatpush1.msra.mxu0 0.0
    %4374 = vmatprep.subr.mxu0 0.0
    %4375 = vmatpush1.msra.mxu0 0.0
    %4376 = vmatprep.subr.mxu0 0.0
    %4377 = vmatpush1.msra.mxu0 0.0
    %4378 = vmatprep.subr.mxu0 0.0
    %4379 = vmatpush1.msra.mxu0 0.0
    %4380 = vmatprep.subr.mxu0 0.0
    %4381 = vmatpush1.msra.mxu0 0.0
    %4382 = vmatprep.subr.mxu0 0.0
    %4383 = vmatpush1.msra.mxu0 0.0
    %4384 = vmatprep.subr.mxu0 0.0
    %4385 = vmatpush1.msra.mxu0 0.0
    %4386 = vmatprep.subr.mxu0 0.0
    %4387 = vmatpush1.msra.mxu0 0.0
    %4388 = vmatprep.subr.mxu0 0.0
    %4389 = vmatpush1.msra.mxu0 0.0
    %4390 = vmatprep.subr.mxu0 0.0
    %4391 = vmatpush1.msra.mxu0 0.0
    %4392 = vmatprep.subr.mxu0 0.0
    %4393 = vmatpush1.msra.mxu0 0.0
    %4394 = vmatprep.subr.mxu0 0.0
    %4395 = vmatpush1.msra.mxu0 0.0
    %4396 = vmatprep.subr.mxu0 0.0
    %4397 = vmatpush1.msra.mxu0 0.0
    %4398 = vmatprep.subr.mxu0 0.0
    %4399 = vmatpush1.msra.mxu0 0.0
    %4400 = vmatprep.subr.mxu0 0.0
    %4401 = vmatpush1.msra.mxu0 0.0
    %4402 = vmatprep.subr.mxu0 0.0
    %4403 = vmatpush1.msra.mxu0 0.0
    %4404 = vmatprep.subr.mxu0 0.0
    %4405 = vmatpush1.msra.mxu0 0.0
    %4406 = vmatprep.subr.mxu0 0.0
    %4407 = vmatpush1.msra.mxu0 0.0
    %4408 = vmatprep.subr.mxu0 0.0
    %4409 = vmatpush1.msra.mxu0 0.0
    %4410 = vmatprep.subr.mxu0 0.0
    %4411 = vmatpush1.msra.mxu0 0.0
    %4412 = vmatprep.subr.mxu0 0.0
    %4413 = vmatpush1.msra.mxu0 0.0
    %4414 = vmatprep.subr.mxu0 0.0
    %4415 = vmatpush1.msra.mxu0 0.0
    %4416 = vmatprep.subr.mxu0 0.0
    %4417 = vmatpush1.msra.mxu0 0.0
    %4418 = vmatprep.mubr.f32.mxu0 0.0
    %4419 = vmatmul.mubr.f32.gmra.mrb[0].mxu0 %v3637
    %v4420 = vpop.f32.mrb[0].mxu0
    %v4421 = vadd.f32 %v4326, %v4420
    %v4422 = vpop.f32.mrb[0].mxu0
    %v4423 = vadd.f32 %v4328, %v4422
    %4424 = vmatprep.mubr.f32.mxu0 0.0
    %4425 = vmatmul.mubr.f32.gmra.mrb[0].mxu0 %v3640
    %v4426 = vpop.f32.mrb[0].mxu0
    %v4427 = vadd.f32 %v4332, %v4426
    %v4428 = vpop.f32.mrb[0].mxu0
    %v4429 = vadd.f32 %v4334, %v4428
    %4430 = vmatprep.mubr.f32.mxu0 0.0
    %4431 = vmatmul.mubr.f32.gmra.mrb[0].mxu0 %v3643
    %v4432 = vpop.f32.mrb[0].mxu0
    %v4433 = vadd.f32 %v4338, %v4432
    %v4434 = vpop.f32.mrb[0].mxu0
    %v4435 = vadd.f32 %v4340, %v4434
    %4436 = vmatprep.mubr.f32.mxu0 0.0
    %4437 = vmatmul.mubr.f32.gmra.mrb[0].mxu0 %v3646
    %v4438 = vpop.f32.mrb[0].mxu0
    %v4439 = vadd.f32 %v4344, %v4438
    %v4440 = vpop.f32.mrb[0].mxu0
    %v4441 = vadd.f32 %v4346, %v4440
    %4442 = vmatprep.mubr.f32.mxu0 0.0
    %4443 = vmatmul.mubr.f32.gmra.mrb[0].mxu0 %v3649
    %v4444 = vpop.f32.mrb[0].mxu0
    %v4445 = vadd.f32 %v4350, %v4444
    %v4446 = vpop.f32.mrb[0].mxu0
    %v4447 = vadd.f32 %v4352, %v4446
    %4448 = vdwg.mxu0
    %s4449 = scalar_lea.vmem [#allocation23], 4
    %v4450 = vld [vmem:[%s4449] sm:$0x3]
    %v4452 = vlaneseq
    %v4453 = vshrl.u32 %v4452, 7
    %v4454 = vsub.s32 0, %v4453
    %v4455 = vrot.slane %v4450, %v4454
    %v4456 = vlaneseq
    %v4457 = vshrl.u32 %v4456, 7
    %v4458 = vsub.s32 1, %v4457
    %v4459 = vrot.slane %v4450, %v4458
    %v4462 = vadd.f32 %v4421, %v4455
    %v4463 = vadd.f32 %v4423, %v4459
    %v4464 = vadd.f32 %v4427, %v4455
    %v4465 = vadd.f32 %v4429, %v4459
    %v4466 = vadd.f32 %v4433, %v4455
    %v4467 = vadd.f32 %v4435, %v4459
    %v4468 = vadd.f32 %v4439, %v4455
    %v4469 = vadd.f32 %v4441, %v4459
    %v4470 = vadd.f32 %v4445, %v4455
    %v4471 = vadd.f32 %v4447, %v4459
    %v4472 = vmax.f32 %v4462, 0.0
    %v4473 = vmax.f32 %v4463, 0.0
    %v4474 = vmax.f32 %v4464, 0.0
    %v4475 = vmax.f32 %v4465, 0.0
    %v4476 = vmax.f32 %v4466, 0.0
    %v4477 = vmax.f32 %v4467, 0.0
    %v4478 = vmax.f32 %v4468, 0.0
    %v4479 = vmax.f32 %v4469, 0.0
    %v4480 = vmax.f32 %v4470, 0.0
    %v4481 = vmax.f32 %v4471, 0.0
    %s4482 = scalar_lea.vmem [#allocation25], 384
    %v4483 = vld [vmem:[%s4482] sm:$0xff]
    %v4484 = vld [vmem:[%s4482 + $0x8] sm:$0xff]
    %v4485 = vld [vmem:[%s4482 + $0x10] sm:$0xff]
    %v4486 = vld [vmem:[%s4482 + $0x18] sm:$0xff]
    %v4487 = vld [vmem:[%s4482 + $0x20] sm:$0xff]
    %v4488 = vld [vmem:[%s4482 + $0x28] sm:$0xff]
    %v4489 = vld [vmem:[%s4482 + $0x30] sm:$0xff]
    %v4490 = vld [vmem:[%s4482 + $0x38] sm:$0xff]
    %v4491 = vld [vmem:[%s4482 + $0x40] sm:$0xff]
    %v4492 = vld [vmem:[%s4482 + $0x48] sm:$0xff]
    %v4493 = vld [vmem:[%s4482 + $0x50] sm:$0xff]
    %v4494 = vld [vmem:[%s4482 + $0x58] sm:$0xff]
    %v4495 = vld [vmem:[%s4482 + $0x60] sm:$0xff]
    %v4496 = vld [vmem:[%s4482 + $0x68] sm:$0xff]
    %v4497 = vld [vmem:[%s4482 + $0x70] sm:$0xff]
    %v4498 = vld [vmem:[%s4482 + $0x78] sm:$0xff]
    %v4499 = vld [vmem:[%s4482 + $0x80] sm:$0xff]
    %v4500 = vld [vmem:[%s4482 + $0x88] sm:$0xff]
    %v4501 = vld [vmem:[%s4482 + $0x90] sm:$0xff]
    %v4502 = vld [vmem:[%s4482 + $0x98] sm:$0xff]
    %v4503 = vld [vmem:[%s4482 + $0xa0] sm:$0xff]
    %v4504 = vld [vmem:[%s4482 + $0xa8] sm:$0xff]
    %v4505 = vld [vmem:[%s4482 + $0xb0] sm:$0xff]
    %v4506 = vld [vmem:[%s4482 + $0xb8] sm:$0xff]
    %s4507 = scalar_lea.vmem [#allocation26], 2
    %v4508 = vld [vmem:[%s4507] sm:$0x1]
    %v4510 = vlaneseq
    %v4511 = vshrl.u32 %v4510, 7
    %v4512 = vsub.s32 0, %v4511
    %v4513 = vrot.slane %v4508, %v4512
    %v4516 = vsel %vm950, %v4473, 0
    %v4519 = vsel %vm950, %v4475, 0
    %v4522 = vsel %vm950, %v4477, 0
    %v4525 = vsel %vm950, %v4479, 0
    %v4528 = vsel %vm950, %v4481, 0
    %4530 = vmatprep.subr.mxu0 0.0
    %4531 = vmatpush1.msra.mxu0 %v4483
    %4532 = vmatprep.subr.mxu0 0.0
    %4533 = vmatpush1.msra.mxu0 %v4484
    %4534 = vmatprep.subr.mxu0 0.0
    %4535 = vmatpush1.msra.mxu0 %v4485
    %4536 = vmatprep.subr.mxu0 0.0
    %4537 = vmatpush1.msra.mxu0 %v4486
    %4538 = vmatprep.subr.mxu0 0.0
    %4539 = vmatpush1.msra.mxu0 %v4487
    %4540 = vmatprep.subr.mxu0 0.0
    %4541 = vmatpush1.msra.mxu0 %v4488
    %4542 = vmatprep.subr.mxu0 0.0
    %4543 = vmatpush1.msra.mxu0 %v4489
    %4544 = vmatprep.subr.mxu0 0.0
    %4545 = vmatpush1.msra.mxu0 %v4490
    %4546 = vmatprep.subr.mxu0 0.0
    %4547 = vmatpush1.msra.mxu0 %v4491
    %4548 = vmatprep.subr.mxu0 0.0
    %4549 = vmatpush1.msra.mxu0 %v4492
    %4550 = vmatprep.subr.mxu0 0.0
    %4551 = vmatpush1.msra.mxu0 %v4493
    %4552 = vmatprep.subr.mxu0 0.0
    %4553 = vmatpush1.msra.mxu0 %v4494
    %4554 = vmatprep.subr.mxu0 0.0
    %4555 = vmatpush1.msra.mxu0 %v4495
    %4556 = vmatprep.subr.mxu0 0.0
    %4557 = vmatpush1.msra.mxu0 %v4496
    %4558 = vmatprep.subr.mxu0 0.0
    %4559 = vmatpush1.msra.mxu0 %v4497
    %4560 = vmatprep.subr.mxu0 0.0
    %4561 = vmatpush1.msra.mxu0 %v4498
    %4562 = vmatprep.subr.mxu0 0.0
    %4563 = vmatpush1.msra.mxu0 %v4499
    %4564 = vmatprep.subr.mxu0 0.0
    %4565 = vmatpush1.msra.mxu0 %v4500
    %4566 = vmatprep.subr.mxu0 0.0
    %4567 = vmatpush1.msra.mxu0 %v4501
    %4568 = vmatprep.subr.mxu0 0.0
    %4569 = vmatpush1.msra.mxu0 %v4502
    %4570 = vmatprep.subr.mxu0 0.0
    %4571 = vmatpush1.msra.mxu0 %v4503
    %4572 = vmatprep.subr.mxu0 0.0
    %4573 = vmatpush1.msra.mxu0 %v4504
    %4574 = vmatprep.subr.mxu0 0.0
    %4575 = vmatpush1.msra.mxu0 %v4505
    %4576 = vmatprep.subr.mxu0 0.0
    %4577 = vmatpush1.msra.mxu0 %v4506
    %4578 = vmatprep.subr.mxu0 0.0
    %4579 = vmatpush1.msra.mxu0 0.0
    %4580 = vmatprep.subr.mxu0 0.0
    %4581 = vmatpush1.msra.mxu0 0.0
    %4582 = vmatprep.subr.mxu0 0.0
    %4583 = vmatpush1.msra.mxu0 0.0
    %4584 = vmatprep.subr.mxu0 0.0
    %4585 = vmatpush1.msra.mxu0 0.0
    %4586 = vmatprep.subr.mxu0 0.0
    %4587 = vmatpush1.msra.mxu0 0.0
    %4588 = vmatprep.subr.mxu0 0.0
    %4589 = vmatpush1.msra.mxu0 0.0
    %4590 = vmatprep.subr.mxu0 0.0
    %4591 = vmatpush1.msra.mxu0 0.0
    %4592 = vmatprep.subr.mxu0 0.0
    %4593 = vmatpush1.msra.mxu0 0.0
    %4594 = vmatprep.mubr.f32.mxu0 %v4516
    %4595 = vmatmul.mubr.f32.gmra.mrb[0].mxu0 %v4472
    %v4596 = vpop.f32.mrb[0].mxu0
    %v4597 = vadd.f32 %v4513, %v4596
    %v4598 = vpop.f32.mrb[0].mxu0
    %4599 = vmatprep.mubr.f32.mxu0 %v4519
    %4600 = vmatmul.mubr.f32.gmra.mrb[0].mxu0 %v4474
    %v4601 = vpop.f32.mrb[0].mxu0
    %v4602 = vadd.f32 %v4513, %v4601
    %v4603 = vpop.f32.mrb[0].mxu0
    %4604 = vmatprep.mubr.f32.mxu0 %v4522
    %4605 = vmatmul.mubr.f32.gmra.mrb[0].mxu0 %v4476
    %v4606 = vpop.f32.mrb[0].mxu0
    %v4607 = vadd.f32 %v4513, %v4606
    %v4608 = vpop.f32.mrb[0].mxu0
    %4609 = vmatprep.mubr.f32.mxu0 %v4525
    %4610 = vmatmul.mubr.f32.gmra.mrb[0].mxu0 %v4478
    %v4611 = vpop.f32.mrb[0].mxu0
    %v4612 = vadd.f32 %v4513, %v4611
    %v4613 = vpop.f32.mrb[0].mxu0
    %4614 = vmatprep.mubr.f32.mxu0 %v4528
    %4615 = vmatmul.mubr.f32.gmra.mrb[0].mxu0 %v4480
    %v4616 = vpop.f32.mrb[0].mxu0
    %v4617 = vadd.f32 %v4513, %v4616
    %v4618 = vpop.f32.mrb[0].mxu0
    %4619 = vdwg.mxu0
    %4621 = vset.pattern.permute.xlu0 0
    %4622 = vperm.xlu0 %4621, %v4236
    %v4623 = vpop.permute.xlu0 %4622
    %4626 = vset.pattern.permute.xlu0 0
    %4627 = vperm.xlu0 %4626, %v4237
    %v4628 = vpop.permute.xlu0 %4627
    %4631 = vset.pattern.permute.xlu0 0
    %4632 = vperm.xlu0 %4631, %v4238
    %v4633 = vpop.permute.xlu0 %4632
    %4636 = vset.pattern.permute.xlu0 0
    %4637 = vperm.xlu0 %4636, %v4239
    %v4638 = vpop.permute.xlu0 %4637
    %4641 = vset.pattern.permute.xlu0 0
    %4642 = vperm.xlu0 %4641, %v4240
    %v4643 = vpop.permute.xlu0 %4642
    %v4645 = vmul.f32 %v4623, %v4597
    %v4646 = vmul.f32 %v4628, %v4602
    %v4647 = vmul.f32 %v4633, %v4607
    %v4648 = vmul.f32 %v4638, %v4612
    %v4649 = vmul.f32 %v4643, %v4617
    %4650 = vset.pattern.permute.xlu0 1
    %4651 = vperm.xlu0 %4650, %v4236
    %v4652 = vpop.permute.xlu0 %4651
    %4654 = vset.pattern.permute.xlu0 1
    %4655 = vperm.xlu0 %4654, %v4237
    %v4656 = vpop.permute.xlu0 %4655
    %4658 = vset.pattern.permute.xlu0 1
    %4659 = vperm.xlu0 %4658, %v4238
    %v4660 = vpop.permute.xlu0 %4659
    %4662 = vset.pattern.permute.xlu0 1
    %4663 = vperm.xlu0 %4662, %v4239
    %v4664 = vpop.permute.xlu0 %4663
    %4666 = vset.pattern.permute.xlu0 1
    %4667 = vperm.xlu0 %4666, %v4240
    %v4668 = vpop.permute.xlu0 %4667
    %v4670 = vmul.f32 %v4652, %v4597
    %v4671 = vmul.f32 %v4656, %v4602
    %v4672 = vmul.f32 %v4660, %v4607
    %v4673 = vmul.f32 %v4664, %v4612
    %v4674 = vmul.f32 %v4668, %v4617
    %4680 = vrot.lane.b32.xlu0 %v4670, 96
    %v4681 = vpop.permute.xlu0 %4680
    %4682 = vrot.lane.b32.xlu0 %v4671, 96
    %v4683 = vpop.permute.xlu0 %4682
    %4684 = vrot.lane.b32.xlu0 %v4672, 96
    %v4685 = vpop.permute.xlu0 %4684
    %4686 = vrot.lane.b32.xlu0 %v4673, 96
    %v4687 = vpop.permute.xlu0 %4686
    %4688 = vrot.lane.b32.xlu0 %v4674, 96
    %v4689 = vpop.permute.xlu0 %4688
    %v4695 = vadd.f32 %v4645, %v4681
    %v4696 = vadd.f32 %v4646, %v4683
    %v4697 = vadd.f32 %v4647, %v4685
    %v4698 = vadd.f32 %v4648, %v4687
    %v4699 = vadd.f32 %v4649, %v4689
    %4700 = vset.pattern.permute.xlu0 2
    %4701 = vperm.xlu0 %4700, %v4236
    %v4702 = vpop.permute.xlu0 %4701
    %4704 = vset.pattern.permute.xlu0 2
    %4705 = vperm.xlu0 %4704, %v4237
    %v4706 = vpop.permute.xlu0 %4705
    %4708 = vset.pattern.permute.xlu0 2
    %4709 = vperm.xlu0 %4708, %v4238
    %v4710 = vpop.permute.xlu0 %4709
    %4712 = vset.pattern.permute.xlu0 2
    %4713 = vperm.xlu0 %4712, %v4239
    %v4714 = vpop.permute.xlu0 %4713
    %4716 = vset.pattern.permute.xlu0 2
    %4717 = vperm.xlu0 %4716, %v4240
    %v4718 = vpop.permute.xlu0 %4717
    %v4720 = vmul.f32 %v4702, %v4597
    %v4721 = vmul.f32 %v4706, %v4602
    %v4722 = vmul.f32 %v4710, %v4607
    %v4723 = vmul.f32 %v4714, %v4612
    %v4724 = vmul.f32 %v4718, %v4617
    %4730 = vrot.lane.b32.xlu0 %v4720, 64
    %v4731 = vpop.permute.xlu0 %4730
    %4732 = vrot.lane.b32.xlu0 %v4721, 64
    %v4733 = vpop.permute.xlu0 %4732
    %4734 = vrot.lane.b32.xlu0 %v4722, 64
    %v4735 = vpop.permute.xlu0 %4734
    %4736 = vrot.lane.b32.xlu0 %v4723, 64
    %v4737 = vpop.permute.xlu0 %4736
    %4738 = vrot.lane.b32.xlu0 %v4724, 64
    %v4739 = vpop.permute.xlu0 %4738
    %v4745 = vadd.f32 %v4695, %v4731
    %v4746 = vadd.f32 %v4696, %v4733
    %v4747 = vadd.f32 %v4697, %v4735
    %v4748 = vadd.f32 %v4698, %v4737
    %v4749 = vadd.f32 %v4699, %v4739
    %v4750 = vpack.c.bf16 %v4746, %v4745
    %v4751 = vpack.c.bf16 %v4748, %v4747
    %v4752 = vpack.c.bf16 %v4749, %v4749
    %v4754 = vsel %vm1182, %v4752, 0
    %4756 = vmatprep.subr.bf16.mxu0 0
    %4757 = vmatpush1.bf16.msra.mxu0 %v4750
    %4758 = vmatprep.subr.bf16.mxu0 0
    %4759 = vmatpush1.bf16.msra.mxu0 %v4751
    %4760 = vmatprep.subr.bf16.mxu0 0
    %4761 = vmatpush1.bf16.msra.mxu0 %v4754
    %4762 = vmatprep.subr.bf16.mxu0 0
    %4763 = vmatpush1.bf16.msra.mxu0 0
    %4764 = vmatprep.subr.bf16.mxu0 0
    %4765 = vmatpush1.bf16.msra.mxu0 0
    %4766 = vmatprep.subr.bf16.mxu0 0
    %4767 = vmatpush1.bf16.msra.mxu0 0
    %4768 = vmatprep.subr.bf16.mxu0 0
    %4769 = vmatpush1.bf16.msra.mxu0 0
    %4770 = vmatprep.subr.bf16.mxu0 0
    %4771 = vmatpush1.bf16.msra.mxu0 0
    %4772 = vmatprep.subr.bf16.mxu0 0
    %4773 = vmatpush1.bf16.msra.mxu0 0
    %4774 = vmatprep.subr.bf16.mxu0 0
    %4775 = vmatpush1.bf16.msra.mxu0 0
    %4776 = vmatprep.subr.bf16.mxu0 0
    %4777 = vmatpush1.bf16.msra.mxu0 0
    %4778 = vmatprep.subr.bf16.mxu0 0
    %4779 = vmatpush1.bf16.msra.mxu0 0
    %4780 = vmatprep.subr.bf16.mxu0 0
    %4781 = vmatpush1.bf16.msra.mxu0 0
    %4782 = vmatprep.subr.bf16.mxu0 0
    %4783 = vmatpush1.bf16.msra.mxu0 0
    %4784 = vmatprep.subr.bf16.mxu0 0
    %4785 = vmatpush1.bf16.msra.mxu0 0
    %4786 = vmatprep.subr.bf16.mxu0 0
    %4787 = vmatpush1.bf16.msra.mxu0 0
    %4788 = vmatprep.mubr.bf16.mxu0 0
    %4789 = vmatmul.mubr.bf16.gmra.mrb[0].mxu0 %v1312
    %v4790 = vpop.f32.mrb[0].mxu0
    %v4791 = vadd.f32 0.0, %v4790
    %v4792 = vpop.f32.mrb[0].mxu0
    %v4793 = vpop.f32.mrb[0].mxu0
    %v4794 = vadd.f32 0.0, %v4793
    %v4795 = vpop.f32.mrb[0].mxu0
    %4796 = vdwg.mxu0
    %v4797 = vmul.f32 %v4791, 0.33333334
    %v4798 = vmul.f32 %v4794, 0.33333334
    %v4799 = vadd.f32 %v4797, %v3390
    %v4800 = vadd.f32 %v4798, %v3391
    %4801 = vst.msk [vmem:[#allocation28] sm:$0xff] %vm666, %v4799
    %vm4802 = vcmask 254976
    %4803 = vst.msk [vmem:[#allocation28 + $0x8] sm:$0x3] %vm4802, %v4800
    // Predicated region
    $region130: #{tpu_custom_call.1} parent=1 // pred_check
      _
    $region131: #{tpu_custom_call.1} parent=1 // pred_check_branch
      %4805 = sbr.rel (0) target = $region133
    $region132: #{tpu_custom_call.1} parent=1 // pred_region
      %s4807 = ssub.s32 256, 256
      %4808 = vsyncadd [#allocation4], %s4807
      %s4809 = sshll.u32 [#allocation28], 4
      %s4810 = int_to_ptr.vmem [resolvable:$true] %s4809
      %4815 = dma.vmem_to_hbm [thread:$0]  %s4810, 256, %s16, [#allocation4], 128, 128, 8
    $region133: #{tpu_custom_call.1} parent=1 // pred_fallthru
      _
    // Predicated region
    $region134: #{tpu_custom_call.1} parent=1 // pred_check
      _
    $region135: #{tpu_custom_call.1} parent=1 // pred_check_branch
      %4817 = sbr.rel (0) target = $region137
    $region136: #{tpu_custom_call.1} parent=1 // pred_region
      %4818 = dma.done [#allocation4], 256
    $region137: #{tpu_custom_call.1} parent=1 // pred_fallthru
      _
    %4819 = vsyncpa [#allocation3], 1
    %4820 = vsyncpa [#allocation6], 1
    %4821 = vsyncpa [#allocation9], 1
    %4822 = vsyncpa [#allocation12], 1
    %4823 = vsyncpa [#allocation15], 1
    %4824 = vsyncpa [#allocation18], 1
    %4825 = vsyncpa [#allocation21], 1
    %4826 = vsyncpa [#allocation24], 1
    %4827 = vsyncpa [#allocation27], 1
    %4828 = vsyncpa [#allocation4], 1

</llo_original>
